<compile_context>
chip_gen: v7x
topology: tpu7x:2x2x1
jax: 0.10.0
libtpu: 0.0.40
codegen_flags: <defaults>
</compile_context>

<pallas_src>
import functools

import jax
import jax.numpy as jnp
from jax.experimental import pallas as pl
from jax.experimental.pallas import tpu as pltpu

WIDTH = 8        # hidden width (matches `width = 8` in the PyTorch script)
OUT_DIM = 3      # fc7: Linear(width, 3, bias=False)
KB_DEFAULT = 1.0

# --- packed-parameter layout (flat f32 vector, resident in SMEM) ------------
_L1_W = 0                                     # fc1 weight  (1,8)  -> 8 scalars
_L1_B = WIDTH                                 # fc1 bias           -> 8 scalars
_L2_BASE = 2 * WIDTH                          # fc2..fc6 blocks
_LAYER_STRIDE = WIDTH * WIDTH + WIDTH         # 64 weights + 8 biases = 72
_L7_BASE = _L2_BASE + 5 * _LAYER_STRIDE       # fc7 weight (8,3)   -> 24 scalars
N_PARAMS = _L7_BASE + WIDTH * OUT_DIM         # = 400

LANES = 128                                   # lane width of every tile
DEFAULT_TILE_ROWS = 512                       # sublane rows per grid step (mult. of 8)


def _coupled_kernel(p_ref, t_ref, soft_ref, sub_ref, *, kb):
    # p_ref    : (N_PARAMS,) f32 in SMEM   (all weights/biases, read as scalars)
    # t_ref    : (TILE_R, 128) f32 in VMEM (batch packed on sublanes AND lanes)
    # soft/sub : (3, TILE_R, 128) f32 lane-dense output blocks
    t = t_ref[...]                                            # (TILE_R, 128)

    # fc1: (1 -> 8) + tanh. One scalar FMA per hidden unit (VPU), tanh on EUP.
    h = [jnp.tanh(t * p_ref[_L1_W + j] + p_ref[_L1_B + j]) for j in range(WIDTH)]

    # fc2..fc6: (8 -> 8) + tanh, fully unrolled scalar-broadcast FMAs (VPU).
    for layer in range(5):
        base = _L2_BASE + layer * _LAYER_STRIDE
        b_base = base + WIDTH * WIDTH
        new_h = []
        for j in range(WIDTH):
            acc = h[0] * p_ref[base + j] + p_ref[b_base + j]
            for k in range(1, WIDTH):
                acc = acc + h[k] * p_ref[base + k * WIDTH + j]
            new_h.append(jnp.tanh(acc))
        h = new_h

    # fc7: (8 -> 3), no bias / no activation, then divide by kb*T
    # (single shared reciprocal, reused by all three logits).
    inv_denom = 1.0 / (kb * t)                                # (TILE_R, 128)
    subs = []
    for j in range(OUT_DIM):
        acc = h[0] * p_ref[_L7_BASE + j]
        for k in range(1, WIDTH):
            acc = acc + h[k] * p_ref[_L7_BASE + k * OUT_DIM + j]
        subs.append(acc * inv_denom)

    # Softmax over the 3 class planes: purely elementwise (VPU + EUP),
    # no cross-lane reductions needed.
    m = jnp.maximum(jnp.maximum(subs[0], subs[1]), subs[2])
    exps = [jnp.exp(s - m) for s in subs]
    inv_total = 1.0 / (exps[0] + exps[1] + exps[2])

    # Lane-dense stores, one (TILE_R, 128) plane per class.
    for j in range(OUT_DIM):
        sub_ref[j, :, :] = subs[j]
        soft_ref[j, :, :] = exps[j] * inv_total


def _round_up(v, m):
    return ((v + m - 1) // m) * m


def pack_params(params):
    """Flatten all weights/biases into one f32 vector (lives in SMEM in-kernel)."""
    pieces = [params["w1"].reshape(-1), params["b1"].reshape(-1)]
    for i in range(2, 7):
        pieces.append(params[f"w{i}"].reshape(-1))   # (8,8) row-major: w[k*8 + j]
        pieces.append(params[f"b{i}"].reshape(-1))
    pieces.append(params["w7"].reshape(-1))          # (8,3) row-major: w[k*3 + j]
    packed = jnp.concatenate(pieces).astype(jnp.float32)
    assert packed.shape == (N_PARAMS,), packed.shape
    return packed


def coupled_forward(x, params, kb=KB_DEFAULT, max_tile_rows=DEFAULT_TILE_ROWS):
    """CoupledModel.forward.  x: (N, F) f32; only the last column (T) is used.

    Returns (softmax_weights, sub_outputs), each (N, 3) f32.
    """
    n = x.shape[0]
    t = x[:, -1].astype(jnp.float32)                          # (N,)

    # Pack the batch densely into (rows, 128) so every vreg is fully utilised.
    rows_needed = pl.cdiv(max(n, 1), LANES)
    tile_r = min(max_tile_rows, _round_up(rows_needed, 8))    # multiple of 8
    r_pad = _round_up(rows_needed, tile_r)
    n_pad = r_pad * LANES
    # Pad with T=1.0 so padded elements never divide by zero (results dropped).
    t2d = jnp.pad(t, (0, n_pad - n), constant_values=1.0).reshape(r_pad, LANES)

    p = pack_params(params)
    grid = (r_pad // tile_r,)

    cost = pl.CostEstimate(
        flops=760 * n_pad,                  # ~760 VPU FLOPs per element
        transcendentals=53 * n_pad,         # 48 tanh + 3 exp + 2 recip per element
        bytes_accessed=28 * n_pad + 4 * N_PARAMS,
    )

    soft_t, sub_t = pl.pallas_call(
        functools.partial(_coupled_kernel, kb=float(kb)),
        out_shape=(jax.ShapeDtypeStruct((OUT_DIM, r_pad, LANES), jnp.float32),
                   jax.ShapeDtypeStruct((OUT_DIM, r_pad, LANES), jnp.float32)),
        grid=grid,
        in_specs=[
            # Single tiny parameter slab resident in SMEM (read as scalars).
            pl.BlockSpec(memory_space=pltpu.MemorySpace.SMEM),
            # Temperature tile: (tile_r, 128), batch packed on sublanes + lanes.
            pl.BlockSpec((tile_r, LANES), lambda i: (i, 0)),
        ],
        out_specs=(
            pl.BlockSpec((OUT_DIM, tile_r, LANES), lambda i: (0, i, 0)),
            pl.BlockSpec((OUT_DIM, tile_r, LANES), lambda i: (0, i, 0)),
        ),
        compiler_params=pltpu.CompilerParams(
            dimension_semantics=("parallel",)),   # shard batch tiles across cores
        cost_estimate=cost,
    )(p, t2d)

    # Back to the PyTorch (N, 3) orientation; drop the padded elements.
    softmax_weights = soft_t.reshape(OUT_DIM, n_pad)[:, :n].T
    sub_outputs = sub_t.reshape(OUT_DIM, n_pad)[:, :n].T
    return softmax_weights, sub_outputs


def init_params(key, width=WIDTH, out_dim=OUT_DIM):
    """Deterministic init mimicking nn.Linear's U(-1/sqrt(fan_in), 1/sqrt(fan_in)).

    Weights stored as (in, out) (transpose of PyTorch); biases as (out,).
    """
    dims = [(1, width)] + [(width, width)] * 5 + [(width, out_dim)]
    params = {}
    for idx, (fan_in, fan_out) in enumerate(dims, start=1):
        key, kw, kb_ = jax.random.split(key, 3)
        bound = 1.0 / (fan_in ** 0.5)
        params[f"w{idx}"] = jax.random.uniform(
            kw, (fan_in, fan_out), jnp.float32, -bound, bound)
        if idx != 7:  # fc7 has bias=False
            params[f"b{idx}"] = jax.random.uniform(
                kb_, (fan_out,), jnp.float32, -bound, bound)
    return params


def coupled_reference(x, params, kb=KB_DEFAULT):
    """Pure-JAX reference of CoupledModel.forward for correctness checking."""
    t = x[:, -1:].astype(jnp.float32)                         # (N, 1)
    y = t
    for i in range(1, 7):
        y = jnp.tanh(y @ params[f"w{i}"] + params[f"b{i}"][None, :])
    sub = (y @ params["w7"]) / (kb * t)
    soft = jax.nn.softmax(sub, axis=1)
    return soft, sub


if __name__ == "__main__":
    key = jax.random.PRNGKey(0)
    key, kx = jax.random.split(key)

    n = 100  # Nf in the original script
    # x: (N, 2); the model only uses the last column as the temperature T.
    extra_col = jax.random.uniform(kx, (n, 1), jnp.float32, -1.0, 1.0)
    T_col = jnp.linspace(1.0, 8.0, n, dtype=jnp.float32).reshape(n, 1)
    x = jnp.concatenate([extra_col, T_col], axis=1)

    params = init_params(jax.random.PRNGKey(0))

    soft, sub = coupled_forward(x, params, kb=1.0)
    soft = jax.block_until_ready(soft)
    sub = jax.block_until_ready(sub)

    soft_expected, sub_expected = coupled_reference(x, params, kb=1.0)

    assert soft.shape == (n, OUT_DIM), soft.shape
    assert sub.shape == (n, OUT_DIM), sub.shape
    assert jnp.allclose(sub, sub_expected, atol=1e-4, rtol=1e-4), "sub_outputs mismatch"
    assert jnp.allclose(soft, soft_expected, atol=1e-4, rtol=1e-4), "softmax mismatch"
    assert jnp.allclose(soft.sum(axis=1), jnp.ones((n,), jnp.float32), atol=1e-5)

    print("KERNEL_OK")
</pallas_src>

<mosaic_0001>
module attributes {stable_mosaic.version = 11 : i64} {
  func.func @_coupled_kernel(%arg0: i32, %arg1: memref<400xf32, #tpu.memory_space<smem>>, %arg2: memref<8x128xf32, #tpu.memory_space<vmem>>, %arg3: memref<3x8x128xf32, #tpu.memory_space<vmem>>, %arg4: memref<3x8x128xf32, #tpu.memory_space<vmem>>) attributes {dimension_semantics = [#tpu.dimension_semantics<parallel>], iteration_bounds = array<i64: 1>, scalar_prefetch = 0 : i64, scratch_operands = 0 : i64, tpu.core_type = #tpu.core_type<tc>, window_params = [{transform_indices = @transform_0, window_bounds = array<i64: 400>}, {transform_indices = @transform_1, window_bounds = array<i64: 8, 128>}, {transform_indices = @transform_2, window_bounds = array<i64: 3, 8, 128>}, {transform_indices = @transform_3, window_bounds = array<i64: 3, 8, 128>}]} {
    %c0 = arith.constant 0 : index
    %c0_0 = arith.constant 0 : index
    %0 = vector.load %arg2[%c0, %c0_0] : memref<8x128xf32, #tpu.memory_space<vmem>>, vector<8x128xf32>
    %c0_1 = arith.constant 0 : index
    %1 = memref.load %arg1[%c0_1] : memref<400xf32, #tpu.memory_space<smem>>
    %2 = vector.broadcast %1 : f32 to vector<8x128xf32>
    %3 = arith.mulf %0, %2 : vector<8x128xf32>
    %c8 = arith.constant 8 : index
    %4 = memref.load %arg1[%c8] : memref<400xf32, #tpu.memory_space<smem>>
    %5 = vector.broadcast %4 : f32 to vector<8x128xf32>
    %6 = arith.addf %3, %5 : vector<8x128xf32>
    %7 = math.tanh %6 : vector<8x128xf32>
    %c1 = arith.constant 1 : index
    %8 = memref.load %arg1[%c1] : memref<400xf32, #tpu.memory_space<smem>>
    %9 = vector.broadcast %8 : f32 to vector<8x128xf32>
    %10 = arith.mulf %0, %9 : vector<8x128xf32>
    %c9 = arith.constant 9 : index
    %11 = memref.load %arg1[%c9] : memref<400xf32, #tpu.memory_space<smem>>
    %12 = vector.broadcast %11 : f32 to vector<8x128xf32>
    %13 = arith.addf %10, %12 : vector<8x128xf32>
    %14 = math.tanh %13 : vector<8x128xf32>
    %c2 = arith.constant 2 : index
    %15 = memref.load %arg1[%c2] : memref<400xf32, #tpu.memory_space<smem>>
    %16 = vector.broadcast %15 : f32 to vector<8x128xf32>
    %17 = arith.mulf %0, %16 : vector<8x128xf32>
    %c10 = arith.constant 10 : index
    %18 = memref.load %arg1[%c10] : memref<400xf32, #tpu.memory_space<smem>>
    %19 = vector.broadcast %18 : f32 to vector<8x128xf32>
    %20 = arith.addf %17, %19 : vector<8x128xf32>
    %21 = math.tanh %20 : vector<8x128xf32>
    %c3 = arith.constant 3 : index
    %22 = memref.load %arg1[%c3] : memref<400xf32, #tpu.memory_space<smem>>
    %23 = vector.broadcast %22 : f32 to vector<8x128xf32>
    %24 = arith.mulf %0, %23 : vector<8x128xf32>
    %c11 = arith.constant 11 : index
    %25 = memref.load %arg1[%c11] : memref<400xf32, #tpu.memory_space<smem>>
    %26 = vector.broadcast %25 : f32 to vector<8x128xf32>
    %27 = arith.addf %24, %26 : vector<8x128xf32>
    %28 = math.tanh %27 : vector<8x128xf32>
    %c4 = arith.constant 4 : index
    %29 = memref.load %arg1[%c4] : memref<400xf32, #tpu.memory_space<smem>>
    %30 = vector.broadcast %29 : f32 to vector<8x128xf32>
    %31 = arith.mulf %0, %30 : vector<8x128xf32>
    %c12 = arith.constant 12 : index
    %32 = memref.load %arg1[%c12] : memref<400xf32, #tpu.memory_space<smem>>
    %33 = vector.broadcast %32 : f32 to vector<8x128xf32>
    %34 = arith.addf %31, %33 : vector<8x128xf32>
    %35 = math.tanh %34 : vector<8x128xf32>
    %c5 = arith.constant 5 : index
    %36 = memref.load %arg1[%c5] : memref<400xf32, #tpu.memory_space<smem>>
    %37 = vector.broadcast %36 : f32 to vector<8x128xf32>
    %38 = arith.mulf %0, %37 : vector<8x128xf32>
    %c13 = arith.constant 13 : index
    %39 = memref.load %arg1[%c13] : memref<400xf32, #tpu.memory_space<smem>>
    %40 = vector.broadcast %39 : f32 to vector<8x128xf32>
    %41 = arith.addf %38, %40 : vector<8x128xf32>
    %42 = math.tanh %41 : vector<8x128xf32>
    %c6 = arith.constant 6 : index
    %43 = memref.load %arg1[%c6] : memref<400xf32, #tpu.memory_space<smem>>
    %44 = vector.broadcast %43 : f32 to vector<8x128xf32>
    %45 = arith.mulf %0, %44 : vector<8x128xf32>
    %c14 = arith.constant 14 : index
    %46 = memref.load %arg1[%c14] : memref<400xf32, #tpu.memory_space<smem>>
    %47 = vector.broadcast %46 : f32 to vector<8x128xf32>
    %48 = arith.addf %45, %47 : vector<8x128xf32>
    %49 = math.tanh %48 : vector<8x128xf32>
    %c7 = arith.constant 7 : index
    %50 = memref.load %arg1[%c7] : memref<400xf32, #tpu.memory_space<smem>>
    %51 = vector.broadcast %50 : f32 to vector<8x128xf32>
    %52 = arith.mulf %0, %51 : vector<8x128xf32>
    %c15 = arith.constant 15 : index
    %53 = memref.load %arg1[%c15] : memref<400xf32, #tpu.memory_space<smem>>
    %54 = vector.broadcast %53 : f32 to vector<8x128xf32>
    %55 = arith.addf %52, %54 : vector<8x128xf32>
    %56 = math.tanh %55 : vector<8x128xf32>
    %c16 = arith.constant 16 : index
    %57 = memref.load %arg1[%c16] : memref<400xf32, #tpu.memory_space<smem>>
    %58 = vector.broadcast %57 : f32 to vector<8x128xf32>
    %59 = arith.mulf %7, %58 : vector<8x128xf32>
    %c80 = arith.constant 80 : index
    %60 = memref.load %arg1[%c80] : memref<400xf32, #tpu.memory_space<smem>>
    %61 = vector.broadcast %60 : f32 to vector<8x128xf32>
    %62 = arith.addf %59, %61 : vector<8x128xf32>
    %c24 = arith.constant 24 : index
    %63 = memref.load %arg1[%c24] : memref<400xf32, #tpu.memory_space<smem>>
    %64 = vector.broadcast %63 : f32 to vector<8x128xf32>
    %65 = arith.mulf %14, %64 : vector<8x128xf32>
    %66 = arith.addf %62, %65 : vector<8x128xf32>
    %c32 = arith.constant 32 : index
    %67 = memref.load %arg1[%c32] : memref<400xf32, #tpu.memory_space<smem>>
    %68 = vector.broadcast %67 : f32 to vector<8x128xf32>
    %69 = arith.mulf %21, %68 : vector<8x128xf32>
    %70 = arith.addf %66, %69 : vector<8x128xf32>
    %c40 = arith.constant 40 : index
    %71 = memref.load %arg1[%c40] : memref<400xf32, #tpu.memory_space<smem>>
    %72 = vector.broadcast %71 : f32 to vector<8x128xf32>
    %73 = arith.mulf %28, %72 : vector<8x128xf32>
    %74 = arith.addf %70, %73 : vector<8x128xf32>
    %c48 = arith.constant 48 : index
    %75 = memref.load %arg1[%c48] : memref<400xf32, #tpu.memory_space<smem>>
    %76 = vector.broadcast %75 : f32 to vector<8x128xf32>
    %77 = arith.mulf %35, %76 : vector<8x128xf32>
    %78 = arith.addf %74, %77 : vector<8x128xf32>
    %c56 = arith.constant 56 : index
    %79 = memref.load %arg1[%c56] : memref<400xf32, #tpu.memory_space<smem>>
    %80 = vector.broadcast %79 : f32 to vector<8x128xf32>
    %81 = arith.mulf %42, %80 : vector<8x128xf32>
    %82 = arith.addf %78, %81 : vector<8x128xf32>
    %c64 = arith.constant 64 : index
    %83 = memref.load %arg1[%c64] : memref<400xf32, #tpu.memory_space<smem>>
    %84 = vector.broadcast %83 : f32 to vector<8x128xf32>
    %85 = arith.mulf %49, %84 : vector<8x128xf32>
    %86 = arith.addf %82, %85 : vector<8x128xf32>
    %c72 = arith.constant 72 : index
    %87 = memref.load %arg1[%c72] : memref<400xf32, #tpu.memory_space<smem>>
    %88 = vector.broadcast %87 : f32 to vector<8x128xf32>
    %89 = arith.mulf %56, %88 : vector<8x128xf32>
    %90 = arith.addf %86, %89 : vector<8x128xf32>
    %91 = math.tanh %90 : vector<8x128xf32>
    %c17 = arith.constant 17 : index
    %92 = memref.load %arg1[%c17] : memref<400xf32, #tpu.memory_space<smem>>
    %93 = vector.broadcast %92 : f32 to vector<8x128xf32>
    %94 = arith.mulf %7, %93 : vector<8x128xf32>
    %c81 = arith.constant 81 : index
    %95 = memref.load %arg1[%c81] : memref<400xf32, #tpu.memory_space<smem>>
    %96 = vector.broadcast %95 : f32 to vector<8x128xf32>
    %97 = arith.addf %94, %96 : vector<8x128xf32>
    %c25 = arith.constant 25 : index
    %98 = memref.load %arg1[%c25] : memref<400xf32, #tpu.memory_space<smem>>
    %99 = vector.broadcast %98 : f32 to vector<8x128xf32>
    %100 = arith.mulf %14, %99 : vector<8x128xf32>
    %101 = arith.addf %97, %100 : vector<8x128xf32>
    %c33 = arith.constant 33 : index
    %102 = memref.load %arg1[%c33] : memref<400xf32, #tpu.memory_space<smem>>
    %103 = vector.broadcast %102 : f32 to vector<8x128xf32>
    %104 = arith.mulf %21, %103 : vector<8x128xf32>
    %105 = arith.addf %101, %104 : vector<8x128xf32>
    %c41 = arith.constant 41 : index
    %106 = memref.load %arg1[%c41] : memref<400xf32, #tpu.memory_space<smem>>
    %107 = vector.broadcast %106 : f32 to vector<8x128xf32>
    %108 = arith.mulf %28, %107 : vector<8x128xf32>
    %109 = arith.addf %105, %108 : vector<8x128xf32>
    %c49 = arith.constant 49 : index
    %110 = memref.load %arg1[%c49] : memref<400xf32, #tpu.memory_space<smem>>
    %111 = vector.broadcast %110 : f32 to vector<8x128xf32>
    %112 = arith.mulf %35, %111 : vector<8x128xf32>
    %113 = arith.addf %109, %112 : vector<8x128xf32>
    %c57 = arith.constant 57 : index
    %114 = memref.load %arg1[%c57] : memref<400xf32, #tpu.memory_space<smem>>
    %115 = vector.broadcast %114 : f32 to vector<8x128xf32>
    %116 = arith.mulf %42, %115 : vector<8x128xf32>
    %117 = arith.addf %113, %116 : vector<8x128xf32>
    %c65 = arith.constant 65 : index
    %118 = memref.load %arg1[%c65] : memref<400xf32, #tpu.memory_space<smem>>
    %119 = vector.broadcast %118 : f32 to vector<8x128xf32>
    %120 = arith.mulf %49, %119 : vector<8x128xf32>
    %121 = arith.addf %117, %120 : vector<8x128xf32>
    %c73 = arith.constant 73 : index
    %122 = memref.load %arg1[%c73] : memref<400xf32, #tpu.memory_space<smem>>
    %123 = vector.broadcast %122 : f32 to vector<8x128xf32>
    %124 = arith.mulf %56, %123 : vector<8x128xf32>
    %125 = arith.addf %121, %124 : vector<8x128xf32>
    %126 = math.tanh %125 : vector<8x128xf32>
    %c18 = arith.constant 18 : index
    %127 = memref.load %arg1[%c18] : memref<400xf32, #tpu.memory_space<smem>>
    %128 = vector.broadcast %127 : f32 to vector<8x128xf32>
    %129 = arith.mulf %7, %128 : vector<8x128xf32>
    %c82 = arith.constant 82 : index
    %130 = memref.load %arg1[%c82] : memref<400xf32, #tpu.memory_space<smem>>
    %131 = vector.broadcast %130 : f32 to vector<8x128xf32>
    %132 = arith.addf %129, %131 : vector<8x128xf32>
    %c26 = arith.constant 26 : index
    %133 = memref.load %arg1[%c26] : memref<400xf32, #tpu.memory_space<smem>>
    %134 = vector.broadcast %133 : f32 to vector<8x128xf32>
    %135 = arith.mulf %14, %134 : vector<8x128xf32>
    %136 = arith.addf %132, %135 : vector<8x128xf32>
    %c34 = arith.constant 34 : index
    %137 = memref.load %arg1[%c34] : memref<400xf32, #tpu.memory_space<smem>>
    %138 = vector.broadcast %137 : f32 to vector<8x128xf32>
    %139 = arith.mulf %21, %138 : vector<8x128xf32>
    %140 = arith.addf %136, %139 : vector<8x128xf32>
    %c42 = arith.constant 42 : index
    %141 = memref.load %arg1[%c42] : memref<400xf32, #tpu.memory_space<smem>>
    %142 = vector.broadcast %141 : f32 to vector<8x128xf32>
    %143 = arith.mulf %28, %142 : vector<8x128xf32>
    %144 = arith.addf %140, %143 : vector<8x128xf32>
    %c50 = arith.constant 50 : index
    %145 = memref.load %arg1[%c50] : memref<400xf32, #tpu.memory_space<smem>>
    %146 = vector.broadcast %145 : f32 to vector<8x128xf32>
    %147 = arith.mulf %35, %146 : vector<8x128xf32>
    %148 = arith.addf %144, %147 : vector<8x128xf32>
    %c58 = arith.constant 58 : index
    %149 = memref.load %arg1[%c58] : memref<400xf32, #tpu.memory_space<smem>>
    %150 = vector.broadcast %149 : f32 to vector<8x128xf32>
    %151 = arith.mulf %42, %150 : vector<8x128xf32>
    %152 = arith.addf %148, %151 : vector<8x128xf32>
    %c66 = arith.constant 66 : index
    %153 = memref.load %arg1[%c66] : memref<400xf32, #tpu.memory_space<smem>>
    %154 = vector.broadcast %153 : f32 to vector<8x128xf32>
    %155 = arith.mulf %49, %154 : vector<8x128xf32>
    %156 = arith.addf %152, %155 : vector<8x128xf32>
    %c74 = arith.constant 74 : index
    %157 = memref.load %arg1[%c74] : memref<400xf32, #tpu.memory_space<smem>>
    %158 = vector.broadcast %157 : f32 to vector<8x128xf32>
    %159 = arith.mulf %56, %158 : vector<8x128xf32>
    %160 = arith.addf %156, %159 : vector<8x128xf32>
    %161 = math.tanh %160 : vector<8x128xf32>
    %c19 = arith.constant 19 : index
    %162 = memref.load %arg1[%c19] : memref<400xf32, #tpu.memory_space<smem>>
    %163 = vector.broadcast %162 : f32 to vector<8x128xf32>
    %164 = arith.mulf %7, %163 : vector<8x128xf32>
    %c83 = arith.constant 83 : index
    %165 = memref.load %arg1[%c83] : memref<400xf32, #tpu.memory_space<smem>>
    %166 = vector.broadcast %165 : f32 to vector<8x128xf32>
    %167 = arith.addf %164, %166 : vector<8x128xf32>
    %c27 = arith.constant 27 : index
    %168 = memref.load %arg1[%c27] : memref<400xf32, #tpu.memory_space<smem>>
    %169 = vector.broadcast %168 : f32 to vector<8x128xf32>
    %170 = arith.mulf %14, %169 : vector<8x128xf32>
    %171 = arith.addf %167, %170 : vector<8x128xf32>
    %c35 = arith.constant 35 : index
    %172 = memref.load %arg1[%c35] : memref<400xf32, #tpu.memory_space<smem>>
    %173 = vector.broadcast %172 : f32 to vector<8x128xf32>
    %174 = arith.mulf %21, %173 : vector<8x128xf32>
    %175 = arith.addf %171, %174 : vector<8x128xf32>
    %c43 = arith.constant 43 : index
    %176 = memref.load %arg1[%c43] : memref<400xf32, #tpu.memory_space<smem>>
    %177 = vector.broadcast %176 : f32 to vector<8x128xf32>
    %178 = arith.mulf %28, %177 : vector<8x128xf32>
    %179 = arith.addf %175, %178 : vector<8x128xf32>
    %c51 = arith.constant 51 : index
    %180 = memref.load %arg1[%c51] : memref<400xf32, #tpu.memory_space<smem>>
    %181 = vector.broadcast %180 : f32 to vector<8x128xf32>
    %182 = arith.mulf %35, %181 : vector<8x128xf32>
    %183 = arith.addf %179, %182 : vector<8x128xf32>
    %c59 = arith.constant 59 : index
    %184 = memref.load %arg1[%c59] : memref<400xf32, #tpu.memory_space<smem>>
    %185 = vector.broadcast %184 : f32 to vector<8x128xf32>
    %186 = arith.mulf %42, %185 : vector<8x128xf32>
    %187 = arith.addf %183, %186 : vector<8x128xf32>
    %c67 = arith.constant 67 : index
    %188 = memref.load %arg1[%c67] : memref<400xf32, #tpu.memory_space<smem>>
    %189 = vector.broadcast %188 : f32 to vector<8x128xf32>
    %190 = arith.mulf %49, %189 : vector<8x128xf32>
    %191 = arith.addf %187, %190 : vector<8x128xf32>
    %c75 = arith.constant 75 : index
    %192 = memref.load %arg1[%c75] : memref<400xf32, #tpu.memory_space<smem>>
    %193 = vector.broadcast %192 : f32 to vector<8x128xf32>
    %194 = arith.mulf %56, %193 : vector<8x128xf32>
    %195 = arith.addf %191, %194 : vector<8x128xf32>
    %196 = math.tanh %195 : vector<8x128xf32>
    %c20 = arith.constant 20 : index
    %197 = memref.load %arg1[%c20] : memref<400xf32, #tpu.memory_space<smem>>
    %198 = vector.broadcast %197 : f32 to vector<8x128xf32>
    %199 = arith.mulf %7, %198 : vector<8x128xf32>
    %c84 = arith.constant 84 : index
    %200 = memref.load %arg1[%c84] : memref<400xf32, #tpu.memory_space<smem>>
    %201 = vector.broadcast %200 : f32 to vector<8x128xf32>
    %202 = arith.addf %199, %201 : vector<8x128xf32>
    %c28 = arith.constant 28 : index
    %203 = memref.load %arg1[%c28] : memref<400xf32, #tpu.memory_space<smem>>
    %204 = vector.broadcast %203 : f32 to vector<8x128xf32>
    %205 = arith.mulf %14, %204 : vector<8x128xf32>
    %206 = arith.addf %202, %205 : vector<8x128xf32>
    %c36 = arith.constant 36 : index
    %207 = memref.load %arg1[%c36] : memref<400xf32, #tpu.memory_space<smem>>
    %208 = vector.broadcast %207 : f32 to vector<8x128xf32>
    %209 = arith.mulf %21, %208 : vector<8x128xf32>
    %210 = arith.addf %206, %209 : vector<8x128xf32>
    %c44 = arith.constant 44 : index
    %211 = memref.load %arg1[%c44] : memref<400xf32, #tpu.memory_space<smem>>
    %212 = vector.broadcast %211 : f32 to vector<8x128xf32>
    %213 = arith.mulf %28, %212 : vector<8x128xf32>
    %214 = arith.addf %210, %213 : vector<8x128xf32>
    %c52 = arith.constant 52 : index
    %215 = memref.load %arg1[%c52] : memref<400xf32, #tpu.memory_space<smem>>
    %216 = vector.broadcast %215 : f32 to vector<8x128xf32>
    %217 = arith.mulf %35, %216 : vector<8x128xf32>
    %218 = arith.addf %214, %217 : vector<8x128xf32>
    %c60 = arith.constant 60 : index
    %219 = memref.load %arg1[%c60] : memref<400xf32, #tpu.memory_space<smem>>
    %220 = vector.broadcast %219 : f32 to vector<8x128xf32>
    %221 = arith.mulf %42, %220 : vector<8x128xf32>
    %222 = arith.addf %218, %221 : vector<8x128xf32>
    %c68 = arith.constant 68 : index
    %223 = memref.load %arg1[%c68] : memref<400xf32, #tpu.memory_space<smem>>
    %224 = vector.broadcast %223 : f32 to vector<8x128xf32>
    %225 = arith.mulf %49, %224 : vector<8x128xf32>
    %226 = arith.addf %222, %225 : vector<8x128xf32>
    %c76 = arith.constant 76 : index
    %227 = memref.load %arg1[%c76] : memref<400xf32, #tpu.memory_space<smem>>
    %228 = vector.broadcast %227 : f32 to vector<8x128xf32>
    %229 = arith.mulf %56, %228 : vector<8x128xf32>
    %230 = arith.addf %226, %229 : vector<8x128xf32>
    %231 = math.tanh %230 : vector<8x128xf32>
    %c21 = arith.constant 21 : index
    %232 = memref.load %arg1[%c21] : memref<400xf32, #tpu.memory_space<smem>>
    %233 = vector.broadcast %232 : f32 to vector<8x128xf32>
    %234 = arith.mulf %7, %233 : vector<8x128xf32>
    %c85 = arith.constant 85 : index
    %235 = memref.load %arg1[%c85] : memref<400xf32, #tpu.memory_space<smem>>
    %236 = vector.broadcast %235 : f32 to vector<8x128xf32>
    %237 = arith.addf %234, %236 : vector<8x128xf32>
    %c29 = arith.constant 29 : index
    %238 = memref.load %arg1[%c29] : memref<400xf32, #tpu.memory_space<smem>>
    %239 = vector.broadcast %238 : f32 to vector<8x128xf32>
    %240 = arith.mulf %14, %239 : vector<8x128xf32>
    %241 = arith.addf %237, %240 : vector<8x128xf32>
    %c37 = arith.constant 37 : index
    %242 = memref.load %arg1[%c37] : memref<400xf32, #tpu.memory_space<smem>>
    %243 = vector.broadcast %242 : f32 to vector<8x128xf32>
    %244 = arith.mulf %21, %243 : vector<8x128xf32>
    %245 = arith.addf %241, %244 : vector<8x128xf32>
    %c45 = arith.constant 45 : index
    %246 = memref.load %arg1[%c45] : memref<400xf32, #tpu.memory_space<smem>>
    %247 = vector.broadcast %246 : f32 to vector<8x128xf32>
    %248 = arith.mulf %28, %247 : vector<8x128xf32>
    %249 = arith.addf %245, %248 : vector<8x128xf32>
    %c53 = arith.constant 53 : index
    %250 = memref.load %arg1[%c53] : memref<400xf32, #tpu.memory_space<smem>>
    %251 = vector.broadcast %250 : f32 to vector<8x128xf32>
    %252 = arith.mulf %35, %251 : vector<8x128xf32>
    %253 = arith.addf %249, %252 : vector<8x128xf32>
    %c61 = arith.constant 61 : index
    %254 = memref.load %arg1[%c61] : memref<400xf32, #tpu.memory_space<smem>>
    %255 = vector.broadcast %254 : f32 to vector<8x128xf32>
    %256 = arith.mulf %42, %255 : vector<8x128xf32>
    %257 = arith.addf %253, %256 : vector<8x128xf32>
    %c69 = arith.constant 69 : index
    %258 = memref.load %arg1[%c69] : memref<400xf32, #tpu.memory_space<smem>>
    %259 = vector.broadcast %258 : f32 to vector<8x128xf32>
    %260 = arith.mulf %49, %259 : vector<8x128xf32>
    %261 = arith.addf %257, %260 : vector<8x128xf32>
    %c77 = arith.constant 77 : index
    %262 = memref.load %arg1[%c77] : memref<400xf32, #tpu.memory_space<smem>>
    %263 = vector.broadcast %262 : f32 to vector<8x128xf32>
    %264 = arith.mulf %56, %263 : vector<8x128xf32>
    %265 = arith.addf %261, %264 : vector<8x128xf32>
    %266 = math.tanh %265 : vector<8x128xf32>
    %c22 = arith.constant 22 : index
    %267 = memref.load %arg1[%c22] : memref<400xf32, #tpu.memory_space<smem>>
    %268 = vector.broadcast %267 : f32 to vector<8x128xf32>
    %269 = arith.mulf %7, %268 : vector<8x128xf32>
    %c86 = arith.constant 86 : index
    %270 = memref.load %arg1[%c86] : memref<400xf32, #tpu.memory_space<smem>>
    %271 = vector.broadcast %270 : f32 to vector<8x128xf32>
    %272 = arith.addf %269, %271 : vector<8x128xf32>
    %c30 = arith.constant 30 : index
    %273 = memref.load %arg1[%c30] : memref<400xf32, #tpu.memory_space<smem>>
    %274 = vector.broadcast %273 : f32 to vector<8x128xf32>
    %275 = arith.mulf %14, %274 : vector<8x128xf32>
    %276 = arith.addf %272, %275 : vector<8x128xf32>
    %c38 = arith.constant 38 : index
    %277 = memref.load %arg1[%c38] : memref<400xf32, #tpu.memory_space<smem>>
    %278 = vector.broadcast %277 : f32 to vector<8x128xf32>
    %279 = arith.mulf %21, %278 : vector<8x128xf32>
    %280 = arith.addf %276, %279 : vector<8x128xf32>
    %c46 = arith.constant 46 : index
    %281 = memref.load %arg1[%c46] : memref<400xf32, #tpu.memory_space<smem>>
    %282 = vector.broadcast %281 : f32 to vector<8x128xf32>
    %283 = arith.mulf %28, %282 : vector<8x128xf32>
    %284 = arith.addf %280, %283 : vector<8x128xf32>
    %c54 = arith.constant 54 : index
    %285 = memref.load %arg1[%c54] : memref<400xf32, #tpu.memory_space<smem>>
    %286 = vector.broadcast %285 : f32 to vector<8x128xf32>
    %287 = arith.mulf %35, %286 : vector<8x128xf32>
    %288 = arith.addf %284, %287 : vector<8x128xf32>
    %c62 = arith.constant 62 : index
    %289 = memref.load %arg1[%c62] : memref<400xf32, #tpu.memory_space<smem>>
    %290 = vector.broadcast %289 : f32 to vector<8x128xf32>
    %291 = arith.mulf %42, %290 : vector<8x128xf32>
    %292 = arith.addf %288, %291 : vector<8x128xf32>
    %c70 = arith.constant 70 : index
    %293 = memref.load %arg1[%c70] : memref<400xf32, #tpu.memory_space<smem>>
    %294 = vector.broadcast %293 : f32 to vector<8x128xf32>
    %295 = arith.mulf %49, %294 : vector<8x128xf32>
    %296 = arith.addf %292, %295 : vector<8x128xf32>
    %c78 = arith.constant 78 : index
    %297 = memref.load %arg1[%c78] : memref<400xf32, #tpu.memory_space<smem>>
    %298 = vector.broadcast %297 : f32 to vector<8x128xf32>
    %299 = arith.mulf %56, %298 : vector<8x128xf32>
    %300 = arith.addf %296, %299 : vector<8x128xf32>
    %301 = math.tanh %300 : vector<8x128xf32>
    %c23 = arith.constant 23 : index
    %302 = memref.load %arg1[%c23] : memref<400xf32, #tpu.memory_space<smem>>
    %303 = vector.broadcast %302 : f32 to vector<8x128xf32>
    %304 = arith.mulf %7, %303 : vector<8x128xf32>
    %c87 = arith.constant 87 : index
    %305 = memref.load %arg1[%c87] : memref<400xf32, #tpu.memory_space<smem>>
    %306 = vector.broadcast %305 : f32 to vector<8x128xf32>
    %307 = arith.addf %304, %306 : vector<8x128xf32>
    %c31 = arith.constant 31 : index
    %308 = memref.load %arg1[%c31] : memref<400xf32, #tpu.memory_space<smem>>
    %309 = vector.broadcast %308 : f32 to vector<8x128xf32>
    %310 = arith.mulf %14, %309 : vector<8x128xf32>
    %311 = arith.addf %307, %310 : vector<8x128xf32>
    %c39 = arith.constant 39 : index
    %312 = memref.load %arg1[%c39] : memref<400xf32, #tpu.memory_space<smem>>
    %313 = vector.broadcast %312 : f32 to vector<8x128xf32>
    %314 = arith.mulf %21, %313 : vector<8x128xf32>
    %315 = arith.addf %311, %314 : vector<8x128xf32>
    %c47 = arith.constant 47 : index
    %316 = memref.load %arg1[%c47] : memref<400xf32, #tpu.memory_space<smem>>
    %317 = vector.broadcast %316 : f32 to vector<8x128xf32>
    %318 = arith.mulf %28, %317 : vector<8x128xf32>
    %319 = arith.addf %315, %318 : vector<8x128xf32>
    %c55 = arith.constant 55 : index
    %320 = memref.load %arg1[%c55] : memref<400xf32, #tpu.memory_space<smem>>
    %321 = vector.broadcast %320 : f32 to vector<8x128xf32>
    %322 = arith.mulf %35, %321 : vector<8x128xf32>
    %323 = arith.addf %319, %322 : vector<8x128xf32>
    %c63 = arith.constant 63 : index
    %324 = memref.load %arg1[%c63] : memref<400xf32, #tpu.memory_space<smem>>
    %325 = vector.broadcast %324 : f32 to vector<8x128xf32>
    %326 = arith.mulf %42, %325 : vector<8x128xf32>
    %327 = arith.addf %323, %326 : vector<8x128xf32>
    %c71 = arith.constant 71 : index
    %328 = memref.load %arg1[%c71] : memref<400xf32, #tpu.memory_space<smem>>
    %329 = vector.broadcast %328 : f32 to vector<8x128xf32>
    %330 = arith.mulf %49, %329 : vector<8x128xf32>
    %331 = arith.addf %327, %330 : vector<8x128xf32>
    %c79 = arith.constant 79 : index
    %332 = memref.load %arg1[%c79] : memref<400xf32, #tpu.memory_space<smem>>
    %333 = vector.broadcast %332 : f32 to vector<8x128xf32>
    %334 = arith.mulf %56, %333 : vector<8x128xf32>
    %335 = arith.addf %331, %334 : vector<8x128xf32>
    %336 = math.tanh %335 : vector<8x128xf32>
    %c88 = arith.constant 88 : index
    %337 = memref.load %arg1[%c88] : memref<400xf32, #tpu.memory_space<smem>>
    %338 = vector.broadcast %337 : f32 to vector<8x128xf32>
    %339 = arith.mulf %91, %338 : vector<8x128xf32>
    %c152 = arith.constant 152 : index
    %340 = memref.load %arg1[%c152] : memref<400xf32, #tpu.memory_space<smem>>
    %341 = vector.broadcast %340 : f32 to vector<8x128xf32>
    %342 = arith.addf %339, %341 : vector<8x128xf32>
    %c96 = arith.constant 96 : index
    %343 = memref.load %arg1[%c96] : memref<400xf32, #tpu.memory_space<smem>>
    %344 = vector.broadcast %343 : f32 to vector<8x128xf32>
    %345 = arith.mulf %126, %344 : vector<8x128xf32>
    %346 = arith.addf %342, %345 : vector<8x128xf32>
    %c104 = arith.constant 104 : index
    %347 = memref.load %arg1[%c104] : memref<400xf32, #tpu.memory_space<smem>>
    %348 = vector.broadcast %347 : f32 to vector<8x128xf32>
    %349 = arith.mulf %161, %348 : vector<8x128xf32>
    %350 = arith.addf %346, %349 : vector<8x128xf32>
    %c112 = arith.constant 112 : index
    %351 = memref.load %arg1[%c112] : memref<400xf32, #tpu.memory_space<smem>>
    %352 = vector.broadcast %351 : f32 to vector<8x128xf32>
    %353 = arith.mulf %196, %352 : vector<8x128xf32>
    %354 = arith.addf %350, %353 : vector<8x128xf32>
    %c120 = arith.constant 120 : index
    %355 = memref.load %arg1[%c120] : memref<400xf32, #tpu.memory_space<smem>>
    %356 = vector.broadcast %355 : f32 to vector<8x128xf32>
    %357 = arith.mulf %231, %356 : vector<8x128xf32>
    %358 = arith.addf %354, %357 : vector<8x128xf32>
    %c128 = arith.constant 128 : index
    %359 = memref.load %arg1[%c128] : memref<400xf32, #tpu.memory_space<smem>>
    %360 = vector.broadcast %359 : f32 to vector<8x128xf32>
    %361 = arith.mulf %266, %360 : vector<8x128xf32>
    %362 = arith.addf %358, %361 : vector<8x128xf32>
    %c136 = arith.constant 136 : index
    %363 = memref.load %arg1[%c136] : memref<400xf32, #tpu.memory_space<smem>>
    %364 = vector.broadcast %363 : f32 to vector<8x128xf32>
    %365 = arith.mulf %301, %364 : vector<8x128xf32>
    %366 = arith.addf %362, %365 : vector<8x128xf32>
    %c144 = arith.constant 144 : index
    %367 = memref.load %arg1[%c144] : memref<400xf32, #tpu.memory_space<smem>>
    %368 = vector.broadcast %367 : f32 to vector<8x128xf32>
    %369 = arith.mulf %336, %368 : vector<8x128xf32>
    %370 = arith.addf %366, %369 : vector<8x128xf32>
    %371 = math.tanh %370 : vector<8x128xf32>
    %c89 = arith.constant 89 : index
    %372 = memref.load %arg1[%c89] : memref<400xf32, #tpu.memory_space<smem>>
    %373 = vector.broadcast %372 : f32 to vector<8x128xf32>
    %374 = arith.mulf %91, %373 : vector<8x128xf32>
    %c153 = arith.constant 153 : index
    %375 = memref.load %arg1[%c153] : memref<400xf32, #tpu.memory_space<smem>>
    %376 = vector.broadcast %375 : f32 to vector<8x128xf32>
    %377 = arith.addf %374, %376 : vector<8x128xf32>
    %c97 = arith.constant 97 : index
    %378 = memref.load %arg1[%c97] : memref<400xf32, #tpu.memory_space<smem>>
    %379 = vector.broadcast %378 : f32 to vector<8x128xf32>
    %380 = arith.mulf %126, %379 : vector<8x128xf32>
    %381 = arith.addf %377, %380 : vector<8x128xf32>
    %c105 = arith.constant 105 : index
    %382 = memref.load %arg1[%c105] : memref<400xf32, #tpu.memory_space<smem>>
    %383 = vector.broadcast %382 : f32 to vector<8x128xf32>
    %384 = arith.mulf %161, %383 : vector<8x128xf32>
    %385 = arith.addf %381, %384 : vector<8x128xf32>
    %c113 = arith.constant 113 : index
    %386 = memref.load %arg1[%c113] : memref<400xf32, #tpu.memory_space<smem>>
    %387 = vector.broadcast %386 : f32 to vector<8x128xf32>
    %388 = arith.mulf %196, %387 : vector<8x128xf32>
    %389 = arith.addf %385, %388 : vector<8x128xf32>
    %c121 = arith.constant 121 : index
    %390 = memref.load %arg1[%c121] : memref<400xf32, #tpu.memory_space<smem>>
    %391 = vector.broadcast %390 : f32 to vector<8x128xf32>
    %392 = arith.mulf %231, %391 : vector<8x128xf32>
    %393 = arith.addf %389, %392 : vector<8x128xf32>
    %c129 = arith.constant 129 : index
    %394 = memref.load %arg1[%c129] : memref<400xf32, #tpu.memory_space<smem>>
    %395 = vector.broadcast %394 : f32 to vector<8x128xf32>
    %396 = arith.mulf %266, %395 : vector<8x128xf32>
    %397 = arith.addf %393, %396 : vector<8x128xf32>
    %c137 = arith.constant 137 : index
    %398 = memref.load %arg1[%c137] : memref<400xf32, #tpu.memory_space<smem>>
    %399 = vector.broadcast %398 : f32 to vector<8x128xf32>
    %400 = arith.mulf %301, %399 : vector<8x128xf32>
    %401 = arith.addf %397, %400 : vector<8x128xf32>
    %c145 = arith.constant 145 : index
    %402 = memref.load %arg1[%c145] : memref<400xf32, #tpu.memory_space<smem>>
    %403 = vector.broadcast %402 : f32 to vector<8x128xf32>
    %404 = arith.mulf %336, %403 : vector<8x128xf32>
    %405 = arith.addf %401, %404 : vector<8x128xf32>
    %406 = math.tanh %405 : vector<8x128xf32>
    %c90 = arith.constant 90 : index
    %407 = memref.load %arg1[%c90] : memref<400xf32, #tpu.memory_space<smem>>
    %408 = vector.broadcast %407 : f32 to vector<8x128xf32>
    %409 = arith.mulf %91, %408 : vector<8x128xf32>
    %c154 = arith.constant 154 : index
    %410 = memref.load %arg1[%c154] : memref<400xf32, #tpu.memory_space<smem>>
    %411 = vector.broadcast %410 : f32 to vector<8x128xf32>
    %412 = arith.addf %409, %411 : vector<8x128xf32>
    %c98 = arith.constant 98 : index
    %413 = memref.load %arg1[%c98] : memref<400xf32, #tpu.memory_space<smem>>
    %414 = vector.broadcast %413 : f32 to vector<8x128xf32>
    %415 = arith.mulf %126, %414 : vector<8x128xf32>
    %416 = arith.addf %412, %415 : vector<8x128xf32>
    %c106 = arith.constant 106 : index
    %417 = memref.load %arg1[%c106] : memref<400xf32, #tpu.memory_space<smem>>
    %418 = vector.broadcast %417 : f32 to vector<8x128xf32>
    %419 = arith.mulf %161, %418 : vector<8x128xf32>
    %420 = arith.addf %416, %419 : vector<8x128xf32>
    %c114 = arith.constant 114 : index
    %421 = memref.load %arg1[%c114] : memref<400xf32, #tpu.memory_space<smem>>
    %422 = vector.broadcast %421 : f32 to vector<8x128xf32>
    %423 = arith.mulf %196, %422 : vector<8x128xf32>
    %424 = arith.addf %420, %423 : vector<8x128xf32>
    %c122 = arith.constant 122 : index
    %425 = memref.load %arg1[%c122] : memref<400xf32, #tpu.memory_space<smem>>
    %426 = vector.broadcast %425 : f32 to vector<8x128xf32>
    %427 = arith.mulf %231, %426 : vector<8x128xf32>
    %428 = arith.addf %424, %427 : vector<8x128xf32>
    %c130 = arith.constant 130 : index
    %429 = memref.load %arg1[%c130] : memref<400xf32, #tpu.memory_space<smem>>
    %430 = vector.broadcast %429 : f32 to vector<8x128xf32>
    %431 = arith.mulf %266, %430 : vector<8x128xf32>
    %432 = arith.addf %428, %431 : vector<8x128xf32>
    %c138 = arith.constant 138 : index
    %433 = memref.load %arg1[%c138] : memref<400xf32, #tpu.memory_space<smem>>
    %434 = vector.broadcast %433 : f32 to vector<8x128xf32>
    %435 = arith.mulf %301, %434 : vector<8x128xf32>
    %436 = arith.addf %432, %435 : vector<8x128xf32>
    %c146 = arith.constant 146 : index
    %437 = memref.load %arg1[%c146] : memref<400xf32, #tpu.memory_space<smem>>
    %438 = vector.broadcast %437 : f32 to vector<8x128xf32>
    %439 = arith.mulf %336, %438 : vector<8x128xf32>
    %440 = arith.addf %436, %439 : vector<8x128xf32>
    %441 = math.tanh %440 : vector<8x128xf32>
    %c91 = arith.constant 91 : index
    %442 = memref.load %arg1[%c91] : memref<400xf32, #tpu.memory_space<smem>>
    %443 = vector.broadcast %442 : f32 to vector<8x128xf32>
    %444 = arith.mulf %91, %443 : vector<8x128xf32>
    %c155 = arith.constant 155 : index
    %445 = memref.load %arg1[%c155] : memref<400xf32, #tpu.memory_space<smem>>
    %446 = vector.broadcast %445 : f32 to vector<8x128xf32>
    %447 = arith.addf %444, %446 : vector<8x128xf32>
    %c99 = arith.constant 99 : index
    %448 = memref.load %arg1[%c99] : memref<400xf32, #tpu.memory_space<smem>>
    %449 = vector.broadcast %448 : f32 to vector<8x128xf32>
    %450 = arith.mulf %126, %449 : vector<8x128xf32>
    %451 = arith.addf %447, %450 : vector<8x128xf32>
    %c107 = arith.constant 107 : index
    %452 = memref.load %arg1[%c107] : memref<400xf32, #tpu.memory_space<smem>>
    %453 = vector.broadcast %452 : f32 to vector<8x128xf32>
    %454 = arith.mulf %161, %453 : vector<8x128xf32>
    %455 = arith.addf %451, %454 : vector<8x128xf32>
    %c115 = arith.constant 115 : index
    %456 = memref.load %arg1[%c115] : memref<400xf32, #tpu.memory_space<smem>>
    %457 = vector.broadcast %456 : f32 to vector<8x128xf32>
    %458 = arith.mulf %196, %457 : vector<8x128xf32>
    %459 = arith.addf %455, %458 : vector<8x128xf32>
    %c123 = arith.constant 123 : index
    %460 = memref.load %arg1[%c123] : memref<400xf32, #tpu.memory_space<smem>>
    %461 = vector.broadcast %460 : f32 to vector<8x128xf32>
    %462 = arith.mulf %231, %461 : vector<8x128xf32>
    %463 = arith.addf %459, %462 : vector<8x128xf32>
    %c131 = arith.constant 131 : index
    %464 = memref.load %arg1[%c131] : memref<400xf32, #tpu.memory_space<smem>>
    %465 = vector.broadcast %464 : f32 to vector<8x128xf32>
    %466 = arith.mulf %266, %465 : vector<8x128xf32>
    %467 = arith.addf %463, %466 : vector<8x128xf32>
    %c139 = arith.constant 139 : index
    %468 = memref.load %arg1[%c139] : memref<400xf32, #tpu.memory_space<smem>>
    %469 = vector.broadcast %468 : f32 to vector<8x128xf32>
    %470 = arith.mulf %301, %469 : vector<8x128xf32>
    %471 = arith.addf %467, %470 : vector<8x128xf32>
    %c147 = arith.constant 147 : index
    %472 = memref.load %arg1[%c147] : memref<400xf32, #tpu.memory_space<smem>>
    %473 = vector.broadcast %472 : f32 to vector<8x128xf32>
    %474 = arith.mulf %336, %473 : vector<8x128xf32>
    %475 = arith.addf %471, %474 : vector<8x128xf32>
    %476 = math.tanh %475 : vector<8x128xf32>
    %c92 = arith.constant 92 : index
    %477 = memref.load %arg1[%c92] : memref<400xf32, #tpu.memory_space<smem>>
    %478 = vector.broadcast %477 : f32 to vector<8x128xf32>
    %479 = arith.mulf %91, %478 : vector<8x128xf32>
    %c156 = arith.constant 156 : index
    %480 = memref.load %arg1[%c156] : memref<400xf32, #tpu.memory_space<smem>>
    %481 = vector.broadcast %480 : f32 to vector<8x128xf32>
    %482 = arith.addf %479, %481 : vector<8x128xf32>
    %c100 = arith.constant 100 : index
    %483 = memref.load %arg1[%c100] : memref<400xf32, #tpu.memory_space<smem>>
    %484 = vector.broadcast %483 : f32 to vector<8x128xf32>
    %485 = arith.mulf %126, %484 : vector<8x128xf32>
    %486 = arith.addf %482, %485 : vector<8x128xf32>
    %c108 = arith.constant 108 : index
    %487 = memref.load %arg1[%c108] : memref<400xf32, #tpu.memory_space<smem>>
    %488 = vector.broadcast %487 : f32 to vector<8x128xf32>
    %489 = arith.mulf %161, %488 : vector<8x128xf32>
    %490 = arith.addf %486, %489 : vector<8x128xf32>
    %c116 = arith.constant 116 : index
    %491 = memref.load %arg1[%c116] : memref<400xf32, #tpu.memory_space<smem>>
    %492 = vector.broadcast %491 : f32 to vector<8x128xf32>
    %493 = arith.mulf %196, %492 : vector<8x128xf32>
    %494 = arith.addf %490, %493 : vector<8x128xf32>
    %c124 = arith.constant 124 : index
    %495 = memref.load %arg1[%c124] : memref<400xf32, #tpu.memory_space<smem>>
    %496 = vector.broadcast %495 : f32 to vector<8x128xf32>
    %497 = arith.mulf %231, %496 : vector<8x128xf32>
    %498 = arith.addf %494, %497 : vector<8x128xf32>
    %c132 = arith.constant 132 : index
    %499 = memref.load %arg1[%c132] : memref<400xf32, #tpu.memory_space<smem>>
    %500 = vector.broadcast %499 : f32 to vector<8x128xf32>
    %501 = arith.mulf %266, %500 : vector<8x128xf32>
    %502 = arith.addf %498, %501 : vector<8x128xf32>
    %c140 = arith.constant 140 : index
    %503 = memref.load %arg1[%c140] : memref<400xf32, #tpu.memory_space<smem>>
    %504 = vector.broadcast %503 : f32 to vector<8x128xf32>
    %505 = arith.mulf %301, %504 : vector<8x128xf32>
    %506 = arith.addf %502, %505 : vector<8x128xf32>
    %c148 = arith.constant 148 : index
    %507 = memref.load %arg1[%c148] : memref<400xf32, #tpu.memory_space<smem>>
    %508 = vector.broadcast %507 : f32 to vector<8x128xf32>
    %509 = arith.mulf %336, %508 : vector<8x128xf32>
    %510 = arith.addf %506, %509 : vector<8x128xf32>
    %511 = math.tanh %510 : vector<8x128xf32>
    %c93 = arith.constant 93 : index
    %512 = memref.load %arg1[%c93] : memref<400xf32, #tpu.memory_space<smem>>
    %513 = vector.broadcast %512 : f32 to vector<8x128xf32>
    %514 = arith.mulf %91, %513 : vector<8x128xf32>
    %c157 = arith.constant 157 : index
    %515 = memref.load %arg1[%c157] : memref<400xf32, #tpu.memory_space<smem>>
    %516 = vector.broadcast %515 : f32 to vector<8x128xf32>
    %517 = arith.addf %514, %516 : vector<8x128xf32>
    %c101 = arith.constant 101 : index
    %518 = memref.load %arg1[%c101] : memref<400xf32, #tpu.memory_space<smem>>
    %519 = vector.broadcast %518 : f32 to vector<8x128xf32>
    %520 = arith.mulf %126, %519 : vector<8x128xf32>
    %521 = arith.addf %517, %520 : vector<8x128xf32>
    %c109 = arith.constant 109 : index
    %522 = memref.load %arg1[%c109] : memref<400xf32, #tpu.memory_space<smem>>
    %523 = vector.broadcast %522 : f32 to vector<8x128xf32>
    %524 = arith.mulf %161, %523 : vector<8x128xf32>
    %525 = arith.addf %521, %524 : vector<8x128xf32>
    %c117 = arith.constant 117 : index
    %526 = memref.load %arg1[%c117] : memref<400xf32, #tpu.memory_space<smem>>
    %527 = vector.broadcast %526 : f32 to vector<8x128xf32>
    %528 = arith.mulf %196, %527 : vector<8x128xf32>
    %529 = arith.addf %525, %528 : vector<8x128xf32>
    %c125 = arith.constant 125 : index
    %530 = memref.load %arg1[%c125] : memref<400xf32, #tpu.memory_space<smem>>
    %531 = vector.broadcast %530 : f32 to vector<8x128xf32>
    %532 = arith.mulf %231, %531 : vector<8x128xf32>
    %533 = arith.addf %529, %532 : vector<8x128xf32>
    %c133 = arith.constant 133 : index
    %534 = memref.load %arg1[%c133] : memref<400xf32, #tpu.memory_space<smem>>
    %535 = vector.broadcast %534 : f32 to vector<8x128xf32>
    %536 = arith.mulf %266, %535 : vector<8x128xf32>
    %537 = arith.addf %533, %536 : vector<8x128xf32>
    %c141 = arith.constant 141 : index
    %538 = memref.load %arg1[%c141] : memref<400xf32, #tpu.memory_space<smem>>
    %539 = vector.broadcast %538 : f32 to vector<8x128xf32>
    %540 = arith.mulf %301, %539 : vector<8x128xf32>
    %541 = arith.addf %537, %540 : vector<8x128xf32>
    %c149 = arith.constant 149 : index
    %542 = memref.load %arg1[%c149] : memref<400xf32, #tpu.memory_space<smem>>
    %543 = vector.broadcast %542 : f32 to vector<8x128xf32>
    %544 = arith.mulf %336, %543 : vector<8x128xf32>
    %545 = arith.addf %541, %544 : vector<8x128xf32>
    %546 = math.tanh %545 : vector<8x128xf32>
    %c94 = arith.constant 94 : index
    %547 = memref.load %arg1[%c94] : memref<400xf32, #tpu.memory_space<smem>>
    %548 = vector.broadcast %547 : f32 to vector<8x128xf32>
    %549 = arith.mulf %91, %548 : vector<8x128xf32>
    %c158 = arith.constant 158 : index
    %550 = memref.load %arg1[%c158] : memref<400xf32, #tpu.memory_space<smem>>
    %551 = vector.broadcast %550 : f32 to vector<8x128xf32>
    %552 = arith.addf %549, %551 : vector<8x128xf32>
    %c102 = arith.constant 102 : index
    %553 = memref.load %arg1[%c102] : memref<400xf32, #tpu.memory_space<smem>>
    %554 = vector.broadcast %553 : f32 to vector<8x128xf32>
    %555 = arith.mulf %126, %554 : vector<8x128xf32>
    %556 = arith.addf %552, %555 : vector<8x128xf32>
    %c110 = arith.constant 110 : index
    %557 = memref.load %arg1[%c110] : memref<400xf32, #tpu.memory_space<smem>>
    %558 = vector.broadcast %557 : f32 to vector<8x128xf32>
    %559 = arith.mulf %161, %558 : vector<8x128xf32>
    %560 = arith.addf %556, %559 : vector<8x128xf32>
    %c118 = arith.constant 118 : index
    %561 = memref.load %arg1[%c118] : memref<400xf32, #tpu.memory_space<smem>>
    %562 = vector.broadcast %561 : f32 to vector<8x128xf32>
    %563 = arith.mulf %196, %562 : vector<8x128xf32>
    %564 = arith.addf %560, %563 : vector<8x128xf32>
    %c126 = arith.constant 126 : index
    %565 = memref.load %arg1[%c126] : memref<400xf32, #tpu.memory_space<smem>>
    %566 = vector.broadcast %565 : f32 to vector<8x128xf32>
    %567 = arith.mulf %231, %566 : vector<8x128xf32>
    %568 = arith.addf %564, %567 : vector<8x128xf32>
    %c134 = arith.constant 134 : index
    %569 = memref.load %arg1[%c134] : memref<400xf32, #tpu.memory_space<smem>>
    %570 = vector.broadcast %569 : f32 to vector<8x128xf32>
    %571 = arith.mulf %266, %570 : vector<8x128xf32>
    %572 = arith.addf %568, %571 : vector<8x128xf32>
    %c142 = arith.constant 142 : index
    %573 = memref.load %arg1[%c142] : memref<400xf32, #tpu.memory_space<smem>>
    %574 = vector.broadcast %573 : f32 to vector<8x128xf32>
    %575 = arith.mulf %301, %574 : vector<8x128xf32>
    %576 = arith.addf %572, %575 : vector<8x128xf32>
    %c150 = arith.constant 150 : index
    %577 = memref.load %arg1[%c150] : memref<400xf32, #tpu.memory_space<smem>>
    %578 = vector.broadcast %577 : f32 to vector<8x128xf32>
    %579 = arith.mulf %336, %578 : vector<8x128xf32>
    %580 = arith.addf %576, %579 : vector<8x128xf32>
    %581 = math.tanh %580 : vector<8x128xf32>
    %c95 = arith.constant 95 : index
    %582 = memref.load %arg1[%c95] : memref<400xf32, #tpu.memory_space<smem>>
    %583 = vector.broadcast %582 : f32 to vector<8x128xf32>
    %584 = arith.mulf %91, %583 : vector<8x128xf32>
    %c159 = arith.constant 159 : index
    %585 = memref.load %arg1[%c159] : memref<400xf32, #tpu.memory_space<smem>>
    %586 = vector.broadcast %585 : f32 to vector<8x128xf32>
    %587 = arith.addf %584, %586 : vector<8x128xf32>
    %c103 = arith.constant 103 : index
    %588 = memref.load %arg1[%c103] : memref<400xf32, #tpu.memory_space<smem>>
    %589 = vector.broadcast %588 : f32 to vector<8x128xf32>
    %590 = arith.mulf %126, %589 : vector<8x128xf32>
    %591 = arith.addf %587, %590 : vector<8x128xf32>
    %c111 = arith.constant 111 : index
    %592 = memref.load %arg1[%c111] : memref<400xf32, #tpu.memory_space<smem>>
    %593 = vector.broadcast %592 : f32 to vector<8x128xf32>
    %594 = arith.mulf %161, %593 : vector<8x128xf32>
    %595 = arith.addf %591, %594 : vector<8x128xf32>
    %c119 = arith.constant 119 : index
    %596 = memref.load %arg1[%c119] : memref<400xf32, #tpu.memory_space<smem>>
    %597 = vector.broadcast %596 : f32 to vector<8x128xf32>
    %598 = arith.mulf %196, %597 : vector<8x128xf32>
    %599 = arith.addf %595, %598 : vector<8x128xf32>
    %c127 = arith.constant 127 : index
    %600 = memref.load %arg1[%c127] : memref<400xf32, #tpu.memory_space<smem>>
    %601 = vector.broadcast %600 : f32 to vector<8x128xf32>
    %602 = arith.mulf %231, %601 : vector<8x128xf32>
    %603 = arith.addf %599, %602 : vector<8x128xf32>
    %c135 = arith.constant 135 : index
    %604 = memref.load %arg1[%c135] : memref<400xf32, #tpu.memory_space<smem>>
    %605 = vector.broadcast %604 : f32 to vector<8x128xf32>
    %606 = arith.mulf %266, %605 : vector<8x128xf32>
    %607 = arith.addf %603, %606 : vector<8x128xf32>
    %c143 = arith.constant 143 : index
    %608 = memref.load %arg1[%c143] : memref<400xf32, #tpu.memory_space<smem>>
    %609 = vector.broadcast %608 : f32 to vector<8x128xf32>
    %610 = arith.mulf %301, %609 : vector<8x128xf32>
    %611 = arith.addf %607, %610 : vector<8x128xf32>
    %c151 = arith.constant 151 : index
    %612 = memref.load %arg1[%c151] : memref<400xf32, #tpu.memory_space<smem>>
    %613 = vector.broadcast %612 : f32 to vector<8x128xf32>
    %614 = arith.mulf %336, %613 : vector<8x128xf32>
    %615 = arith.addf %611, %614 : vector<8x128xf32>
    %616 = math.tanh %615 : vector<8x128xf32>
    %c160 = arith.constant 160 : index
    %617 = memref.load %arg1[%c160] : memref<400xf32, #tpu.memory_space<smem>>
    %618 = vector.broadcast %617 : f32 to vector<8x128xf32>
    %619 = arith.mulf %371, %618 : vector<8x128xf32>
    %c224 = arith.constant 224 : index
    %620 = memref.load %arg1[%c224] : memref<400xf32, #tpu.memory_space<smem>>
    %621 = vector.broadcast %620 : f32 to vector<8x128xf32>
    %622 = arith.addf %619, %621 : vector<8x128xf32>
    %c168 = arith.constant 168 : index
    %623 = memref.load %arg1[%c168] : memref<400xf32, #tpu.memory_space<smem>>
    %624 = vector.broadcast %623 : f32 to vector<8x128xf32>
    %625 = arith.mulf %406, %624 : vector<8x128xf32>
    %626 = arith.addf %622, %625 : vector<8x128xf32>
    %c176 = arith.constant 176 : index
    %627 = memref.load %arg1[%c176] : memref<400xf32, #tpu.memory_space<smem>>
    %628 = vector.broadcast %627 : f32 to vector<8x128xf32>
    %629 = arith.mulf %441, %628 : vector<8x128xf32>
    %630 = arith.addf %626, %629 : vector<8x128xf32>
    %c184 = arith.constant 184 : index
    %631 = memref.load %arg1[%c184] : memref<400xf32, #tpu.memory_space<smem>>
    %632 = vector.broadcast %631 : f32 to vector<8x128xf32>
    %633 = arith.mulf %476, %632 : vector<8x128xf32>
    %634 = arith.addf %630, %633 : vector<8x128xf32>
    %c192 = arith.constant 192 : index
    %635 = memref.load %arg1[%c192] : memref<400xf32, #tpu.memory_space<smem>>
    %636 = vector.broadcast %635 : f32 to vector<8x128xf32>
    %637 = arith.mulf %511, %636 : vector<8x128xf32>
    %638 = arith.addf %634, %637 : vector<8x128xf32>
    %c200 = arith.constant 200 : index
    %639 = memref.load %arg1[%c200] : memref<400xf32, #tpu.memory_space<smem>>
    %640 = vector.broadcast %639 : f32 to vector<8x128xf32>
    %641 = arith.mulf %546, %640 : vector<8x128xf32>
    %642 = arith.addf %638, %641 : vector<8x128xf32>
    %c208 = arith.constant 208 : index
    %643 = memref.load %arg1[%c208] : memref<400xf32, #tpu.memory_space<smem>>
    %644 = vector.broadcast %643 : f32 to vector<8x128xf32>
    %645 = arith.mulf %581, %644 : vector<8x128xf32>
    %646 = arith.addf %642, %645 : vector<8x128xf32>
    %c216 = arith.constant 216 : index
    %647 = memref.load %arg1[%c216] : memref<400xf32, #tpu.memory_space<smem>>
    %648 = vector.broadcast %647 : f32 to vector<8x128xf32>
    %649 = arith.mulf %616, %648 : vector<8x128xf32>
    %650 = arith.addf %646, %649 : vector<8x128xf32>
    %651 = math.tanh %650 : vector<8x128xf32>
    %c161 = arith.constant 161 : index
    %652 = memref.load %arg1[%c161] : memref<400xf32, #tpu.memory_space<smem>>
    %653 = vector.broadcast %652 : f32 to vector<8x128xf32>
    %654 = arith.mulf %371, %653 : vector<8x128xf32>
    %c225 = arith.constant 225 : index
    %655 = memref.load %arg1[%c225] : memref<400xf32, #tpu.memory_space<smem>>
    %656 = vector.broadcast %655 : f32 to vector<8x128xf32>
    %657 = arith.addf %654, %656 : vector<8x128xf32>
    %c169 = arith.constant 169 : index
    %658 = memref.load %arg1[%c169] : memref<400xf32, #tpu.memory_space<smem>>
    %659 = vector.broadcast %658 : f32 to vector<8x128xf32>
    %660 = arith.mulf %406, %659 : vector<8x128xf32>
    %661 = arith.addf %657, %660 : vector<8x128xf32>
    %c177 = arith.constant 177 : index
    %662 = memref.load %arg1[%c177] : memref<400xf32, #tpu.memory_space<smem>>
    %663 = vector.broadcast %662 : f32 to vector<8x128xf32>
    %664 = arith.mulf %441, %663 : vector<8x128xf32>
    %665 = arith.addf %661, %664 : vector<8x128xf32>
    %c185 = arith.constant 185 : index
    %666 = memref.load %arg1[%c185] : memref<400xf32, #tpu.memory_space<smem>>
    %667 = vector.broadcast %666 : f32 to vector<8x128xf32>
    %668 = arith.mulf %476, %667 : vector<8x128xf32>
    %669 = arith.addf %665, %668 : vector<8x128xf32>
    %c193 = arith.constant 193 : index
    %670 = memref.load %arg1[%c193] : memref<400xf32, #tpu.memory_space<smem>>
    %671 = vector.broadcast %670 : f32 to vector<8x128xf32>
    %672 = arith.mulf %511, %671 : vector<8x128xf32>
    %673 = arith.addf %669, %672 : vector<8x128xf32>
    %c201 = arith.constant 201 : index
    %674 = memref.load %arg1[%c201] : memref<400xf32, #tpu.memory_space<smem>>
    %675 = vector.broadcast %674 : f32 to vector<8x128xf32>
    %676 = arith.mulf %546, %675 : vector<8x128xf32>
    %677 = arith.addf %673, %676 : vector<8x128xf32>
    %c209 = arith.constant 209 : index
    %678 = memref.load %arg1[%c209] : memref<400xf32, #tpu.memory_space<smem>>
    %679 = vector.broadcast %678 : f32 to vector<8x128xf32>
    %680 = arith.mulf %581, %679 : vector<8x128xf32>
    %681 = arith.addf %677, %680 : vector<8x128xf32>
    %c217 = arith.constant 217 : index
    %682 = memref.load %arg1[%c217] : memref<400xf32, #tpu.memory_space<smem>>
    %683 = vector.broadcast %682 : f32 to vector<8x128xf32>
    %684 = arith.mulf %616, %683 : vector<8x128xf32>
    %685 = arith.addf %681, %684 : vector<8x128xf32>
    %686 = math.tanh %685 : vector<8x128xf32>
    %c162 = arith.constant 162 : index
    %687 = memref.load %arg1[%c162] : memref<400xf32, #tpu.memory_space<smem>>
    %688 = vector.broadcast %687 : f32 to vector<8x128xf32>
    %689 = arith.mulf %371, %688 : vector<8x128xf32>
    %c226 = arith.constant 226 : index
    %690 = memref.load %arg1[%c226] : memref<400xf32, #tpu.memory_space<smem>>
    %691 = vector.broadcast %690 : f32 to vector<8x128xf32>
    %692 = arith.addf %689, %691 : vector<8x128xf32>
    %c170 = arith.constant 170 : index
    %693 = memref.load %arg1[%c170] : memref<400xf32, #tpu.memory_space<smem>>
    %694 = vector.broadcast %693 : f32 to vector<8x128xf32>
    %695 = arith.mulf %406, %694 : vector<8x128xf32>
    %696 = arith.addf %692, %695 : vector<8x128xf32>
    %c178 = arith.constant 178 : index
    %697 = memref.load %arg1[%c178] : memref<400xf32, #tpu.memory_space<smem>>
    %698 = vector.broadcast %697 : f32 to vector<8x128xf32>
    %699 = arith.mulf %441, %698 : vector<8x128xf32>
    %700 = arith.addf %696, %699 : vector<8x128xf32>
    %c186 = arith.constant 186 : index
    %701 = memref.load %arg1[%c186] : memref<400xf32, #tpu.memory_space<smem>>
    %702 = vector.broadcast %701 : f32 to vector<8x128xf32>
    %703 = arith.mulf %476, %702 : vector<8x128xf32>
    %704 = arith.addf %700, %703 : vector<8x128xf32>
    %c194 = arith.constant 194 : index
    %705 = memref.load %arg1[%c194] : memref<400xf32, #tpu.memory_space<smem>>
    %706 = vector.broadcast %705 : f32 to vector<8x128xf32>
    %707 = arith.mulf %511, %706 : vector<8x128xf32>
    %708 = arith.addf %704, %707 : vector<8x128xf32>
    %c202 = arith.constant 202 : index
    %709 = memref.load %arg1[%c202] : memref<400xf32, #tpu.memory_space<smem>>
    %710 = vector.broadcast %709 : f32 to vector<8x128xf32>
    %711 = arith.mulf %546, %710 : vector<8x128xf32>
    %712 = arith.addf %708, %711 : vector<8x128xf32>
    %c210 = arith.constant 210 : index
    %713 = memref.load %arg1[%c210] : memref<400xf32, #tpu.memory_space<smem>>
    %714 = vector.broadcast %713 : f32 to vector<8x128xf32>
    %715 = arith.mulf %581, %714 : vector<8x128xf32>
    %716 = arith.addf %712, %715 : vector<8x128xf32>
    %c218 = arith.constant 218 : index
    %717 = memref.load %arg1[%c218] : memref<400xf32, #tpu.memory_space<smem>>
    %718 = vector.broadcast %717 : f32 to vector<8x128xf32>
    %719 = arith.mulf %616, %718 : vector<8x128xf32>
    %720 = arith.addf %716, %719 : vector<8x128xf32>
    %721 = math.tanh %720 : vector<8x128xf32>
    %c163 = arith.constant 163 : index
    %722 = memref.load %arg1[%c163] : memref<400xf32, #tpu.memory_space<smem>>
    %723 = vector.broadcast %722 : f32 to vector<8x128xf32>
    %724 = arith.mulf %371, %723 : vector<8x128xf32>
    %c227 = arith.constant 227 : index
    %725 = memref.load %arg1[%c227] : memref<400xf32, #tpu.memory_space<smem>>
    %726 = vector.broadcast %725 : f32 to vector<8x128xf32>
    %727 = arith.addf %724, %726 : vector<8x128xf32>
    %c171 = arith.constant 171 : index
    %728 = memref.load %arg1[%c171] : memref<400xf32, #tpu.memory_space<smem>>
    %729 = vector.broadcast %728 : f32 to vector<8x128xf32>
    %730 = arith.mulf %406, %729 : vector<8x128xf32>
    %731 = arith.addf %727, %730 : vector<8x128xf32>
    %c179 = arith.constant 179 : index
    %732 = memref.load %arg1[%c179] : memref<400xf32, #tpu.memory_space<smem>>
    %733 = vector.broadcast %732 : f32 to vector<8x128xf32>
    %734 = arith.mulf %441, %733 : vector<8x128xf32>
    %735 = arith.addf %731, %734 : vector<8x128xf32>
    %c187 = arith.constant 187 : index
    %736 = memref.load %arg1[%c187] : memref<400xf32, #tpu.memory_space<smem>>
    %737 = vector.broadcast %736 : f32 to vector<8x128xf32>
    %738 = arith.mulf %476, %737 : vector<8x128xf32>
    %739 = arith.addf %735, %738 : vector<8x128xf32>
    %c195 = arith.constant 195 : index
    %740 = memref.load %arg1[%c195] : memref<400xf32, #tpu.memory_space<smem>>
    %741 = vector.broadcast %740 : f32 to vector<8x128xf32>
    %742 = arith.mulf %511, %741 : vector<8x128xf32>
    %743 = arith.addf %739, %742 : vector<8x128xf32>
    %c203 = arith.constant 203 : index
    %744 = memref.load %arg1[%c203] : memref<400xf32, #tpu.memory_space<smem>>
    %745 = vector.broadcast %744 : f32 to vector<8x128xf32>
    %746 = arith.mulf %546, %745 : vector<8x128xf32>
    %747 = arith.addf %743, %746 : vector<8x128xf32>
    %c211 = arith.constant 211 : index
    %748 = memref.load %arg1[%c211] : memref<400xf32, #tpu.memory_space<smem>>
    %749 = vector.broadcast %748 : f32 to vector<8x128xf32>
    %750 = arith.mulf %581, %749 : vector<8x128xf32>
    %751 = arith.addf %747, %750 : vector<8x128xf32>
    %c219 = arith.constant 219 : index
    %752 = memref.load %arg1[%c219] : memref<400xf32, #tpu.memory_space<smem>>
    %753 = vector.broadcast %752 : f32 to vector<8x128xf32>
    %754 = arith.mulf %616, %753 : vector<8x128xf32>
    %755 = arith.addf %751, %754 : vector<8x128xf32>
    %756 = math.tanh %755 : vector<8x128xf32>
    %c164 = arith.constant 164 : index
    %757 = memref.load %arg1[%c164] : memref<400xf32, #tpu.memory_space<smem>>
    %758 = vector.broadcast %757 : f32 to vector<8x128xf32>
    %759 = arith.mulf %371, %758 : vector<8x128xf32>
    %c228 = arith.constant 228 : index
    %760 = memref.load %arg1[%c228] : memref<400xf32, #tpu.memory_space<smem>>
    %761 = vector.broadcast %760 : f32 to vector<8x128xf32>
    %762 = arith.addf %759, %761 : vector<8x128xf32>
    %c172 = arith.constant 172 : index
    %763 = memref.load %arg1[%c172] : memref<400xf32, #tpu.memory_space<smem>>
    %764 = vector.broadcast %763 : f32 to vector<8x128xf32>
    %765 = arith.mulf %406, %764 : vector<8x128xf32>
    %766 = arith.addf %762, %765 : vector<8x128xf32>
    %c180 = arith.constant 180 : index
    %767 = memref.load %arg1[%c180] : memref<400xf32, #tpu.memory_space<smem>>
    %768 = vector.broadcast %767 : f32 to vector<8x128xf32>
    %769 = arith.mulf %441, %768 : vector<8x128xf32>
    %770 = arith.addf %766, %769 : vector<8x128xf32>
    %c188 = arith.constant 188 : index
    %771 = memref.load %arg1[%c188] : memref<400xf32, #tpu.memory_space<smem>>
    %772 = vector.broadcast %771 : f32 to vector<8x128xf32>
    %773 = arith.mulf %476, %772 : vector<8x128xf32>
    %774 = arith.addf %770, %773 : vector<8x128xf32>
    %c196 = arith.constant 196 : index
    %775 = memref.load %arg1[%c196] : memref<400xf32, #tpu.memory_space<smem>>
    %776 = vector.broadcast %775 : f32 to vector<8x128xf32>
    %777 = arith.mulf %511, %776 : vector<8x128xf32>
    %778 = arith.addf %774, %777 : vector<8x128xf32>
    %c204 = arith.constant 204 : index
    %779 = memref.load %arg1[%c204] : memref<400xf32, #tpu.memory_space<smem>>
    %780 = vector.broadcast %779 : f32 to vector<8x128xf32>
    %781 = arith.mulf %546, %780 : vector<8x128xf32>
    %782 = arith.addf %778, %781 : vector<8x128xf32>
    %c212 = arith.constant 212 : index
    %783 = memref.load %arg1[%c212] : memref<400xf32, #tpu.memory_space<smem>>
    %784 = vector.broadcast %783 : f32 to vector<8x128xf32>
    %785 = arith.mulf %581, %784 : vector<8x128xf32>
    %786 = arith.addf %782, %785 : vector<8x128xf32>
    %c220 = arith.constant 220 : index
    %787 = memref.load %arg1[%c220] : memref<400xf32, #tpu.memory_space<smem>>
    %788 = vector.broadcast %787 : f32 to vector<8x128xf32>
    %789 = arith.mulf %616, %788 : vector<8x128xf32>
    %790 = arith.addf %786, %789 : vector<8x128xf32>
    %791 = math.tanh %790 : vector<8x128xf32>
    %c165 = arith.constant 165 : index
    %792 = memref.load %arg1[%c165] : memref<400xf32, #tpu.memory_space<smem>>
    %793 = vector.broadcast %792 : f32 to vector<8x128xf32>
    %794 = arith.mulf %371, %793 : vector<8x128xf32>
    %c229 = arith.constant 229 : index
    %795 = memref.load %arg1[%c229] : memref<400xf32, #tpu.memory_space<smem>>
    %796 = vector.broadcast %795 : f32 to vector<8x128xf32>
    %797 = arith.addf %794, %796 : vector<8x128xf32>
    %c173 = arith.constant 173 : index
    %798 = memref.load %arg1[%c173] : memref<400xf32, #tpu.memory_space<smem>>
    %799 = vector.broadcast %798 : f32 to vector<8x128xf32>
    %800 = arith.mulf %406, %799 : vector<8x128xf32>
    %801 = arith.addf %797, %800 : vector<8x128xf32>
    %c181 = arith.constant 181 : index
    %802 = memref.load %arg1[%c181] : memref<400xf32, #tpu.memory_space<smem>>
    %803 = vector.broadcast %802 : f32 to vector<8x128xf32>
    %804 = arith.mulf %441, %803 : vector<8x128xf32>
    %805 = arith.addf %801, %804 : vector<8x128xf32>
    %c189 = arith.constant 189 : index
    %806 = memref.load %arg1[%c189] : memref<400xf32, #tpu.memory_space<smem>>
    %807 = vector.broadcast %806 : f32 to vector<8x128xf32>
    %808 = arith.mulf %476, %807 : vector<8x128xf32>
    %809 = arith.addf %805, %808 : vector<8x128xf32>
    %c197 = arith.constant 197 : index
    %810 = memref.load %arg1[%c197] : memref<400xf32, #tpu.memory_space<smem>>
    %811 = vector.broadcast %810 : f32 to vector<8x128xf32>
    %812 = arith.mulf %511, %811 : vector<8x128xf32>
    %813 = arith.addf %809, %812 : vector<8x128xf32>
    %c205 = arith.constant 205 : index
    %814 = memref.load %arg1[%c205] : memref<400xf32, #tpu.memory_space<smem>>
    %815 = vector.broadcast %814 : f32 to vector<8x128xf32>
    %816 = arith.mulf %546, %815 : vector<8x128xf32>
    %817 = arith.addf %813, %816 : vector<8x128xf32>
    %c213 = arith.constant 213 : index
    %818 = memref.load %arg1[%c213] : memref<400xf32, #tpu.memory_space<smem>>
    %819 = vector.broadcast %818 : f32 to vector<8x128xf32>
    %820 = arith.mulf %581, %819 : vector<8x128xf32>
    %821 = arith.addf %817, %820 : vector<8x128xf32>
    %c221 = arith.constant 221 : index
    %822 = memref.load %arg1[%c221] : memref<400xf32, #tpu.memory_space<smem>>
    %823 = vector.broadcast %822 : f32 to vector<8x128xf32>
    %824 = arith.mulf %616, %823 : vector<8x128xf32>
    %825 = arith.addf %821, %824 : vector<8x128xf32>
    %826 = math.tanh %825 : vector<8x128xf32>
    %c166 = arith.constant 166 : index
    %827 = memref.load %arg1[%c166] : memref<400xf32, #tpu.memory_space<smem>>
    %828 = vector.broadcast %827 : f32 to vector<8x128xf32>
    %829 = arith.mulf %371, %828 : vector<8x128xf32>
    %c230 = arith.constant 230 : index
    %830 = memref.load %arg1[%c230] : memref<400xf32, #tpu.memory_space<smem>>
    %831 = vector.broadcast %830 : f32 to vector<8x128xf32>
    %832 = arith.addf %829, %831 : vector<8x128xf32>
    %c174 = arith.constant 174 : index
    %833 = memref.load %arg1[%c174] : memref<400xf32, #tpu.memory_space<smem>>
    %834 = vector.broadcast %833 : f32 to vector<8x128xf32>
    %835 = arith.mulf %406, %834 : vector<8x128xf32>
    %836 = arith.addf %832, %835 : vector<8x128xf32>
    %c182 = arith.constant 182 : index
    %837 = memref.load %arg1[%c182] : memref<400xf32, #tpu.memory_space<smem>>
    %838 = vector.broadcast %837 : f32 to vector<8x128xf32>
    %839 = arith.mulf %441, %838 : vector<8x128xf32>
    %840 = arith.addf %836, %839 : vector<8x128xf32>
    %c190 = arith.constant 190 : index
    %841 = memref.load %arg1[%c190] : memref<400xf32, #tpu.memory_space<smem>>
    %842 = vector.broadcast %841 : f32 to vector<8x128xf32>
    %843 = arith.mulf %476, %842 : vector<8x128xf32>
    %844 = arith.addf %840, %843 : vector<8x128xf32>
    %c198 = arith.constant 198 : index
    %845 = memref.load %arg1[%c198] : memref<400xf32, #tpu.memory_space<smem>>
    %846 = vector.broadcast %845 : f32 to vector<8x128xf32>
    %847 = arith.mulf %511, %846 : vector<8x128xf32>
    %848 = arith.addf %844, %847 : vector<8x128xf32>
    %c206 = arith.constant 206 : index
    %849 = memref.load %arg1[%c206] : memref<400xf32, #tpu.memory_space<smem>>
    %850 = vector.broadcast %849 : f32 to vector<8x128xf32>
    %851 = arith.mulf %546, %850 : vector<8x128xf32>
    %852 = arith.addf %848, %851 : vector<8x128xf32>
    %c214 = arith.constant 214 : index
    %853 = memref.load %arg1[%c214] : memref<400xf32, #tpu.memory_space<smem>>
    %854 = vector.broadcast %853 : f32 to vector<8x128xf32>
    %855 = arith.mulf %581, %854 : vector<8x128xf32>
    %856 = arith.addf %852, %855 : vector<8x128xf32>
    %c222 = arith.constant 222 : index
    %857 = memref.load %arg1[%c222] : memref<400xf32, #tpu.memory_space<smem>>
    %858 = vector.broadcast %857 : f32 to vector<8x128xf32>
    %859 = arith.mulf %616, %858 : vector<8x128xf32>
    %860 = arith.addf %856, %859 : vector<8x128xf32>
    %861 = math.tanh %860 : vector<8x128xf32>
    %c167 = arith.constant 167 : index
    %862 = memref.load %arg1[%c167] : memref<400xf32, #tpu.memory_space<smem>>
    %863 = vector.broadcast %862 : f32 to vector<8x128xf32>
    %864 = arith.mulf %371, %863 : vector<8x128xf32>
    %c231 = arith.constant 231 : index
    %865 = memref.load %arg1[%c231] : memref<400xf32, #tpu.memory_space<smem>>
    %866 = vector.broadcast %865 : f32 to vector<8x128xf32>
    %867 = arith.addf %864, %866 : vector<8x128xf32>
    %c175 = arith.constant 175 : index
    %868 = memref.load %arg1[%c175] : memref<400xf32, #tpu.memory_space<smem>>
    %869 = vector.broadcast %868 : f32 to vector<8x128xf32>
    %870 = arith.mulf %406, %869 : vector<8x128xf32>
    %871 = arith.addf %867, %870 : vector<8x128xf32>
    %c183 = arith.constant 183 : index
    %872 = memref.load %arg1[%c183] : memref<400xf32, #tpu.memory_space<smem>>
    %873 = vector.broadcast %872 : f32 to vector<8x128xf32>
    %874 = arith.mulf %441, %873 : vector<8x128xf32>
    %875 = arith.addf %871, %874 : vector<8x128xf32>
    %c191 = arith.constant 191 : index
    %876 = memref.load %arg1[%c191] : memref<400xf32, #tpu.memory_space<smem>>
    %877 = vector.broadcast %876 : f32 to vector<8x128xf32>
    %878 = arith.mulf %476, %877 : vector<8x128xf32>
    %879 = arith.addf %875, %878 : vector<8x128xf32>
    %c199 = arith.constant 199 : index
    %880 = memref.load %arg1[%c199] : memref<400xf32, #tpu.memory_space<smem>>
    %881 = vector.broadcast %880 : f32 to vector<8x128xf32>
    %882 = arith.mulf %511, %881 : vector<8x128xf32>
    %883 = arith.addf %879, %882 : vector<8x128xf32>
    %c207 = arith.constant 207 : index
    %884 = memref.load %arg1[%c207] : memref<400xf32, #tpu.memory_space<smem>>
    %885 = vector.broadcast %884 : f32 to vector<8x128xf32>
    %886 = arith.mulf %546, %885 : vector<8x128xf32>
    %887 = arith.addf %883, %886 : vector<8x128xf32>
    %c215 = arith.constant 215 : index
    %888 = memref.load %arg1[%c215] : memref<400xf32, #tpu.memory_space<smem>>
    %889 = vector.broadcast %888 : f32 to vector<8x128xf32>
    %890 = arith.mulf %581, %889 : vector<8x128xf32>
    %891 = arith.addf %887, %890 : vector<8x128xf32>
    %c223 = arith.constant 223 : index
    %892 = memref.load %arg1[%c223] : memref<400xf32, #tpu.memory_space<smem>>
    %893 = vector.broadcast %892 : f32 to vector<8x128xf32>
    %894 = arith.mulf %616, %893 : vector<8x128xf32>
    %895 = arith.addf %891, %894 : vector<8x128xf32>
    %896 = math.tanh %895 : vector<8x128xf32>
    %c232 = arith.constant 232 : index
    %897 = memref.load %arg1[%c232] : memref<400xf32, #tpu.memory_space<smem>>
    %898 = vector.broadcast %897 : f32 to vector<8x128xf32>
    %899 = arith.mulf %651, %898 : vector<8x128xf32>
    %c296 = arith.constant 296 : index
    %900 = memref.load %arg1[%c296] : memref<400xf32, #tpu.memory_space<smem>>
    %901 = vector.broadcast %900 : f32 to vector<8x128xf32>
    %902 = arith.addf %899, %901 : vector<8x128xf32>
    %c240 = arith.constant 240 : index
    %903 = memref.load %arg1[%c240] : memref<400xf32, #tpu.memory_space<smem>>
    %904 = vector.broadcast %903 : f32 to vector<8x128xf32>
    %905 = arith.mulf %686, %904 : vector<8x128xf32>
    %906 = arith.addf %902, %905 : vector<8x128xf32>
    %c248 = arith.constant 248 : index
    %907 = memref.load %arg1[%c248] : memref<400xf32, #tpu.memory_space<smem>>
    %908 = vector.broadcast %907 : f32 to vector<8x128xf32>
    %909 = arith.mulf %721, %908 : vector<8x128xf32>
    %910 = arith.addf %906, %909 : vector<8x128xf32>
    %c256 = arith.constant 256 : index
    %911 = memref.load %arg1[%c256] : memref<400xf32, #tpu.memory_space<smem>>
    %912 = vector.broadcast %911 : f32 to vector<8x128xf32>
    %913 = arith.mulf %756, %912 : vector<8x128xf32>
    %914 = arith.addf %910, %913 : vector<8x128xf32>
    %c264 = arith.constant 264 : index
    %915 = memref.load %arg1[%c264] : memref<400xf32, #tpu.memory_space<smem>>
    %916 = vector.broadcast %915 : f32 to vector<8x128xf32>
    %917 = arith.mulf %791, %916 : vector<8x128xf32>
    %918 = arith.addf %914, %917 : vector<8x128xf32>
    %c272 = arith.constant 272 : index
    %919 = memref.load %arg1[%c272] : memref<400xf32, #tpu.memory_space<smem>>
    %920 = vector.broadcast %919 : f32 to vector<8x128xf32>
    %921 = arith.mulf %826, %920 : vector<8x128xf32>
    %922 = arith.addf %918, %921 : vector<8x128xf32>
    %c280 = arith.constant 280 : index
    %923 = memref.load %arg1[%c280] : memref<400xf32, #tpu.memory_space<smem>>
    %924 = vector.broadcast %923 : f32 to vector<8x128xf32>
    %925 = arith.mulf %861, %924 : vector<8x128xf32>
    %926 = arith.addf %922, %925 : vector<8x128xf32>
    %c288 = arith.constant 288 : index
    %927 = memref.load %arg1[%c288] : memref<400xf32, #tpu.memory_space<smem>>
    %928 = vector.broadcast %927 : f32 to vector<8x128xf32>
    %929 = arith.mulf %896, %928 : vector<8x128xf32>
    %930 = arith.addf %926, %929 : vector<8x128xf32>
    %931 = math.tanh %930 : vector<8x128xf32>
    %c233 = arith.constant 233 : index
    %932 = memref.load %arg1[%c233] : memref<400xf32, #tpu.memory_space<smem>>
    %933 = vector.broadcast %932 : f32 to vector<8x128xf32>
    %934 = arith.mulf %651, %933 : vector<8x128xf32>
    %c297 = arith.constant 297 : index
    %935 = memref.load %arg1[%c297] : memref<400xf32, #tpu.memory_space<smem>>
    %936 = vector.broadcast %935 : f32 to vector<8x128xf32>
    %937 = arith.addf %934, %936 : vector<8x128xf32>
    %c241 = arith.constant 241 : index
    %938 = memref.load %arg1[%c241] : memref<400xf32, #tpu.memory_space<smem>>
    %939 = vector.broadcast %938 : f32 to vector<8x128xf32>
    %940 = arith.mulf %686, %939 : vector<8x128xf32>
    %941 = arith.addf %937, %940 : vector<8x128xf32>
    %c249 = arith.constant 249 : index
    %942 = memref.load %arg1[%c249] : memref<400xf32, #tpu.memory_space<smem>>
    %943 = vector.broadcast %942 : f32 to vector<8x128xf32>
    %944 = arith.mulf %721, %943 : vector<8x128xf32>
    %945 = arith.addf %941, %944 : vector<8x128xf32>
    %c257 = arith.constant 257 : index
    %946 = memref.load %arg1[%c257] : memref<400xf32, #tpu.memory_space<smem>>
    %947 = vector.broadcast %946 : f32 to vector<8x128xf32>
    %948 = arith.mulf %756, %947 : vector<8x128xf32>
    %949 = arith.addf %945, %948 : vector<8x128xf32>
    %c265 = arith.constant 265 : index
    %950 = memref.load %arg1[%c265] : memref<400xf32, #tpu.memory_space<smem>>
    %951 = vector.broadcast %950 : f32 to vector<8x128xf32>
    %952 = arith.mulf %791, %951 : vector<8x128xf32>
    %953 = arith.addf %949, %952 : vector<8x128xf32>
    %c273 = arith.constant 273 : index
    %954 = memref.load %arg1[%c273] : memref<400xf32, #tpu.memory_space<smem>>
    %955 = vector.broadcast %954 : f32 to vector<8x128xf32>
    %956 = arith.mulf %826, %955 : vector<8x128xf32>
    %957 = arith.addf %953, %956 : vector<8x128xf32>
    %c281 = arith.constant 281 : index
    %958 = memref.load %arg1[%c281] : memref<400xf32, #tpu.memory_space<smem>>
    %959 = vector.broadcast %958 : f32 to vector<8x128xf32>
    %960 = arith.mulf %861, %959 : vector<8x128xf32>
    %961 = arith.addf %957, %960 : vector<8x128xf32>
    %c289 = arith.constant 289 : index
    %962 = memref.load %arg1[%c289] : memref<400xf32, #tpu.memory_space<smem>>
    %963 = vector.broadcast %962 : f32 to vector<8x128xf32>
    %964 = arith.mulf %896, %963 : vector<8x128xf32>
    %965 = arith.addf %961, %964 : vector<8x128xf32>
    %966 = math.tanh %965 : vector<8x128xf32>
    %c234 = arith.constant 234 : index
    %967 = memref.load %arg1[%c234] : memref<400xf32, #tpu.memory_space<smem>>
    %968 = vector.broadcast %967 : f32 to vector<8x128xf32>
    %969 = arith.mulf %651, %968 : vector<8x128xf32>
    %c298 = arith.constant 298 : index
    %970 = memref.load %arg1[%c298] : memref<400xf32, #tpu.memory_space<smem>>
    %971 = vector.broadcast %970 : f32 to vector<8x128xf32>
    %972 = arith.addf %969, %971 : vector<8x128xf32>
    %c242 = arith.constant 242 : index
    %973 = memref.load %arg1[%c242] : memref<400xf32, #tpu.memory_space<smem>>
    %974 = vector.broadcast %973 : f32 to vector<8x128xf32>
    %975 = arith.mulf %686, %974 : vector<8x128xf32>
    %976 = arith.addf %972, %975 : vector<8x128xf32>
    %c250 = arith.constant 250 : index
    %977 = memref.load %arg1[%c250] : memref<400xf32, #tpu.memory_space<smem>>
    %978 = vector.broadcast %977 : f32 to vector<8x128xf32>
    %979 = arith.mulf %721, %978 : vector<8x128xf32>
    %980 = arith.addf %976, %979 : vector<8x128xf32>
    %c258 = arith.constant 258 : index
    %981 = memref.load %arg1[%c258] : memref<400xf32, #tpu.memory_space<smem>>
    %982 = vector.broadcast %981 : f32 to vector<8x128xf32>
    %983 = arith.mulf %756, %982 : vector<8x128xf32>
    %984 = arith.addf %980, %983 : vector<8x128xf32>
    %c266 = arith.constant 266 : index
    %985 = memref.load %arg1[%c266] : memref<400xf32, #tpu.memory_space<smem>>
    %986 = vector.broadcast %985 : f32 to vector<8x128xf32>
    %987 = arith.mulf %791, %986 : vector<8x128xf32>
    %988 = arith.addf %984, %987 : vector<8x128xf32>
    %c274 = arith.constant 274 : index
    %989 = memref.load %arg1[%c274] : memref<400xf32, #tpu.memory_space<smem>>
    %990 = vector.broadcast %989 : f32 to vector<8x128xf32>
    %991 = arith.mulf %826, %990 : vector<8x128xf32>
    %992 = arith.addf %988, %991 : vector<8x128xf32>
    %c282 = arith.constant 282 : index
    %993 = memref.load %arg1[%c282] : memref<400xf32, #tpu.memory_space<smem>>
    %994 = vector.broadcast %993 : f32 to vector<8x128xf32>
    %995 = arith.mulf %861, %994 : vector<8x128xf32>
    %996 = arith.addf %992, %995 : vector<8x128xf32>
    %c290 = arith.constant 290 : index
    %997 = memref.load %arg1[%c290] : memref<400xf32, #tpu.memory_space<smem>>
    %998 = vector.broadcast %997 : f32 to vector<8x128xf32>
    %999 = arith.mulf %896, %998 : vector<8x128xf32>
    %1000 = arith.addf %996, %999 : vector<8x128xf32>
    %1001 = math.tanh %1000 : vector<8x128xf32>
    %c235 = arith.constant 235 : index
    %1002 = memref.load %arg1[%c235] : memref<400xf32, #tpu.memory_space<smem>>
    %1003 = vector.broadcast %1002 : f32 to vector<8x128xf32>
    %1004 = arith.mulf %651, %1003 : vector<8x128xf32>
    %c299 = arith.constant 299 : index
    %1005 = memref.load %arg1[%c299] : memref<400xf32, #tpu.memory_space<smem>>
    %1006 = vector.broadcast %1005 : f32 to vector<8x128xf32>
    %1007 = arith.addf %1004, %1006 : vector<8x128xf32>
    %c243 = arith.constant 243 : index
    %1008 = memref.load %arg1[%c243] : memref<400xf32, #tpu.memory_space<smem>>
    %1009 = vector.broadcast %1008 : f32 to vector<8x128xf32>
    %1010 = arith.mulf %686, %1009 : vector<8x128xf32>
    %1011 = arith.addf %1007, %1010 : vector<8x128xf32>
    %c251 = arith.constant 251 : index
    %1012 = memref.load %arg1[%c251] : memref<400xf32, #tpu.memory_space<smem>>
    %1013 = vector.broadcast %1012 : f32 to vector<8x128xf32>
    %1014 = arith.mulf %721, %1013 : vector<8x128xf32>
    %1015 = arith.addf %1011, %1014 : vector<8x128xf32>
    %c259 = arith.constant 259 : index
    %1016 = memref.load %arg1[%c259] : memref<400xf32, #tpu.memory_space<smem>>
    %1017 = vector.broadcast %1016 : f32 to vector<8x128xf32>
    %1018 = arith.mulf %756, %1017 : vector<8x128xf32>
    %1019 = arith.addf %1015, %1018 : vector<8x128xf32>
    %c267 = arith.constant 267 : index
    %1020 = memref.load %arg1[%c267] : memref<400xf32, #tpu.memory_space<smem>>
    %1021 = vector.broadcast %1020 : f32 to vector<8x128xf32>
    %1022 = arith.mulf %791, %1021 : vector<8x128xf32>
    %1023 = arith.addf %1019, %1022 : vector<8x128xf32>
    %c275 = arith.constant 275 : index
    %1024 = memref.load %arg1[%c275] : memref<400xf32, #tpu.memory_space<smem>>
    %1025 = vector.broadcast %1024 : f32 to vector<8x128xf32>
    %1026 = arith.mulf %826, %1025 : vector<8x128xf32>
    %1027 = arith.addf %1023, %1026 : vector<8x128xf32>
    %c283 = arith.constant 283 : index
    %1028 = memref.load %arg1[%c283] : memref<400xf32, #tpu.memory_space<smem>>
    %1029 = vector.broadcast %1028 : f32 to vector<8x128xf32>
    %1030 = arith.mulf %861, %1029 : vector<8x128xf32>
    %1031 = arith.addf %1027, %1030 : vector<8x128xf32>
    %c291 = arith.constant 291 : index
    %1032 = memref.load %arg1[%c291] : memref<400xf32, #tpu.memory_space<smem>>
    %1033 = vector.broadcast %1032 : f32 to vector<8x128xf32>
    %1034 = arith.mulf %896, %1033 : vector<8x128xf32>
    %1035 = arith.addf %1031, %1034 : vector<8x128xf32>
    %1036 = math.tanh %1035 : vector<8x128xf32>
    %c236 = arith.constant 236 : index
    %1037 = memref.load %arg1[%c236] : memref<400xf32, #tpu.memory_space<smem>>
    %1038 = vector.broadcast %1037 : f32 to vector<8x128xf32>
    %1039 = arith.mulf %651, %1038 : vector<8x128xf32>
    %c300 = arith.constant 300 : index
    %1040 = memref.load %arg1[%c300] : memref<400xf32, #tpu.memory_space<smem>>
    %1041 = vector.broadcast %1040 : f32 to vector<8x128xf32>
    %1042 = arith.addf %1039, %1041 : vector<8x128xf32>
    %c244 = arith.constant 244 : index
    %1043 = memref.load %arg1[%c244] : memref<400xf32, #tpu.memory_space<smem>>
    %1044 = vector.broadcast %1043 : f32 to vector<8x128xf32>
    %1045 = arith.mulf %686, %1044 : vector<8x128xf32>
    %1046 = arith.addf %1042, %1045 : vector<8x128xf32>
    %c252 = arith.constant 252 : index
    %1047 = memref.load %arg1[%c252] : memref<400xf32, #tpu.memory_space<smem>>
    %1048 = vector.broadcast %1047 : f32 to vector<8x128xf32>
    %1049 = arith.mulf %721, %1048 : vector<8x128xf32>
    %1050 = arith.addf %1046, %1049 : vector<8x128xf32>
    %c260 = arith.constant 260 : index
    %1051 = memref.load %arg1[%c260] : memref<400xf32, #tpu.memory_space<smem>>
    %1052 = vector.broadcast %1051 : f32 to vector<8x128xf32>
    %1053 = arith.mulf %756, %1052 : vector<8x128xf32>
    %1054 = arith.addf %1050, %1053 : vector<8x128xf32>
    %c268 = arith.constant 268 : index
    %1055 = memref.load %arg1[%c268] : memref<400xf32, #tpu.memory_space<smem>>
    %1056 = vector.broadcast %1055 : f32 to vector<8x128xf32>
    %1057 = arith.mulf %791, %1056 : vector<8x128xf32>
    %1058 = arith.addf %1054, %1057 : vector<8x128xf32>
    %c276 = arith.constant 276 : index
    %1059 = memref.load %arg1[%c276] : memref<400xf32, #tpu.memory_space<smem>>
    %1060 = vector.broadcast %1059 : f32 to vector<8x128xf32>
    %1061 = arith.mulf %826, %1060 : vector<8x128xf32>
    %1062 = arith.addf %1058, %1061 : vector<8x128xf32>
    %c284 = arith.constant 284 : index
    %1063 = memref.load %arg1[%c284] : memref<400xf32, #tpu.memory_space<smem>>
    %1064 = vector.broadcast %1063 : f32 to vector<8x128xf32>
    %1065 = arith.mulf %861, %1064 : vector<8x128xf32>
    %1066 = arith.addf %1062, %1065 : vector<8x128xf32>
    %c292 = arith.constant 292 : index
    %1067 = memref.load %arg1[%c292] : memref<400xf32, #tpu.memory_space<smem>>
    %1068 = vector.broadcast %1067 : f32 to vector<8x128xf32>
    %1069 = arith.mulf %896, %1068 : vector<8x128xf32>
    %1070 = arith.addf %1066, %1069 : vector<8x128xf32>
    %1071 = math.tanh %1070 : vector<8x128xf32>
    %c237 = arith.constant 237 : index
    %1072 = memref.load %arg1[%c237] : memref<400xf32, #tpu.memory_space<smem>>
    %1073 = vector.broadcast %1072 : f32 to vector<8x128xf32>
    %1074 = arith.mulf %651, %1073 : vector<8x128xf32>
    %c301 = arith.constant 301 : index
    %1075 = memref.load %arg1[%c301] : memref<400xf32, #tpu.memory_space<smem>>
    %1076 = vector.broadcast %1075 : f32 to vector<8x128xf32>
    %1077 = arith.addf %1074, %1076 : vector<8x128xf32>
    %c245 = arith.constant 245 : index
    %1078 = memref.load %arg1[%c245] : memref<400xf32, #tpu.memory_space<smem>>
    %1079 = vector.broadcast %1078 : f32 to vector<8x128xf32>
    %1080 = arith.mulf %686, %1079 : vector<8x128xf32>
    %1081 = arith.addf %1077, %1080 : vector<8x128xf32>
    %c253 = arith.constant 253 : index
    %1082 = memref.load %arg1[%c253] : memref<400xf32, #tpu.memory_space<smem>>
    %1083 = vector.broadcast %1082 : f32 to vector<8x128xf32>
    %1084 = arith.mulf %721, %1083 : vector<8x128xf32>
    %1085 = arith.addf %1081, %1084 : vector<8x128xf32>
    %c261 = arith.constant 261 : index
    %1086 = memref.load %arg1[%c261] : memref<400xf32, #tpu.memory_space<smem>>
    %1087 = vector.broadcast %1086 : f32 to vector<8x128xf32>
    %1088 = arith.mulf %756, %1087 : vector<8x128xf32>
    %1089 = arith.addf %1085, %1088 : vector<8x128xf32>
    %c269 = arith.constant 269 : index
    %1090 = memref.load %arg1[%c269] : memref<400xf32, #tpu.memory_space<smem>>
    %1091 = vector.broadcast %1090 : f32 to vector<8x128xf32>
    %1092 = arith.mulf %791, %1091 : vector<8x128xf32>
    %1093 = arith.addf %1089, %1092 : vector<8x128xf32>
    %c277 = arith.constant 277 : index
    %1094 = memref.load %arg1[%c277] : memref<400xf32, #tpu.memory_space<smem>>
    %1095 = vector.broadcast %1094 : f32 to vector<8x128xf32>
    %1096 = arith.mulf %826, %1095 : vector<8x128xf32>
    %1097 = arith.addf %1093, %1096 : vector<8x128xf32>
    %c285 = arith.constant 285 : index
    %1098 = memref.load %arg1[%c285] : memref<400xf32, #tpu.memory_space<smem>>
    %1099 = vector.broadcast %1098 : f32 to vector<8x128xf32>
    %1100 = arith.mulf %861, %1099 : vector<8x128xf32>
    %1101 = arith.addf %1097, %1100 : vector<8x128xf32>
    %c293 = arith.constant 293 : index
    %1102 = memref.load %arg1[%c293] : memref<400xf32, #tpu.memory_space<smem>>
    %1103 = vector.broadcast %1102 : f32 to vector<8x128xf32>
    %1104 = arith.mulf %896, %1103 : vector<8x128xf32>
    %1105 = arith.addf %1101, %1104 : vector<8x128xf32>
    %1106 = math.tanh %1105 : vector<8x128xf32>
    %c238 = arith.constant 238 : index
    %1107 = memref.load %arg1[%c238] : memref<400xf32, #tpu.memory_space<smem>>
    %1108 = vector.broadcast %1107 : f32 to vector<8x128xf32>
    %1109 = arith.mulf %651, %1108 : vector<8x128xf32>
    %c302 = arith.constant 302 : index
    %1110 = memref.load %arg1[%c302] : memref<400xf32, #tpu.memory_space<smem>>
    %1111 = vector.broadcast %1110 : f32 to vector<8x128xf32>
    %1112 = arith.addf %1109, %1111 : vector<8x128xf32>
    %c246 = arith.constant 246 : index
    %1113 = memref.load %arg1[%c246] : memref<400xf32, #tpu.memory_space<smem>>
    %1114 = vector.broadcast %1113 : f32 to vector<8x128xf32>
    %1115 = arith.mulf %686, %1114 : vector<8x128xf32>
    %1116 = arith.addf %1112, %1115 : vector<8x128xf32>
    %c254 = arith.constant 254 : index
    %1117 = memref.load %arg1[%c254] : memref<400xf32, #tpu.memory_space<smem>>
    %1118 = vector.broadcast %1117 : f32 to vector<8x128xf32>
    %1119 = arith.mulf %721, %1118 : vector<8x128xf32>
    %1120 = arith.addf %1116, %1119 : vector<8x128xf32>
    %c262 = arith.constant 262 : index
    %1121 = memref.load %arg1[%c262] : memref<400xf32, #tpu.memory_space<smem>>
    %1122 = vector.broadcast %1121 : f32 to vector<8x128xf32>
    %1123 = arith.mulf %756, %1122 : vector<8x128xf32>
    %1124 = arith.addf %1120, %1123 : vector<8x128xf32>
    %c270 = arith.constant 270 : index
    %1125 = memref.load %arg1[%c270] : memref<400xf32, #tpu.memory_space<smem>>
    %1126 = vector.broadcast %1125 : f32 to vector<8x128xf32>
    %1127 = arith.mulf %791, %1126 : vector<8x128xf32>
    %1128 = arith.addf %1124, %1127 : vector<8x128xf32>
    %c278 = arith.constant 278 : index
    %1129 = memref.load %arg1[%c278] : memref<400xf32, #tpu.memory_space<smem>>
    %1130 = vector.broadcast %1129 : f32 to vector<8x128xf32>
    %1131 = arith.mulf %826, %1130 : vector<8x128xf32>
    %1132 = arith.addf %1128, %1131 : vector<8x128xf32>
    %c286 = arith.constant 286 : index
    %1133 = memref.load %arg1[%c286] : memref<400xf32, #tpu.memory_space<smem>>
    %1134 = vector.broadcast %1133 : f32 to vector<8x128xf32>
    %1135 = arith.mulf %861, %1134 : vector<8x128xf32>
    %1136 = arith.addf %1132, %1135 : vector<8x128xf32>
    %c294 = arith.constant 294 : index
    %1137 = memref.load %arg1[%c294] : memref<400xf32, #tpu.memory_space<smem>>
    %1138 = vector.broadcast %1137 : f32 to vector<8x128xf32>
    %1139 = arith.mulf %896, %1138 : vector<8x128xf32>
    %1140 = arith.addf %1136, %1139 : vector<8x128xf32>
    %1141 = math.tanh %1140 : vector<8x128xf32>
    %c239 = arith.constant 239 : index
    %1142 = memref.load %arg1[%c239] : memref<400xf32, #tpu.memory_space<smem>>
    %1143 = vector.broadcast %1142 : f32 to vector<8x128xf32>
    %1144 = arith.mulf %651, %1143 : vector<8x128xf32>
    %c303 = arith.constant 303 : index
    %1145 = memref.load %arg1[%c303] : memref<400xf32, #tpu.memory_space<smem>>
    %1146 = vector.broadcast %1145 : f32 to vector<8x128xf32>
    %1147 = arith.addf %1144, %1146 : vector<8x128xf32>
    %c247 = arith.constant 247 : index
    %1148 = memref.load %arg1[%c247] : memref<400xf32, #tpu.memory_space<smem>>
    %1149 = vector.broadcast %1148 : f32 to vector<8x128xf32>
    %1150 = arith.mulf %686, %1149 : vector<8x128xf32>
    %1151 = arith.addf %1147, %1150 : vector<8x128xf32>
    %c255 = arith.constant 255 : index
    %1152 = memref.load %arg1[%c255] : memref<400xf32, #tpu.memory_space<smem>>
    %1153 = vector.broadcast %1152 : f32 to vector<8x128xf32>
    %1154 = arith.mulf %721, %1153 : vector<8x128xf32>
    %1155 = arith.addf %1151, %1154 : vector<8x128xf32>
    %c263 = arith.constant 263 : index
    %1156 = memref.load %arg1[%c263] : memref<400xf32, #tpu.memory_space<smem>>
    %1157 = vector.broadcast %1156 : f32 to vector<8x128xf32>
    %1158 = arith.mulf %756, %1157 : vector<8x128xf32>
    %1159 = arith.addf %1155, %1158 : vector<8x128xf32>
    %c271 = arith.constant 271 : index
    %1160 = memref.load %arg1[%c271] : memref<400xf32, #tpu.memory_space<smem>>
    %1161 = vector.broadcast %1160 : f32 to vector<8x128xf32>
    %1162 = arith.mulf %791, %1161 : vector<8x128xf32>
    %1163 = arith.addf %1159, %1162 : vector<8x128xf32>
    %c279 = arith.constant 279 : index
    %1164 = memref.load %arg1[%c279] : memref<400xf32, #tpu.memory_space<smem>>
    %1165 = vector.broadcast %1164 : f32 to vector<8x128xf32>
    %1166 = arith.mulf %826, %1165 : vector<8x128xf32>
    %1167 = arith.addf %1163, %1166 : vector<8x128xf32>
    %c287 = arith.constant 287 : index
    %1168 = memref.load %arg1[%c287] : memref<400xf32, #tpu.memory_space<smem>>
    %1169 = vector.broadcast %1168 : f32 to vector<8x128xf32>
    %1170 = arith.mulf %861, %1169 : vector<8x128xf32>
    %1171 = arith.addf %1167, %1170 : vector<8x128xf32>
    %c295 = arith.constant 295 : index
    %1172 = memref.load %arg1[%c295] : memref<400xf32, #tpu.memory_space<smem>>
    %1173 = vector.broadcast %1172 : f32 to vector<8x128xf32>
    %1174 = arith.mulf %896, %1173 : vector<8x128xf32>
    %1175 = arith.addf %1171, %1174 : vector<8x128xf32>
    %1176 = math.tanh %1175 : vector<8x128xf32>
    %c304 = arith.constant 304 : index
    %1177 = memref.load %arg1[%c304] : memref<400xf32, #tpu.memory_space<smem>>
    %1178 = vector.broadcast %1177 : f32 to vector<8x128xf32>
    %1179 = arith.mulf %931, %1178 : vector<8x128xf32>
    %c368 = arith.constant 368 : index
    %1180 = memref.load %arg1[%c368] : memref<400xf32, #tpu.memory_space<smem>>
    %1181 = vector.broadcast %1180 : f32 to vector<8x128xf32>
    %1182 = arith.addf %1179, %1181 : vector<8x128xf32>
    %c312 = arith.constant 312 : index
    %1183 = memref.load %arg1[%c312] : memref<400xf32, #tpu.memory_space<smem>>
    %1184 = vector.broadcast %1183 : f32 to vector<8x128xf32>
    %1185 = arith.mulf %966, %1184 : vector<8x128xf32>
    %1186 = arith.addf %1182, %1185 : vector<8x128xf32>
    %c320 = arith.constant 320 : index
    %1187 = memref.load %arg1[%c320] : memref<400xf32, #tpu.memory_space<smem>>
    %1188 = vector.broadcast %1187 : f32 to vector<8x128xf32>
    %1189 = arith.mulf %1001, %1188 : vector<8x128xf32>
    %1190 = arith.addf %1186, %1189 : vector<8x128xf32>
    %c328 = arith.constant 328 : index
    %1191 = memref.load %arg1[%c328] : memref<400xf32, #tpu.memory_space<smem>>
    %1192 = vector.broadcast %1191 : f32 to vector<8x128xf32>
    %1193 = arith.mulf %1036, %1192 : vector<8x128xf32>
    %1194 = arith.addf %1190, %1193 : vector<8x128xf32>
    %c336 = arith.constant 336 : index
    %1195 = memref.load %arg1[%c336] : memref<400xf32, #tpu.memory_space<smem>>
    %1196 = vector.broadcast %1195 : f32 to vector<8x128xf32>
    %1197 = arith.mulf %1071, %1196 : vector<8x128xf32>
    %1198 = arith.addf %1194, %1197 : vector<8x128xf32>
    %c344 = arith.constant 344 : index
    %1199 = memref.load %arg1[%c344] : memref<400xf32, #tpu.memory_space<smem>>
    %1200 = vector.broadcast %1199 : f32 to vector<8x128xf32>
    %1201 = arith.mulf %1106, %1200 : vector<8x128xf32>
    %1202 = arith.addf %1198, %1201 : vector<8x128xf32>
    %c352 = arith.constant 352 : index
    %1203 = memref.load %arg1[%c352] : memref<400xf32, #tpu.memory_space<smem>>
    %1204 = vector.broadcast %1203 : f32 to vector<8x128xf32>
    %1205 = arith.mulf %1141, %1204 : vector<8x128xf32>
    %1206 = arith.addf %1202, %1205 : vector<8x128xf32>
    %c360 = arith.constant 360 : index
    %1207 = memref.load %arg1[%c360] : memref<400xf32, #tpu.memory_space<smem>>
    %1208 = vector.broadcast %1207 : f32 to vector<8x128xf32>
    %1209 = arith.mulf %1176, %1208 : vector<8x128xf32>
    %1210 = arith.addf %1206, %1209 : vector<8x128xf32>
    %1211 = math.tanh %1210 : vector<8x128xf32>
    %c305 = arith.constant 305 : index
    %1212 = memref.load %arg1[%c305] : memref<400xf32, #tpu.memory_space<smem>>
    %1213 = vector.broadcast %1212 : f32 to vector<8x128xf32>
    %1214 = arith.mulf %931, %1213 : vector<8x128xf32>
    %c369 = arith.constant 369 : index
    %1215 = memref.load %arg1[%c369] : memref<400xf32, #tpu.memory_space<smem>>
    %1216 = vector.broadcast %1215 : f32 to vector<8x128xf32>
    %1217 = arith.addf %1214, %1216 : vector<8x128xf32>
    %c313 = arith.constant 313 : index
    %1218 = memref.load %arg1[%c313] : memref<400xf32, #tpu.memory_space<smem>>
    %1219 = vector.broadcast %1218 : f32 to vector<8x128xf32>
    %1220 = arith.mulf %966, %1219 : vector<8x128xf32>
    %1221 = arith.addf %1217, %1220 : vector<8x128xf32>
    %c321 = arith.constant 321 : index
    %1222 = memref.load %arg1[%c321] : memref<400xf32, #tpu.memory_space<smem>>
    %1223 = vector.broadcast %1222 : f32 to vector<8x128xf32>
    %1224 = arith.mulf %1001, %1223 : vector<8x128xf32>
    %1225 = arith.addf %1221, %1224 : vector<8x128xf32>
    %c329 = arith.constant 329 : index
    %1226 = memref.load %arg1[%c329] : memref<400xf32, #tpu.memory_space<smem>>
    %1227 = vector.broadcast %1226 : f32 to vector<8x128xf32>
    %1228 = arith.mulf %1036, %1227 : vector<8x128xf32>
    %1229 = arith.addf %1225, %1228 : vector<8x128xf32>
    %c337 = arith.constant 337 : index
    %1230 = memref.load %arg1[%c337] : memref<400xf32, #tpu.memory_space<smem>>
    %1231 = vector.broadcast %1230 : f32 to vector<8x128xf32>
    %1232 = arith.mulf %1071, %1231 : vector<8x128xf32>
    %1233 = arith.addf %1229, %1232 : vector<8x128xf32>
    %c345 = arith.constant 345 : index
    %1234 = memref.load %arg1[%c345] : memref<400xf32, #tpu.memory_space<smem>>
    %1235 = vector.broadcast %1234 : f32 to vector<8x128xf32>
    %1236 = arith.mulf %1106, %1235 : vector<8x128xf32>
    %1237 = arith.addf %1233, %1236 : vector<8x128xf32>
    %c353 = arith.constant 353 : index
    %1238 = memref.load %arg1[%c353] : memref<400xf32, #tpu.memory_space<smem>>
    %1239 = vector.broadcast %1238 : f32 to vector<8x128xf32>
    %1240 = arith.mulf %1141, %1239 : vector<8x128xf32>
    %1241 = arith.addf %1237, %1240 : vector<8x128xf32>
    %c361 = arith.constant 361 : index
    %1242 = memref.load %arg1[%c361] : memref<400xf32, #tpu.memory_space<smem>>
    %1243 = vector.broadcast %1242 : f32 to vector<8x128xf32>
    %1244 = arith.mulf %1176, %1243 : vector<8x128xf32>
    %1245 = arith.addf %1241, %1244 : vector<8x128xf32>
    %1246 = math.tanh %1245 : vector<8x128xf32>
    %c306 = arith.constant 306 : index
    %1247 = memref.load %arg1[%c306] : memref<400xf32, #tpu.memory_space<smem>>
    %1248 = vector.broadcast %1247 : f32 to vector<8x128xf32>
    %1249 = arith.mulf %931, %1248 : vector<8x128xf32>
    %c370 = arith.constant 370 : index
    %1250 = memref.load %arg1[%c370] : memref<400xf32, #tpu.memory_space<smem>>
    %1251 = vector.broadcast %1250 : f32 to vector<8x128xf32>
    %1252 = arith.addf %1249, %1251 : vector<8x128xf32>
    %c314 = arith.constant 314 : index
    %1253 = memref.load %arg1[%c314] : memref<400xf32, #tpu.memory_space<smem>>
    %1254 = vector.broadcast %1253 : f32 to vector<8x128xf32>
    %1255 = arith.mulf %966, %1254 : vector<8x128xf32>
    %1256 = arith.addf %1252, %1255 : vector<8x128xf32>
    %c322 = arith.constant 322 : index
    %1257 = memref.load %arg1[%c322] : memref<400xf32, #tpu.memory_space<smem>>
    %1258 = vector.broadcast %1257 : f32 to vector<8x128xf32>
    %1259 = arith.mulf %1001, %1258 : vector<8x128xf32>
    %1260 = arith.addf %1256, %1259 : vector<8x128xf32>
    %c330 = arith.constant 330 : index
    %1261 = memref.load %arg1[%c330] : memref<400xf32, #tpu.memory_space<smem>>
    %1262 = vector.broadcast %1261 : f32 to vector<8x128xf32>
    %1263 = arith.mulf %1036, %1262 : vector<8x128xf32>
    %1264 = arith.addf %1260, %1263 : vector<8x128xf32>
    %c338 = arith.constant 338 : index
    %1265 = memref.load %arg1[%c338] : memref<400xf32, #tpu.memory_space<smem>>
    %1266 = vector.broadcast %1265 : f32 to vector<8x128xf32>
    %1267 = arith.mulf %1071, %1266 : vector<8x128xf32>
    %1268 = arith.addf %1264, %1267 : vector<8x128xf32>
    %c346 = arith.constant 346 : index
    %1269 = memref.load %arg1[%c346] : memref<400xf32, #tpu.memory_space<smem>>
    %1270 = vector.broadcast %1269 : f32 to vector<8x128xf32>
    %1271 = arith.mulf %1106, %1270 : vector<8x128xf32>
    %1272 = arith.addf %1268, %1271 : vector<8x128xf32>
    %c354 = arith.constant 354 : index
    %1273 = memref.load %arg1[%c354] : memref<400xf32, #tpu.memory_space<smem>>
    %1274 = vector.broadcast %1273 : f32 to vector<8x128xf32>
    %1275 = arith.mulf %1141, %1274 : vector<8x128xf32>
    %1276 = arith.addf %1272, %1275 : vector<8x128xf32>
    %c362 = arith.constant 362 : index
    %1277 = memref.load %arg1[%c362] : memref<400xf32, #tpu.memory_space<smem>>
    %1278 = vector.broadcast %1277 : f32 to vector<8x128xf32>
    %1279 = arith.mulf %1176, %1278 : vector<8x128xf32>
    %1280 = arith.addf %1276, %1279 : vector<8x128xf32>
    %1281 = math.tanh %1280 : vector<8x128xf32>
    %c307 = arith.constant 307 : index
    %1282 = memref.load %arg1[%c307] : memref<400xf32, #tpu.memory_space<smem>>
    %1283 = vector.broadcast %1282 : f32 to vector<8x128xf32>
    %1284 = arith.mulf %931, %1283 : vector<8x128xf32>
    %c371 = arith.constant 371 : index
    %1285 = memref.load %arg1[%c371] : memref<400xf32, #tpu.memory_space<smem>>
    %1286 = vector.broadcast %1285 : f32 to vector<8x128xf32>
    %1287 = arith.addf %1284, %1286 : vector<8x128xf32>
    %c315 = arith.constant 315 : index
    %1288 = memref.load %arg1[%c315] : memref<400xf32, #tpu.memory_space<smem>>
    %1289 = vector.broadcast %1288 : f32 to vector<8x128xf32>
    %1290 = arith.mulf %966, %1289 : vector<8x128xf32>
    %1291 = arith.addf %1287, %1290 : vector<8x128xf32>
    %c323 = arith.constant 323 : index
    %1292 = memref.load %arg1[%c323] : memref<400xf32, #tpu.memory_space<smem>>
    %1293 = vector.broadcast %1292 : f32 to vector<8x128xf32>
    %1294 = arith.mulf %1001, %1293 : vector<8x128xf32>
    %1295 = arith.addf %1291, %1294 : vector<8x128xf32>
    %c331 = arith.constant 331 : index
    %1296 = memref.load %arg1[%c331] : memref<400xf32, #tpu.memory_space<smem>>
    %1297 = vector.broadcast %1296 : f32 to vector<8x128xf32>
    %1298 = arith.mulf %1036, %1297 : vector<8x128xf32>
    %1299 = arith.addf %1295, %1298 : vector<8x128xf32>
    %c339 = arith.constant 339 : index
    %1300 = memref.load %arg1[%c339] : memref<400xf32, #tpu.memory_space<smem>>
    %1301 = vector.broadcast %1300 : f32 to vector<8x128xf32>
    %1302 = arith.mulf %1071, %1301 : vector<8x128xf32>
    %1303 = arith.addf %1299, %1302 : vector<8x128xf32>
    %c347 = arith.constant 347 : index
    %1304 = memref.load %arg1[%c347] : memref<400xf32, #tpu.memory_space<smem>>
    %1305 = vector.broadcast %1304 : f32 to vector<8x128xf32>
    %1306 = arith.mulf %1106, %1305 : vector<8x128xf32>
    %1307 = arith.addf %1303, %1306 : vector<8x128xf32>
    %c355 = arith.constant 355 : index
    %1308 = memref.load %arg1[%c355] : memref<400xf32, #tpu.memory_space<smem>>
    %1309 = vector.broadcast %1308 : f32 to vector<8x128xf32>
    %1310 = arith.mulf %1141, %1309 : vector<8x128xf32>
    %1311 = arith.addf %1307, %1310 : vector<8x128xf32>
    %c363 = arith.constant 363 : index
    %1312 = memref.load %arg1[%c363] : memref<400xf32, #tpu.memory_space<smem>>
    %1313 = vector.broadcast %1312 : f32 to vector<8x128xf32>
    %1314 = arith.mulf %1176, %1313 : vector<8x128xf32>
    %1315 = arith.addf %1311, %1314 : vector<8x128xf32>
    %1316 = math.tanh %1315 : vector<8x128xf32>
    %c308 = arith.constant 308 : index
    %1317 = memref.load %arg1[%c308] : memref<400xf32, #tpu.memory_space<smem>>
    %1318 = vector.broadcast %1317 : f32 to vector<8x128xf32>
    %1319 = arith.mulf %931, %1318 : vector<8x128xf32>
    %c372 = arith.constant 372 : index
    %1320 = memref.load %arg1[%c372] : memref<400xf32, #tpu.memory_space<smem>>
    %1321 = vector.broadcast %1320 : f32 to vector<8x128xf32>
    %1322 = arith.addf %1319, %1321 : vector<8x128xf32>
    %c316 = arith.constant 316 : index
    %1323 = memref.load %arg1[%c316] : memref<400xf32, #tpu.memory_space<smem>>
    %1324 = vector.broadcast %1323 : f32 to vector<8x128xf32>
    %1325 = arith.mulf %966, %1324 : vector<8x128xf32>
    %1326 = arith.addf %1322, %1325 : vector<8x128xf32>
    %c324 = arith.constant 324 : index
    %1327 = memref.load %arg1[%c324] : memref<400xf32, #tpu.memory_space<smem>>
    %1328 = vector.broadcast %1327 : f32 to vector<8x128xf32>
    %1329 = arith.mulf %1001, %1328 : vector<8x128xf32>
    %1330 = arith.addf %1326, %1329 : vector<8x128xf32>
    %c332 = arith.constant 332 : index
    %1331 = memref.load %arg1[%c332] : memref<400xf32, #tpu.memory_space<smem>>
    %1332 = vector.broadcast %1331 : f32 to vector<8x128xf32>
    %1333 = arith.mulf %1036, %1332 : vector<8x128xf32>
    %1334 = arith.addf %1330, %1333 : vector<8x128xf32>
    %c340 = arith.constant 340 : index
    %1335 = memref.load %arg1[%c340] : memref<400xf32, #tpu.memory_space<smem>>
    %1336 = vector.broadcast %1335 : f32 to vector<8x128xf32>
    %1337 = arith.mulf %1071, %1336 : vector<8x128xf32>
    %1338 = arith.addf %1334, %1337 : vector<8x128xf32>
    %c348 = arith.constant 348 : index
    %1339 = memref.load %arg1[%c348] : memref<400xf32, #tpu.memory_space<smem>>
    %1340 = vector.broadcast %1339 : f32 to vector<8x128xf32>
    %1341 = arith.mulf %1106, %1340 : vector<8x128xf32>
    %1342 = arith.addf %1338, %1341 : vector<8x128xf32>
    %c356 = arith.constant 356 : index
    %1343 = memref.load %arg1[%c356] : memref<400xf32, #tpu.memory_space<smem>>
    %1344 = vector.broadcast %1343 : f32 to vector<8x128xf32>
    %1345 = arith.mulf %1141, %1344 : vector<8x128xf32>
    %1346 = arith.addf %1342, %1345 : vector<8x128xf32>
    %c364 = arith.constant 364 : index
    %1347 = memref.load %arg1[%c364] : memref<400xf32, #tpu.memory_space<smem>>
    %1348 = vector.broadcast %1347 : f32 to vector<8x128xf32>
    %1349 = arith.mulf %1176, %1348 : vector<8x128xf32>
    %1350 = arith.addf %1346, %1349 : vector<8x128xf32>
    %1351 = math.tanh %1350 : vector<8x128xf32>
    %c309 = arith.constant 309 : index
    %1352 = memref.load %arg1[%c309] : memref<400xf32, #tpu.memory_space<smem>>
    %1353 = vector.broadcast %1352 : f32 to vector<8x128xf32>
    %1354 = arith.mulf %931, %1353 : vector<8x128xf32>
    %c373 = arith.constant 373 : index
    %1355 = memref.load %arg1[%c373] : memref<400xf32, #tpu.memory_space<smem>>
    %1356 = vector.broadcast %1355 : f32 to vector<8x128xf32>
    %1357 = arith.addf %1354, %1356 : vector<8x128xf32>
    %c317 = arith.constant 317 : index
    %1358 = memref.load %arg1[%c317] : memref<400xf32, #tpu.memory_space<smem>>
    %1359 = vector.broadcast %1358 : f32 to vector<8x128xf32>
    %1360 = arith.mulf %966, %1359 : vector<8x128xf32>
    %1361 = arith.addf %1357, %1360 : vector<8x128xf32>
    %c325 = arith.constant 325 : index
    %1362 = memref.load %arg1[%c325] : memref<400xf32, #tpu.memory_space<smem>>
    %1363 = vector.broadcast %1362 : f32 to vector<8x128xf32>
    %1364 = arith.mulf %1001, %1363 : vector<8x128xf32>
    %1365 = arith.addf %1361, %1364 : vector<8x128xf32>
    %c333 = arith.constant 333 : index
    %1366 = memref.load %arg1[%c333] : memref<400xf32, #tpu.memory_space<smem>>
    %1367 = vector.broadcast %1366 : f32 to vector<8x128xf32>
    %1368 = arith.mulf %1036, %1367 : vector<8x128xf32>
    %1369 = arith.addf %1365, %1368 : vector<8x128xf32>
    %c341 = arith.constant 341 : index
    %1370 = memref.load %arg1[%c341] : memref<400xf32, #tpu.memory_space<smem>>
    %1371 = vector.broadcast %1370 : f32 to vector<8x128xf32>
    %1372 = arith.mulf %1071, %1371 : vector<8x128xf32>
    %1373 = arith.addf %1369, %1372 : vector<8x128xf32>
    %c349 = arith.constant 349 : index
    %1374 = memref.load %arg1[%c349] : memref<400xf32, #tpu.memory_space<smem>>
    %1375 = vector.broadcast %1374 : f32 to vector<8x128xf32>
    %1376 = arith.mulf %1106, %1375 : vector<8x128xf32>
    %1377 = arith.addf %1373, %1376 : vector<8x128xf32>
    %c357 = arith.constant 357 : index
    %1378 = memref.load %arg1[%c357] : memref<400xf32, #tpu.memory_space<smem>>
    %1379 = vector.broadcast %1378 : f32 to vector<8x128xf32>
    %1380 = arith.mulf %1141, %1379 : vector<8x128xf32>
    %1381 = arith.addf %1377, %1380 : vector<8x128xf32>
    %c365 = arith.constant 365 : index
    %1382 = memref.load %arg1[%c365] : memref<400xf32, #tpu.memory_space<smem>>
    %1383 = vector.broadcast %1382 : f32 to vector<8x128xf32>
    %1384 = arith.mulf %1176, %1383 : vector<8x128xf32>
    %1385 = arith.addf %1381, %1384 : vector<8x128xf32>
    %1386 = math.tanh %1385 : vector<8x128xf32>
    %c310 = arith.constant 310 : index
    %1387 = memref.load %arg1[%c310] : memref<400xf32, #tpu.memory_space<smem>>
    %1388 = vector.broadcast %1387 : f32 to vector<8x128xf32>
    %1389 = arith.mulf %931, %1388 : vector<8x128xf32>
    %c374 = arith.constant 374 : index
    %1390 = memref.load %arg1[%c374] : memref<400xf32, #tpu.memory_space<smem>>
    %1391 = vector.broadcast %1390 : f32 to vector<8x128xf32>
    %1392 = arith.addf %1389, %1391 : vector<8x128xf32>
    %c318 = arith.constant 318 : index
    %1393 = memref.load %arg1[%c318] : memref<400xf32, #tpu.memory_space<smem>>
    %1394 = vector.broadcast %1393 : f32 to vector<8x128xf32>
    %1395 = arith.mulf %966, %1394 : vector<8x128xf32>
    %1396 = arith.addf %1392, %1395 : vector<8x128xf32>
    %c326 = arith.constant 326 : index
    %1397 = memref.load %arg1[%c326] : memref<400xf32, #tpu.memory_space<smem>>
    %1398 = vector.broadcast %1397 : f32 to vector<8x128xf32>
    %1399 = arith.mulf %1001, %1398 : vector<8x128xf32>
    %1400 = arith.addf %1396, %1399 : vector<8x128xf32>
    %c334 = arith.constant 334 : index
    %1401 = memref.load %arg1[%c334] : memref<400xf32, #tpu.memory_space<smem>>
    %1402 = vector.broadcast %1401 : f32 to vector<8x128xf32>
    %1403 = arith.mulf %1036, %1402 : vector<8x128xf32>
    %1404 = arith.addf %1400, %1403 : vector<8x128xf32>
    %c342 = arith.constant 342 : index
    %1405 = memref.load %arg1[%c342] : memref<400xf32, #tpu.memory_space<smem>>
    %1406 = vector.broadcast %1405 : f32 to vector<8x128xf32>
    %1407 = arith.mulf %1071, %1406 : vector<8x128xf32>
    %1408 = arith.addf %1404, %1407 : vector<8x128xf32>
    %c350 = arith.constant 350 : index
    %1409 = memref.load %arg1[%c350] : memref<400xf32, #tpu.memory_space<smem>>
    %1410 = vector.broadcast %1409 : f32 to vector<8x128xf32>
    %1411 = arith.mulf %1106, %1410 : vector<8x128xf32>
    %1412 = arith.addf %1408, %1411 : vector<8x128xf32>
    %c358 = arith.constant 358 : index
    %1413 = memref.load %arg1[%c358] : memref<400xf32, #tpu.memory_space<smem>>
    %1414 = vector.broadcast %1413 : f32 to vector<8x128xf32>
    %1415 = arith.mulf %1141, %1414 : vector<8x128xf32>
    %1416 = arith.addf %1412, %1415 : vector<8x128xf32>
    %c366 = arith.constant 366 : index
    %1417 = memref.load %arg1[%c366] : memref<400xf32, #tpu.memory_space<smem>>
    %1418 = vector.broadcast %1417 : f32 to vector<8x128xf32>
    %1419 = arith.mulf %1176, %1418 : vector<8x128xf32>
    %1420 = arith.addf %1416, %1419 : vector<8x128xf32>
    %1421 = math.tanh %1420 : vector<8x128xf32>
    %c311 = arith.constant 311 : index
    %1422 = memref.load %arg1[%c311] : memref<400xf32, #tpu.memory_space<smem>>
    %1423 = vector.broadcast %1422 : f32 to vector<8x128xf32>
    %1424 = arith.mulf %931, %1423 : vector<8x128xf32>
    %c375 = arith.constant 375 : index
    %1425 = memref.load %arg1[%c375] : memref<400xf32, #tpu.memory_space<smem>>
    %1426 = vector.broadcast %1425 : f32 to vector<8x128xf32>
    %1427 = arith.addf %1424, %1426 : vector<8x128xf32>
    %c319 = arith.constant 319 : index
    %1428 = memref.load %arg1[%c319] : memref<400xf32, #tpu.memory_space<smem>>
    %1429 = vector.broadcast %1428 : f32 to vector<8x128xf32>
    %1430 = arith.mulf %966, %1429 : vector<8x128xf32>
    %1431 = arith.addf %1427, %1430 : vector<8x128xf32>
    %c327 = arith.constant 327 : index
    %1432 = memref.load %arg1[%c327] : memref<400xf32, #tpu.memory_space<smem>>
    %1433 = vector.broadcast %1432 : f32 to vector<8x128xf32>
    %1434 = arith.mulf %1001, %1433 : vector<8x128xf32>
    %1435 = arith.addf %1431, %1434 : vector<8x128xf32>
    %c335 = arith.constant 335 : index
    %1436 = memref.load %arg1[%c335] : memref<400xf32, #tpu.memory_space<smem>>
    %1437 = vector.broadcast %1436 : f32 to vector<8x128xf32>
    %1438 = arith.mulf %1036, %1437 : vector<8x128xf32>
    %1439 = arith.addf %1435, %1438 : vector<8x128xf32>
    %c343 = arith.constant 343 : index
    %1440 = memref.load %arg1[%c343] : memref<400xf32, #tpu.memory_space<smem>>
    %1441 = vector.broadcast %1440 : f32 to vector<8x128xf32>
    %1442 = arith.mulf %1071, %1441 : vector<8x128xf32>
    %1443 = arith.addf %1439, %1442 : vector<8x128xf32>
    %c351 = arith.constant 351 : index
    %1444 = memref.load %arg1[%c351] : memref<400xf32, #tpu.memory_space<smem>>
    %1445 = vector.broadcast %1444 : f32 to vector<8x128xf32>
    %1446 = arith.mulf %1106, %1445 : vector<8x128xf32>
    %1447 = arith.addf %1443, %1446 : vector<8x128xf32>
    %c359 = arith.constant 359 : index
    %1448 = memref.load %arg1[%c359] : memref<400xf32, #tpu.memory_space<smem>>
    %1449 = vector.broadcast %1448 : f32 to vector<8x128xf32>
    %1450 = arith.mulf %1141, %1449 : vector<8x128xf32>
    %1451 = arith.addf %1447, %1450 : vector<8x128xf32>
    %c367 = arith.constant 367 : index
    %1452 = memref.load %arg1[%c367] : memref<400xf32, #tpu.memory_space<smem>>
    %1453 = vector.broadcast %1452 : f32 to vector<8x128xf32>
    %1454 = arith.mulf %1176, %1453 : vector<8x128xf32>
    %1455 = arith.addf %1451, %1454 : vector<8x128xf32>
    %1456 = math.tanh %1455 : vector<8x128xf32>
    %cst = arith.constant 1.000000e+00 : f32
    %1457 = vector.broadcast %cst : f32 to vector<8x128xf32>
    %1458 = arith.mulf %1457, %0 : vector<8x128xf32>
    %cst_2 = arith.constant 1.000000e+00 : f32
    %1459 = vector.broadcast %cst_2 : f32 to vector<8x128xf32>
    %1460 = arith.divf %1459, %1458 : vector<8x128xf32>
    %c376 = arith.constant 376 : index
    %1461 = memref.load %arg1[%c376] : memref<400xf32, #tpu.memory_space<smem>>
    %1462 = vector.broadcast %1461 : f32 to vector<8x128xf32>
    %1463 = arith.mulf %1211, %1462 : vector<8x128xf32>
    %c379 = arith.constant 379 : index
    %1464 = memref.load %arg1[%c379] : memref<400xf32, #tpu.memory_space<smem>>
    %1465 = vector.broadcast %1464 : f32 to vector<8x128xf32>
    %1466 = arith.mulf %1246, %1465 : vector<8x128xf32>
    %1467 = arith.addf %1463, %1466 : vector<8x128xf32>
    %c382 = arith.constant 382 : index
    %1468 = memref.load %arg1[%c382] : memref<400xf32, #tpu.memory_space<smem>>
    %1469 = vector.broadcast %1468 : f32 to vector<8x128xf32>
    %1470 = arith.mulf %1281, %1469 : vector<8x128xf32>
    %1471 = arith.addf %1467, %1470 : vector<8x128xf32>
    %c385 = arith.constant 385 : index
    %1472 = memref.load %arg1[%c385] : memref<400xf32, #tpu.memory_space<smem>>
    %1473 = vector.broadcast %1472 : f32 to vector<8x128xf32>
    %1474 = arith.mulf %1316, %1473 : vector<8x128xf32>
    %1475 = arith.addf %1471, %1474 : vector<8x128xf32>
    %c388 = arith.constant 388 : index
    %1476 = memref.load %arg1[%c388] : memref<400xf32, #tpu.memory_space<smem>>
    %1477 = vector.broadcast %1476 : f32 to vector<8x128xf32>
    %1478 = arith.mulf %1351, %1477 : vector<8x128xf32>
    %1479 = arith.addf %1475, %1478 : vector<8x128xf32>
    %c391 = arith.constant 391 : index
    %1480 = memref.load %arg1[%c391] : memref<400xf32, #tpu.memory_space<smem>>
    %1481 = vector.broadcast %1480 : f32 to vector<8x128xf32>
    %1482 = arith.mulf %1386, %1481 : vector<8x128xf32>
    %1483 = arith.addf %1479, %1482 : vector<8x128xf32>
    %c394 = arith.constant 394 : index
    %1484 = memref.load %arg1[%c394] : memref<400xf32, #tpu.memory_space<smem>>
    %1485 = vector.broadcast %1484 : f32 to vector<8x128xf32>
    %1486 = arith.mulf %1421, %1485 : vector<8x128xf32>
    %1487 = arith.addf %1483, %1486 : vector<8x128xf32>
    %c397 = arith.constant 397 : index
    %1488 = memref.load %arg1[%c397] : memref<400xf32, #tpu.memory_space<smem>>
    %1489 = vector.broadcast %1488 : f32 to vector<8x128xf32>
    %1490 = arith.mulf %1456, %1489 : vector<8x128xf32>
    %1491 = arith.addf %1487, %1490 : vector<8x128xf32>
    %1492 = arith.mulf %1491, %1460 : vector<8x128xf32>
    %c377 = arith.constant 377 : index
    %1493 = memref.load %arg1[%c377] : memref<400xf32, #tpu.memory_space<smem>>
    %1494 = vector.broadcast %1493 : f32 to vector<8x128xf32>
    %1495 = arith.mulf %1211, %1494 : vector<8x128xf32>
    %c380 = arith.constant 380 : index
    %1496 = memref.load %arg1[%c380] : memref<400xf32, #tpu.memory_space<smem>>
    %1497 = vector.broadcast %1496 : f32 to vector<8x128xf32>
    %1498 = arith.mulf %1246, %1497 : vector<8x128xf32>
    %1499 = arith.addf %1495, %1498 : vector<8x128xf32>
    %c383 = arith.constant 383 : index
    %1500 = memref.load %arg1[%c383] : memref<400xf32, #tpu.memory_space<smem>>
    %1501 = vector.broadcast %1500 : f32 to vector<8x128xf32>
    %1502 = arith.mulf %1281, %1501 : vector<8x128xf32>
    %1503 = arith.addf %1499, %1502 : vector<8x128xf32>
    %c386 = arith.constant 386 : index
    %1504 = memref.load %arg1[%c386] : memref<400xf32, #tpu.memory_space<smem>>
    %1505 = vector.broadcast %1504 : f32 to vector<8x128xf32>
    %1506 = arith.mulf %1316, %1505 : vector<8x128xf32>
    %1507 = arith.addf %1503, %1506 : vector<8x128xf32>
    %c389 = arith.constant 389 : index
    %1508 = memref.load %arg1[%c389] : memref<400xf32, #tpu.memory_space<smem>>
    %1509 = vector.broadcast %1508 : f32 to vector<8x128xf32>
    %1510 = arith.mulf %1351, %1509 : vector<8x128xf32>
    %1511 = arith.addf %1507, %1510 : vector<8x128xf32>
    %c392 = arith.constant 392 : index
    %1512 = memref.load %arg1[%c392] : memref<400xf32, #tpu.memory_space<smem>>
    %1513 = vector.broadcast %1512 : f32 to vector<8x128xf32>
    %1514 = arith.mulf %1386, %1513 : vector<8x128xf32>
    %1515 = arith.addf %1511, %1514 : vector<8x128xf32>
    %c395 = arith.constant 395 : index
    %1516 = memref.load %arg1[%c395] : memref<400xf32, #tpu.memory_space<smem>>
    %1517 = vector.broadcast %1516 : f32 to vector<8x128xf32>
    %1518 = arith.mulf %1421, %1517 : vector<8x128xf32>
    %1519 = arith.addf %1515, %1518 : vector<8x128xf32>
    %c398 = arith.constant 398 : index
    %1520 = memref.load %arg1[%c398] : memref<400xf32, #tpu.memory_space<smem>>
    %1521 = vector.broadcast %1520 : f32 to vector<8x128xf32>
    %1522 = arith.mulf %1456, %1521 : vector<8x128xf32>
    %1523 = arith.addf %1519, %1522 : vector<8x128xf32>
    %1524 = arith.mulf %1523, %1460 : vector<8x128xf32>
    %c378 = arith.constant 378 : index
    %1525 = memref.load %arg1[%c378] : memref<400xf32, #tpu.memory_space<smem>>
    %1526 = vector.broadcast %1525 : f32 to vector<8x128xf32>
    %1527 = arith.mulf %1211, %1526 : vector<8x128xf32>
    %c381 = arith.constant 381 : index
    %1528 = memref.load %arg1[%c381] : memref<400xf32, #tpu.memory_space<smem>>
    %1529 = vector.broadcast %1528 : f32 to vector<8x128xf32>
    %1530 = arith.mulf %1246, %1529 : vector<8x128xf32>
    %1531 = arith.addf %1527, %1530 : vector<8x128xf32>
    %c384 = arith.constant 384 : index
    %1532 = memref.load %arg1[%c384] : memref<400xf32, #tpu.memory_space<smem>>
    %1533 = vector.broadcast %1532 : f32 to vector<8x128xf32>
    %1534 = arith.mulf %1281, %1533 : vector<8x128xf32>
    %1535 = arith.addf %1531, %1534 : vector<8x128xf32>
    %c387 = arith.constant 387 : index
    %1536 = memref.load %arg1[%c387] : memref<400xf32, #tpu.memory_space<smem>>
    %1537 = vector.broadcast %1536 : f32 to vector<8x128xf32>
    %1538 = arith.mulf %1316, %1537 : vector<8x128xf32>
    %1539 = arith.addf %1535, %1538 : vector<8x128xf32>
    %c390 = arith.constant 390 : index
    %1540 = memref.load %arg1[%c390] : memref<400xf32, #tpu.memory_space<smem>>
    %1541 = vector.broadcast %1540 : f32 to vector<8x128xf32>
    %1542 = arith.mulf %1351, %1541 : vector<8x128xf32>
    %1543 = arith.addf %1539, %1542 : vector<8x128xf32>
    %c393 = arith.constant 393 : index
    %1544 = memref.load %arg1[%c393] : memref<400xf32, #tpu.memory_space<smem>>
    %1545 = vector.broadcast %1544 : f32 to vector<8x128xf32>
    %1546 = arith.mulf %1386, %1545 : vector<8x128xf32>
    %1547 = arith.addf %1543, %1546 : vector<8x128xf32>
    %c396 = arith.constant 396 : index
    %1548 = memref.load %arg1[%c396] : memref<400xf32, #tpu.memory_space<smem>>
    %1549 = vector.broadcast %1548 : f32 to vector<8x128xf32>
    %1550 = arith.mulf %1421, %1549 : vector<8x128xf32>
    %1551 = arith.addf %1547, %1550 : vector<8x128xf32>
    %c399 = arith.constant 399 : index
    %1552 = memref.load %arg1[%c399] : memref<400xf32, #tpu.memory_space<smem>>
    %1553 = vector.broadcast %1552 : f32 to vector<8x128xf32>
    %1554 = arith.mulf %1456, %1553 : vector<8x128xf32>
    %1555 = arith.addf %1551, %1554 : vector<8x128xf32>
    %1556 = arith.mulf %1555, %1460 : vector<8x128xf32>
    %1557 = arith.maximumf %1492, %1524 : vector<8x128xf32>
    %1558 = arith.maximumf %1557, %1556 : vector<8x128xf32>
    %1559 = arith.subf %1492, %1558 : vector<8x128xf32>
    %1560 = math.exp %1559 : vector<8x128xf32>
    %1561 = arith.subf %1524, %1558 : vector<8x128xf32>
    %1562 = math.exp %1561 : vector<8x128xf32>
    %1563 = arith.subf %1556, %1558 : vector<8x128xf32>
    %1564 = math.exp %1563 : vector<8x128xf32>
    %1565 = arith.addf %1560, %1562 : vector<8x128xf32>
    %1566 = arith.addf %1565, %1564 : vector<8x128xf32>
    %cst_3 = arith.constant 1.000000e+00 : f32
    %1567 = vector.broadcast %cst_3 : f32 to vector<8x128xf32>
    %1568 = arith.divf %1567, %1566 : vector<8x128xf32>
    %c0_4 = arith.constant 0 : index
    %c0_5 = arith.constant 0 : index
    %c0_6 = arith.constant 0 : index
    %1569 = vector.load %arg4[%c0_4, %c0_5, %c0_6] : memref<3x8x128xf32, #tpu.memory_space<vmem>>, vector<1x8x128xf32>
    %1570 = vector.shape_cast %1569 : vector<1x8x128xf32> to vector<8x128xf32>
    %1571 = vector.shape_cast %1492 : vector<8x128xf32> to vector<1x8x128xf32>
    tpu.vector_store %arg4[%c0_4, %c0_5, %c0_6], %1571 {strides = array<i32>} : memref<3x8x128xf32, #tpu.memory_space<vmem>>, vector<1x8x128xf32>,
    %1572 = arith.mulf %1560, %1568 : vector<8x128xf32>
    %c0_7 = arith.constant 0 : index
    %c0_8 = arith.constant 0 : index
    %c0_9 = arith.constant 0 : index
    %1573 = vector.load %arg3[%c0_7, %c0_8, %c0_9] : memref<3x8x128xf32, #tpu.memory_space<vmem>>, vector<1x8x128xf32>
    %1574 = vector.shape_cast %1573 : vector<1x8x128xf32> to vector<8x128xf32>
    %1575 = vector.shape_cast %1572 : vector<8x128xf32> to vector<1x8x128xf32>
    tpu.vector_store %arg3[%c0_7, %c0_8, %c0_9], %1575 {strides = array<i32>} : memref<3x8x128xf32, #tpu.memory_space<vmem>>, vector<1x8x128xf32>,
    %c1_10 = arith.constant 1 : index
    %c0_11 = arith.constant 0 : index
    %c0_12 = arith.constant 0 : index
    %1576 = vector.load %arg4[%c1_10, %c0_11, %c0_12] : memref<3x8x128xf32, #tpu.memory_space<vmem>>, vector<1x8x128xf32>
    %1577 = vector.shape_cast %1576 : vector<1x8x128xf32> to vector<8x128xf32>
    %1578 = vector.shape_cast %1524 : vector<8x128xf32> to vector<1x8x128xf32>
    tpu.vector_store %arg4[%c1_10, %c0_11, %c0_12], %1578 {strides = array<i32>} : memref<3x8x128xf32, #tpu.memory_space<vmem>>, vector<1x8x128xf32>,
    %1579 = arith.mulf %1562, %1568 : vector<8x128xf32>
    %c1_13 = arith.constant 1 : index
    %c0_14 = arith.constant 0 : index
    %c0_15 = arith.constant 0 : index
    %1580 = vector.load %arg3[%c1_13, %c0_14, %c0_15] : memref<3x8x128xf32, #tpu.memory_space<vmem>>, vector<1x8x128xf32>
    %1581 = vector.shape_cast %1580 : vector<1x8x128xf32> to vector<8x128xf32>
    %1582 = vector.shape_cast %1579 : vector<8x128xf32> to vector<1x8x128xf32>
    tpu.vector_store %arg3[%c1_13, %c0_14, %c0_15], %1582 {strides = array<i32>} : memref<3x8x128xf32, #tpu.memory_space<vmem>>, vector<1x8x128xf32>,
    %c2_16 = arith.constant 2 : index
    %c0_17 = arith.constant 0 : index
    %c0_18 = arith.constant 0 : index
    %1583 = vector.load %arg4[%c2_16, %c0_17, %c0_18] : memref<3x8x128xf32, #tpu.memory_space<vmem>>, vector<1x8x128xf32>
    %1584 = vector.shape_cast %1583 : vector<1x8x128xf32> to vector<8x128xf32>
    %1585 = vector.shape_cast %1556 : vector<8x128xf32> to vector<1x8x128xf32>
    tpu.vector_store %arg4[%c2_16, %c0_17, %c0_18], %1585 {strides = array<i32>} : memref<3x8x128xf32, #tpu.memory_space<vmem>>, vector<1x8x128xf32>,
    %1586 = arith.mulf %1564, %1568 : vector<8x128xf32>
    %c2_19 = arith.constant 2 : index
    %c0_20 = arith.constant 0 : index
    %c0_21 = arith.constant 0 : index
    %1587 = vector.load %arg3[%c2_19, %c0_20, %c0_21] : memref<3x8x128xf32, #tpu.memory_space<vmem>>, vector<1x8x128xf32>
    %1588 = vector.shape_cast %1587 : vector<1x8x128xf32> to vector<8x128xf32>
    %1589 = vector.shape_cast %1586 : vector<8x128xf32> to vector<1x8x128xf32>
    tpu.vector_store %arg3[%c2_19, %c0_20, %c0_21], %1589 {strides = array<i32>} : memref<3x8x128xf32, #tpu.memory_space<vmem>>, vector<1x8x128xf32>,
    return
  }
  func.func @transform_0(%arg0: i32) -> i32 {
    %c0_i32 = arith.constant 0 : i32
    %c0_i32_0 = arith.constant 0 : i32
    return %c0_i32 : i32
  }
  func.func @transform_1(%arg0: i32) -> (i32, i32) {
    %c0_i32 = arith.constant 0 : i32
    %c0_i32_0 = arith.constant 0 : i32
    return %arg0, %c0_i32 : i32, i32
  }
  func.func @transform_2(%arg0: i32) -> (i32, i32, i32) {
    %c0_i32 = arith.constant 0 : i32
    %c0_i32_0 = arith.constant 0 : i32
    %c0_i32_1 = arith.constant 0 : i32
    return %c0_i32, %arg0, %c0_i32_0 : i32, i32, i32
  }
  func.func @transform_3(%arg0: i32) -> (i32, i32, i32) {
    %c0_i32 = arith.constant 0 : i32
    %c0_i32_0 = arith.constant 0 : i32
    %c0_i32_1 = arith.constant 0 : i32
    return %c0_i32, %arg0, %c0_i32_0 : i32, i32, i32
  }
}

</mosaic_0001>

<llo_original>
// kernel: tpu_custom_call.1
$region0: #{tpu_custom_call.1}
  #allocation0 [shape = 'u32[]', space=smem, size = 0x4, offset = 0x4, fixed_abs, tag = 'smem constant byte address 0x4 - core index']
  #allocation1 [shape = 'u32[144,128]{1,0:T(1,128)}', space=vmem, size = 0x12000, scoped, tag = 'internal scratch']
  %s0 = inlined_call_operand.hbm [shape: f32[400], index: 0, kind: input, shape index: {}]
  %s1 = inlined_call_operand.hbm [shape: f32[8,128], index: 1, kind: input, shape index: {}]
  %s2 = inlined_call_operand.hbm [shape: f32[3,8,128], index: 2, kind: output, shape index: {0}]
  %s3 = inlined_call_operand.hbm [shape: f32[3,8,128], index: 3, kind: output, shape index: {1}]
  %4 = xla_tuple %s2, %s3
  %s5 = sld [smem:[#allocation0]]
  $region34: #{tpu_custom_call.1} parent=0
    _
  %s7 = ssub.s32 1, %s5
  %s8 = scalar_select 0, %s7, %s5
  $region1: #{tpu_custom_call.1} parent=0
    #allocation2 [shape = 'u8[2048]{0}', space=smem, size = 0x800, scoped, tag = 'input window, operand 0, single buffered']
    #allocation3 [shape = 's32[1]{0}', space=sflag, size = 0x4, scoped, tag = 'scoped memory for tpu_custom_call.1']
    #allocation4 [shape = 's32[1]{0}', space=sflag, size = 0x4, scoped, tag = 'scoped memory for tpu_custom_call.1']
    #allocation5 [shape = 's32[1]{0}', space=sflag, size = 0x4, scoped, tag = 'scoped memory for tpu_custom_call.1']
    #allocation6 [shape = 'u8[4096]{0}', space=vmem, size = 0x1000, scoped, tag = 'input window, operand 1, single buffered']
    #allocation7 [shape = 'u8[12288]{0}', space=vmem, size = 0x3000, scoped, tag = 'output window, operand 0, single buffered']
    #allocation8 [shape = 'u8[12288]{0}', space=vmem, size = 0x3000, scoped, tag = 'output window, operand 1, single buffered']
    #allocation9 [shape = 's32[1]{0}', space=sflag, size = 0x4, scoped, tag = 'scoped memory for tpu_custom_call.1']
    %9 = vsyncpa [#allocation5], 0
    %10 = vsyncpa [#allocation3], 0
    %11 = vsyncpa [#allocation4], 0
    %12 = vsyncpa [#allocation9], 0
    // Predicated region
    $region2: #{tpu_custom_call.1} parent=1 // pred_check
      _
    $region3: #{tpu_custom_call.1} parent=1 // pred_check_branch
      %14 = sbr.rel (0) target = $region5
    $region4: #{tpu_custom_call.1} parent=1 // pred_region
      %s16 = ssub.s32 64, 64
      %17 = vsyncadd [#allocation5], %s16
      %20 = dma.hbm_to_smem %s0, 64, [#allocation2], [#allocation5]
    $region5: #{tpu_custom_call.1} parent=1 // pred_fallthru
      _
    // Predicated region
    $region6: #{tpu_custom_call.1} parent=1 // pred_check
      _
    $region7: #{tpu_custom_call.1} parent=1 // pred_check_branch
      %22 = sbr.rel (0) target = $region9
    $region8: #{tpu_custom_call.1} parent=1 // pred_region
      %s24 = ssub.s32 128, 128
      %25 = vsyncadd [#allocation3], %s24
      %s27 = sshll.u32 [#allocation6], 4
      %s28 = int_to_ptr.vmem [resolvable:$true] %s27
      %30 = dma.hbm_to_vmem [thread:$0]  %s1, 128, %s28, [#allocation3]
    $region9: #{tpu_custom_call.1} parent=1 // pred_fallthru
      _
    // Predicated region
    $region10: #{tpu_custom_call.1} parent=1 // pred_check
      _
    $region11: #{tpu_custom_call.1} parent=1 // pred_check_branch
      %32 = sbr.rel (0) target = $region13
    $region12: #{tpu_custom_call.1} parent=1 // pred_region
      %33 = dma.done [#allocation5], 64
    $region13: #{tpu_custom_call.1} parent=1 // pred_fallthru
      _
    // Predicated region
    $region14: #{tpu_custom_call.1} parent=1 // pred_check
      _
    $region15: #{tpu_custom_call.1} parent=1 // pred_check_branch
      %35 = sbr.rel (0) target = $region17
    $region16: #{tpu_custom_call.1} parent=1 // pred_region
      %36 = dma.done [#allocation3], 128
    $region17: #{tpu_custom_call.1} parent=1 // pred_fallthru
      _
    %37 = sfence
    %v38 = vld [vmem:[#allocation6] sm:$0xff]
    %s39 = sld [smem:[#allocation2]]
    %v40 = vstv %s39
    %v41 = vmul.f32 %v38, %v40
    %s42 = sld [smem:[#allocation2 + $0x8]]
    %v43 = vstv %s42
    %v44 = vadd.f32 %v41, %v43
    %v45 = vtanh.pop %v44
    %s46 = sld [smem:[#allocation2 + $0x1]]
    %v47 = vstv %s46
    %v48 = vmul.f32 %v38, %v47
    %s49 = sld [smem:[#allocation2 + $0x9]]
    %v50 = vstv %s49
    %v51 = vadd.f32 %v48, %v50
    %v52 = vtanh.pop %v51
    %s53 = sld [smem:[#allocation2 + $0x2]]
    %v54 = vstv %s53
    %v55 = vmul.f32 %v38, %v54
    %s56 = sld [smem:[#allocation2 + $0xa]]
    %v57 = vstv %s56
    %v58 = vadd.f32 %v55, %v57
    %v59 = vtanh.pop %v58
    %s60 = sld [smem:[#allocation2 + $0x3]]
    %v61 = vstv %s60
    %v62 = vmul.f32 %v38, %v61
    %s63 = sld [smem:[#allocation2 + $0xb]]
    %v64 = vstv %s63
    %v65 = vadd.f32 %v62, %v64
    %v66 = vtanh.pop %v65
    %s67 = sld [smem:[#allocation2 + $0x4]]
    %v68 = vstv %s67
    %v69 = vmul.f32 %v38, %v68
    %s70 = sld [smem:[#allocation2 + $0xc]]
    %v71 = vstv %s70
    %v72 = vadd.f32 %v69, %v71
    %v73 = vtanh.pop %v72
    %s74 = sld [smem:[#allocation2 + $0x5]]
    %v75 = vstv %s74
    %v76 = vmul.f32 %v38, %v75
    %s77 = sld [smem:[#allocation2 + $0xd]]
    %v78 = vstv %s77
    %v79 = vadd.f32 %v76, %v78
    %v80 = vtanh.pop %v79
    %s81 = sld [smem:[#allocation2 + $0x6]]
    %v82 = vstv %s81
    %v83 = vmul.f32 %v38, %v82
    %s84 = sld [smem:[#allocation2 + $0xe]]
    %v85 = vstv %s84
    %v86 = vadd.f32 %v83, %v85
    %v87 = vtanh.pop %v86
    %s88 = sld [smem:[#allocation2 + $0x7]]
    %v89 = vstv %s88
    %v90 = vmul.f32 %v38, %v89
    %s91 = sld [smem:[#allocation2 + $0xf]]
    %v92 = vstv %s91
    %v93 = vadd.f32 %v90, %v92
    %v94 = vtanh.pop %v93
    %s95 = sld [smem:[#allocation2 + $0x10]]
    %v96 = vstv %s95
    %v97 = vmul.f32 %v45, %v96
    %s98 = sld [smem:[#allocation2 + $0x50]]
    %v99 = vstv %s98
    %v100 = vadd.f32 %v97, %v99
    %s101 = sld [smem:[#allocation2 + $0x18]]
    %v102 = vstv %s101
    %v103 = vmul.f32 %v52, %v102
    %v104 = vadd.f32 %v100, %v103
    %s105 = sld [smem:[#allocation2 + $0x20]]
    %v106 = vstv %s105
    %v107 = vmul.f32 %v59, %v106
    %v108 = vadd.f32 %v104, %v107
    %s109 = sld [smem:[#allocation2 + $0x28]]
    %v110 = vstv %s109
    %v111 = vmul.f32 %v66, %v110
    %v112 = vadd.f32 %v108, %v111
    %s113 = sld [smem:[#allocation2 + $0x30]]
    %v114 = vstv %s113
    %v115 = vmul.f32 %v73, %v114
    %v116 = vadd.f32 %v112, %v115
    %s117 = sld [smem:[#allocation2 + $0x38]]
    %v118 = vstv %s117
    %v119 = vmul.f32 %v80, %v118
    %v120 = vadd.f32 %v116, %v119
    %s121 = sld [smem:[#allocation2 + $0x40]]
    %v122 = vstv %s121
    %v123 = vmul.f32 %v87, %v122
    %v124 = vadd.f32 %v120, %v123
    %s125 = sld [smem:[#allocation2 + $0x48]]
    %v126 = vstv %s125
    %v127 = vmul.f32 %v94, %v126
    %v128 = vadd.f32 %v124, %v127
    %v129 = vtanh.pop %v128
    %s130 = sld [smem:[#allocation2 + $0x11]]
    %v131 = vstv %s130
    %v132 = vmul.f32 %v45, %v131
    %s133 = sld [smem:[#allocation2 + $0x51]]
    %v134 = vstv %s133
    %v135 = vadd.f32 %v132, %v134
    %s136 = sld [smem:[#allocation2 + $0x19]]
    %v137 = vstv %s136
    %v138 = vmul.f32 %v52, %v137
    %v139 = vadd.f32 %v135, %v138
    %s140 = sld [smem:[#allocation2 + $0x21]]
    %v141 = vstv %s140
    %v142 = vmul.f32 %v59, %v141
    %v143 = vadd.f32 %v139, %v142
    %s144 = sld [smem:[#allocation2 + $0x29]]
    %v145 = vstv %s144
    %v146 = vmul.f32 %v66, %v145
    %v147 = vadd.f32 %v143, %v146
    %s148 = sld [smem:[#allocation2 + $0x31]]
    %v149 = vstv %s148
    %v150 = vmul.f32 %v73, %v149
    %v151 = vadd.f32 %v147, %v150
    %s152 = sld [smem:[#allocation2 + $0x39]]
    %v153 = vstv %s152
    %v154 = vmul.f32 %v80, %v153
    %v155 = vadd.f32 %v151, %v154
    %s156 = sld [smem:[#allocation2 + $0x41]]
    %v157 = vstv %s156
    %v158 = vmul.f32 %v87, %v157
    %v159 = vadd.f32 %v155, %v158
    %s160 = sld [smem:[#allocation2 + $0x49]]
    %v161 = vstv %s160
    %v162 = vmul.f32 %v94, %v161
    %v163 = vadd.f32 %v159, %v162
    %v164 = vtanh.pop %v163
    %s165 = sld [smem:[#allocation2 + $0x12]]
    %v166 = vstv %s165
    %v167 = vmul.f32 %v45, %v166
    %s168 = sld [smem:[#allocation2 + $0x52]]
    %v169 = vstv %s168
    %v170 = vadd.f32 %v167, %v169
    %s171 = sld [smem:[#allocation2 + $0x1a]]
    %v172 = vstv %s171
    %v173 = vmul.f32 %v52, %v172
    %v174 = vadd.f32 %v170, %v173
    %s175 = sld [smem:[#allocation2 + $0x22]]
    %v176 = vstv %s175
    %v177 = vmul.f32 %v59, %v176
    %v178 = vadd.f32 %v174, %v177
    %s179 = sld [smem:[#allocation2 + $0x2a]]
    %v180 = vstv %s179
    %v181 = vmul.f32 %v66, %v180
    %v182 = vadd.f32 %v178, %v181
    %s183 = sld [smem:[#allocation2 + $0x32]]
    %v184 = vstv %s183
    %v185 = vmul.f32 %v73, %v184
    %v186 = vadd.f32 %v182, %v185
    %s187 = sld [smem:[#allocation2 + $0x3a]]
    %v188 = vstv %s187
    %v189 = vmul.f32 %v80, %v188
    %v190 = vadd.f32 %v186, %v189
    %s191 = sld [smem:[#allocation2 + $0x42]]
    %v192 = vstv %s191
    %v193 = vmul.f32 %v87, %v192
    %v194 = vadd.f32 %v190, %v193
    %s195 = sld [smem:[#allocation2 + $0x4a]]
    %v196 = vstv %s195
    %v197 = vmul.f32 %v94, %v196
    %v198 = vadd.f32 %v194, %v197
    %v199 = vtanh.pop %v198
    %s200 = sld [smem:[#allocation2 + $0x13]]
    %v201 = vstv %s200
    %v202 = vmul.f32 %v45, %v201
    %s203 = sld [smem:[#allocation2 + $0x53]]
    %v204 = vstv %s203
    %v205 = vadd.f32 %v202, %v204
    %s206 = sld [smem:[#allocation2 + $0x1b]]
    %v207 = vstv %s206
    %v208 = vmul.f32 %v52, %v207
    %v209 = vadd.f32 %v205, %v208
    %s210 = sld [smem:[#allocation2 + $0x23]]
    %v211 = vstv %s210
    %v212 = vmul.f32 %v59, %v211
    %v213 = vadd.f32 %v209, %v212
    %s214 = sld [smem:[#allocation2 + $0x2b]]
    %v215 = vstv %s214
    %v216 = vmul.f32 %v66, %v215
    %v217 = vadd.f32 %v213, %v216
    %s218 = sld [smem:[#allocation2 + $0x33]]
    %v219 = vstv %s218
    %v220 = vmul.f32 %v73, %v219
    %v221 = vadd.f32 %v217, %v220
    %s222 = sld [smem:[#allocation2 + $0x3b]]
    %v223 = vstv %s222
    %v224 = vmul.f32 %v80, %v223
    %v225 = vadd.f32 %v221, %v224
    %s226 = sld [smem:[#allocation2 + $0x43]]
    %v227 = vstv %s226
    %v228 = vmul.f32 %v87, %v227
    %v229 = vadd.f32 %v225, %v228
    %s230 = sld [smem:[#allocation2 + $0x4b]]
    %v231 = vstv %s230
    %v232 = vmul.f32 %v94, %v231
    %v233 = vadd.f32 %v229, %v232
    %v234 = vtanh.pop %v233
    %s235 = sld [smem:[#allocation2 + $0x14]]
    %v236 = vstv %s235
    %v237 = vmul.f32 %v45, %v236
    %s238 = sld [smem:[#allocation2 + $0x54]]
    %v239 = vstv %s238
    %v240 = vadd.f32 %v237, %v239
    %s241 = sld [smem:[#allocation2 + $0x1c]]
    %v242 = vstv %s241
    %v243 = vmul.f32 %v52, %v242
    %v244 = vadd.f32 %v240, %v243
    %s245 = sld [smem:[#allocation2 + $0x24]]
    %v246 = vstv %s245
    %v247 = vmul.f32 %v59, %v246
    %v248 = vadd.f32 %v244, %v247
    %s249 = sld [smem:[#allocation2 + $0x2c]]
    %v250 = vstv %s249
    %v251 = vmul.f32 %v66, %v250
    %v252 = vadd.f32 %v248, %v251
    %s253 = sld [smem:[#allocation2 + $0x34]]
    %v254 = vstv %s253
    %v255 = vmul.f32 %v73, %v254
    %v256 = vadd.f32 %v252, %v255
    %s257 = sld [smem:[#allocation2 + $0x3c]]
    %v258 = vstv %s257
    %v259 = vmul.f32 %v80, %v258
    %v260 = vadd.f32 %v256, %v259
    %s261 = sld [smem:[#allocation2 + $0x44]]
    %v262 = vstv %s261
    %v263 = vmul.f32 %v87, %v262
    %v264 = vadd.f32 %v260, %v263
    %s265 = sld [smem:[#allocation2 + $0x4c]]
    %v266 = vstv %s265
    %v267 = vmul.f32 %v94, %v266
    %v268 = vadd.f32 %v264, %v267
    %v269 = vtanh.pop %v268
    %s270 = sld [smem:[#allocation2 + $0x15]]
    %v271 = vstv %s270
    %v272 = vmul.f32 %v45, %v271
    %s273 = sld [smem:[#allocation2 + $0x55]]
    %v274 = vstv %s273
    %v275 = vadd.f32 %v272, %v274
    %s276 = sld [smem:[#allocation2 + $0x1d]]
    %v277 = vstv %s276
    %v278 = vmul.f32 %v52, %v277
    %v279 = vadd.f32 %v275, %v278
    %s280 = sld [smem:[#allocation2 + $0x25]]
    %v281 = vstv %s280
    %v282 = vmul.f32 %v59, %v281
    %v283 = vadd.f32 %v279, %v282
    %s284 = sld [smem:[#allocation2 + $0x2d]]
    %v285 = vstv %s284
    %v286 = vmul.f32 %v66, %v285
    %v287 = vadd.f32 %v283, %v286
    %s288 = sld [smem:[#allocation2 + $0x35]]
    %v289 = vstv %s288
    %v290 = vmul.f32 %v73, %v289
    %v291 = vadd.f32 %v287, %v290
    %s292 = sld [smem:[#allocation2 + $0x3d]]
    %v293 = vstv %s292
    %v294 = vmul.f32 %v80, %v293
    %v295 = vadd.f32 %v291, %v294
    %s296 = sld [smem:[#allocation2 + $0x45]]
    %v297 = vstv %s296
    %v298 = vmul.f32 %v87, %v297
    %v299 = vadd.f32 %v295, %v298
    %s300 = sld [smem:[#allocation2 + $0x4d]]
    %v301 = vstv %s300
    %v302 = vmul.f32 %v94, %v301
    %v303 = vadd.f32 %v299, %v302
    %v304 = vtanh.pop %v303
    %s305 = sld [smem:[#allocation2 + $0x16]]
    %v306 = vstv %s305
    %v307 = vmul.f32 %v45, %v306
    %s308 = sld [smem:[#allocation2 + $0x56]]
    %v309 = vstv %s308
    %v310 = vadd.f32 %v307, %v309
    %s311 = sld [smem:[#allocation2 + $0x1e]]
    %v312 = vstv %s311
    %v313 = vmul.f32 %v52, %v312
    %v314 = vadd.f32 %v310, %v313
    %s315 = sld [smem:[#allocation2 + $0x26]]
    %v316 = vstv %s315
    %v317 = vmul.f32 %v59, %v316
    %v318 = vadd.f32 %v314, %v317
    %s319 = sld [smem:[#allocation2 + $0x2e]]
    %v320 = vstv %s319
    %v321 = vmul.f32 %v66, %v320
    %v322 = vadd.f32 %v318, %v321
    %s323 = sld [smem:[#allocation2 + $0x36]]
    %v324 = vstv %s323
    %v325 = vmul.f32 %v73, %v324
    %v326 = vadd.f32 %v322, %v325
    %s327 = sld [smem:[#allocation2 + $0x3e]]
    %v328 = vstv %s327
    %v329 = vmul.f32 %v80, %v328
    %v330 = vadd.f32 %v326, %v329
    %s331 = sld [smem:[#allocation2 + $0x46]]
    %v332 = vstv %s331
    %v333 = vmul.f32 %v87, %v332
    %v334 = vadd.f32 %v330, %v333
    %s335 = sld [smem:[#allocation2 + $0x4e]]
    %v336 = vstv %s335
    %v337 = vmul.f32 %v94, %v336
    %v338 = vadd.f32 %v334, %v337
    %v339 = vtanh.pop %v338
    %s340 = sld [smem:[#allocation2 + $0x17]]
    %v341 = vstv %s340
    %v342 = vmul.f32 %v45, %v341
    %s343 = sld [smem:[#allocation2 + $0x57]]
    %v344 = vstv %s343
    %v345 = vadd.f32 %v342, %v344
    %s346 = sld [smem:[#allocation2 + $0x1f]]
    %v347 = vstv %s346
    %v348 = vmul.f32 %v52, %v347
    %v349 = vadd.f32 %v345, %v348
    %s350 = sld [smem:[#allocation2 + $0x27]]
    %v351 = vstv %s350
    %v352 = vmul.f32 %v59, %v351
    %v353 = vadd.f32 %v349, %v352
    %s354 = sld [smem:[#allocation2 + $0x2f]]
    %v355 = vstv %s354
    %v356 = vmul.f32 %v66, %v355
    %v357 = vadd.f32 %v353, %v356
    %s358 = sld [smem:[#allocation2 + $0x37]]
    %v359 = vstv %s358
    %v360 = vmul.f32 %v73, %v359
    %v361 = vadd.f32 %v357, %v360
    %s362 = sld [smem:[#allocation2 + $0x3f]]
    %v363 = vstv %s362
    %v364 = vmul.f32 %v80, %v363
    %v365 = vadd.f32 %v361, %v364
    %s366 = sld [smem:[#allocation2 + $0x47]]
    %v367 = vstv %s366
    %v368 = vmul.f32 %v87, %v367
    %v369 = vadd.f32 %v365, %v368
    %s370 = sld [smem:[#allocation2 + $0x4f]]
    %v371 = vstv %s370
    %v372 = vmul.f32 %v94, %v371
    %v373 = vadd.f32 %v369, %v372
    %v374 = vtanh.pop %v373
    %s375 = sld [smem:[#allocation2 + $0x58]]
    %v376 = vstv %s375
    %v377 = vmul.f32 %v129, %v376
    %s378 = sld [smem:[#allocation2 + $0x98]]
    %v379 = vstv %s378
    %v380 = vadd.f32 %v377, %v379
    %s381 = sld [smem:[#allocation2 + $0x60]]
    %v382 = vstv %s381
    %v383 = vmul.f32 %v164, %v382
    %v384 = vadd.f32 %v380, %v383
    %s385 = sld [smem:[#allocation2 + $0x68]]
    %v386 = vstv %s385
    %v387 = vmul.f32 %v199, %v386
    %v388 = vadd.f32 %v384, %v387
    %s389 = sld [smem:[#allocation2 + $0x70]]
    %v390 = vstv %s389
    %v391 = vmul.f32 %v234, %v390
    %v392 = vadd.f32 %v388, %v391
    %s393 = sld [smem:[#allocation2 + $0x78]]
    %v394 = vstv %s393
    %v395 = vmul.f32 %v269, %v394
    %v396 = vadd.f32 %v392, %v395
    %s397 = sld [smem:[#allocation2 + $0x80]]
    %v398 = vstv %s397
    %v399 = vmul.f32 %v304, %v398
    %v400 = vadd.f32 %v396, %v399
    %s401 = sld [smem:[#allocation2 + $0x88]]
    %v402 = vstv %s401
    %v403 = vmul.f32 %v339, %v402
    %v404 = vadd.f32 %v400, %v403
    %s405 = sld [smem:[#allocation2 + $0x90]]
    %v406 = vstv %s405
    %v407 = vmul.f32 %v374, %v406
    %v408 = vadd.f32 %v404, %v407
    %v409 = vtanh.pop %v408
    %s410 = sld [smem:[#allocation2 + $0x59]]
    %v411 = vstv %s410
    %v412 = vmul.f32 %v129, %v411
    %s413 = sld [smem:[#allocation2 + $0x99]]
    %v414 = vstv %s413
    %v415 = vadd.f32 %v412, %v414
    %s416 = sld [smem:[#allocation2 + $0x61]]
    %v417 = vstv %s416
    %v418 = vmul.f32 %v164, %v417
    %v419 = vadd.f32 %v415, %v418
    %s420 = sld [smem:[#allocation2 + $0x69]]
    %v421 = vstv %s420
    %v422 = vmul.f32 %v199, %v421
    %v423 = vadd.f32 %v419, %v422
    %s424 = sld [smem:[#allocation2 + $0x71]]
    %v425 = vstv %s424
    %v426 = vmul.f32 %v234, %v425
    %v427 = vadd.f32 %v423, %v426
    %s428 = sld [smem:[#allocation2 + $0x79]]
    %v429 = vstv %s428
    %v430 = vmul.f32 %v269, %v429
    %v431 = vadd.f32 %v427, %v430
    %s432 = sld [smem:[#allocation2 + $0x81]]
    %v433 = vstv %s432
    %v434 = vmul.f32 %v304, %v433
    %v435 = vadd.f32 %v431, %v434
    %s436 = sld [smem:[#allocation2 + $0x89]]
    %v437 = vstv %s436
    %v438 = vmul.f32 %v339, %v437
    %v439 = vadd.f32 %v435, %v438
    %s440 = sld [smem:[#allocation2 + $0x91]]
    %v441 = vstv %s440
    %v442 = vmul.f32 %v374, %v441
    %v443 = vadd.f32 %v439, %v442
    %v444 = vtanh.pop %v443
    %s445 = sld [smem:[#allocation2 + $0x5a]]
    %v446 = vstv %s445
    %v447 = vmul.f32 %v129, %v446
    %s448 = sld [smem:[#allocation2 + $0x9a]]
    %v449 = vstv %s448
    %v450 = vadd.f32 %v447, %v449
    %s451 = sld [smem:[#allocation2 + $0x62]]
    %v452 = vstv %s451
    %v453 = vmul.f32 %v164, %v452
    %v454 = vadd.f32 %v450, %v453
    %s455 = sld [smem:[#allocation2 + $0x6a]]
    %v456 = vstv %s455
    %v457 = vmul.f32 %v199, %v456
    %v458 = vadd.f32 %v454, %v457
    %s459 = sld [smem:[#allocation2 + $0x72]]
    %v460 = vstv %s459
    %v461 = vmul.f32 %v234, %v460
    %v462 = vadd.f32 %v458, %v461
    %s463 = sld [smem:[#allocation2 + $0x7a]]
    %v464 = vstv %s463
    %v465 = vmul.f32 %v269, %v464
    %v466 = vadd.f32 %v462, %v465
    %s467 = sld [smem:[#allocation2 + $0x82]]
    %v468 = vstv %s467
    %v469 = vmul.f32 %v304, %v468
    %v470 = vadd.f32 %v466, %v469
    %s471 = sld [smem:[#allocation2 + $0x8a]]
    %v472 = vstv %s471
    %v473 = vmul.f32 %v339, %v472
    %v474 = vadd.f32 %v470, %v473
    %s475 = sld [smem:[#allocation2 + $0x92]]
    %v476 = vstv %s475
    %v477 = vmul.f32 %v374, %v476
    %v478 = vadd.f32 %v474, %v477
    %v479 = vtanh.pop %v478
    %s480 = sld [smem:[#allocation2 + $0x5b]]
    %v481 = vstv %s480
    %v482 = vmul.f32 %v129, %v481
    %s483 = sld [smem:[#allocation2 + $0x9b]]
    %v484 = vstv %s483
    %v485 = vadd.f32 %v482, %v484
    %s486 = sld [smem:[#allocation2 + $0x63]]
    %v487 = vstv %s486
    %v488 = vmul.f32 %v164, %v487
    %v489 = vadd.f32 %v485, %v488
    %s490 = sld [smem:[#allocation2 + $0x6b]]
    %v491 = vstv %s490
    %v492 = vmul.f32 %v199, %v491
    %v493 = vadd.f32 %v489, %v492
    %s494 = sld [smem:[#allocation2 + $0x73]]
    %v495 = vstv %s494
    %v496 = vmul.f32 %v234, %v495
    %v497 = vadd.f32 %v493, %v496
    %s498 = sld [smem:[#allocation2 + $0x7b]]
    %v499 = vstv %s498
    %v500 = vmul.f32 %v269, %v499
    %v501 = vadd.f32 %v497, %v500
    %s502 = sld [smem:[#allocation2 + $0x83]]
    %v503 = vstv %s502
    %v504 = vmul.f32 %v304, %v503
    %v505 = vadd.f32 %v501, %v504
    %s506 = sld [smem:[#allocation2 + $0x8b]]
    %v507 = vstv %s506
    %v508 = vmul.f32 %v339, %v507
    %v509 = vadd.f32 %v505, %v508
    %s510 = sld [smem:[#allocation2 + $0x93]]
    %v511 = vstv %s510
    %v512 = vmul.f32 %v374, %v511
    %v513 = vadd.f32 %v509, %v512
    %v514 = vtanh.pop %v513
    %s515 = sld [smem:[#allocation2 + $0x5c]]
    %v516 = vstv %s515
    %v517 = vmul.f32 %v129, %v516
    %s518 = sld [smem:[#allocation2 + $0x9c]]
    %v519 = vstv %s518
    %v520 = vadd.f32 %v517, %v519
    %s521 = sld [smem:[#allocation2 + $0x64]]
    %v522 = vstv %s521
    %v523 = vmul.f32 %v164, %v522
    %v524 = vadd.f32 %v520, %v523
    %s525 = sld [smem:[#allocation2 + $0x6c]]
    %v526 = vstv %s525
    %v527 = vmul.f32 %v199, %v526
    %v528 = vadd.f32 %v524, %v527
    %s529 = sld [smem:[#allocation2 + $0x74]]
    %v530 = vstv %s529
    %v531 = vmul.f32 %v234, %v530
    %v532 = vadd.f32 %v528, %v531
    %s533 = sld [smem:[#allocation2 + $0x7c]]
    %v534 = vstv %s533
    %v535 = vmul.f32 %v269, %v534
    %v536 = vadd.f32 %v532, %v535
    %s537 = sld [smem:[#allocation2 + $0x84]]
    %v538 = vstv %s537
    %v539 = vmul.f32 %v304, %v538
    %v540 = vadd.f32 %v536, %v539
    %s541 = sld [smem:[#allocation2 + $0x8c]]
    %v542 = vstv %s541
    %v543 = vmul.f32 %v339, %v542
    %v544 = vadd.f32 %v540, %v543
    %s545 = sld [smem:[#allocation2 + $0x94]]
    %v546 = vstv %s545
    %v547 = vmul.f32 %v374, %v546
    %v548 = vadd.f32 %v544, %v547
    %v549 = vtanh.pop %v548
    %s550 = sld [smem:[#allocation2 + $0x5d]]
    %v551 = vstv %s550
    %v552 = vmul.f32 %v129, %v551
    %s553 = sld [smem:[#allocation2 + $0x9d]]
    %v554 = vstv %s553
    %v555 = vadd.f32 %v552, %v554
    %s556 = sld [smem:[#allocation2 + $0x65]]
    %v557 = vstv %s556
    %v558 = vmul.f32 %v164, %v557
    %v559 = vadd.f32 %v555, %v558
    %s560 = sld [smem:[#allocation2 + $0x6d]]
    %v561 = vstv %s560
    %v562 = vmul.f32 %v199, %v561
    %v563 = vadd.f32 %v559, %v562
    %s564 = sld [smem:[#allocation2 + $0x75]]
    %v565 = vstv %s564
    %v566 = vmul.f32 %v234, %v565
    %v567 = vadd.f32 %v563, %v566
    %s568 = sld [smem:[#allocation2 + $0x7d]]
    %v569 = vstv %s568
    %v570 = vmul.f32 %v269, %v569
    %v571 = vadd.f32 %v567, %v570
    %s572 = sld [smem:[#allocation2 + $0x85]]
    %v573 = vstv %s572
    %v574 = vmul.f32 %v304, %v573
    %v575 = vadd.f32 %v571, %v574
    %s576 = sld [smem:[#allocation2 + $0x8d]]
    %v577 = vstv %s576
    %v578 = vmul.f32 %v339, %v577
    %v579 = vadd.f32 %v575, %v578
    %s580 = sld [smem:[#allocation2 + $0x95]]
    %v581 = vstv %s580
    %v582 = vmul.f32 %v374, %v581
    %v583 = vadd.f32 %v579, %v582
    %v584 = vtanh.pop %v583
    %s585 = sld [smem:[#allocation2 + $0x5e]]
    %v586 = vstv %s585
    %v587 = vmul.f32 %v129, %v586
    %s588 = sld [smem:[#allocation2 + $0x9e]]
    %v589 = vstv %s588
    %v590 = vadd.f32 %v587, %v589
    %s591 = sld [smem:[#allocation2 + $0x66]]
    %v592 = vstv %s591
    %v593 = vmul.f32 %v164, %v592
    %v594 = vadd.f32 %v590, %v593
    %s595 = sld [smem:[#allocation2 + $0x6e]]
    %v596 = vstv %s595
    %v597 = vmul.f32 %v199, %v596
    %v598 = vadd.f32 %v594, %v597
    %s599 = sld [smem:[#allocation2 + $0x76]]
    %v600 = vstv %s599
    %v601 = vmul.f32 %v234, %v600
    %v602 = vadd.f32 %v598, %v601
    %s603 = sld [smem:[#allocation2 + $0x7e]]
    %v604 = vstv %s603
    %v605 = vmul.f32 %v269, %v604
    %v606 = vadd.f32 %v602, %v605
    %s607 = sld [smem:[#allocation2 + $0x86]]
    %v608 = vstv %s607
    %v609 = vmul.f32 %v304, %v608
    %v610 = vadd.f32 %v606, %v609
    %s611 = sld [smem:[#allocation2 + $0x8e]]
    %v612 = vstv %s611
    %v613 = vmul.f32 %v339, %v612
    %v614 = vadd.f32 %v610, %v613
    %s615 = sld [smem:[#allocation2 + $0x96]]
    %v616 = vstv %s615
    %v617 = vmul.f32 %v374, %v616
    %v618 = vadd.f32 %v614, %v617
    %v619 = vtanh.pop %v618
    %s620 = sld [smem:[#allocation2 + $0x5f]]
    %v621 = vstv %s620
    %v622 = vmul.f32 %v129, %v621
    %s623 = sld [smem:[#allocation2 + $0x9f]]
    %v624 = vstv %s623
    %v625 = vadd.f32 %v622, %v624
    %s626 = sld [smem:[#allocation2 + $0x67]]
    %v627 = vstv %s626
    %v628 = vmul.f32 %v164, %v627
    %v629 = vadd.f32 %v625, %v628
    %s630 = sld [smem:[#allocation2 + $0x6f]]
    %v631 = vstv %s630
    %v632 = vmul.f32 %v199, %v631
    %v633 = vadd.f32 %v629, %v632
    %s634 = sld [smem:[#allocation2 + $0x77]]
    %v635 = vstv %s634
    %v636 = vmul.f32 %v234, %v635
    %v637 = vadd.f32 %v633, %v636
    %s638 = sld [smem:[#allocation2 + $0x7f]]
    %v639 = vstv %s638
    %v640 = vmul.f32 %v269, %v639
    %v641 = vadd.f32 %v637, %v640
    %s642 = sld [smem:[#allocation2 + $0x87]]
    %v643 = vstv %s642
    %v644 = vmul.f32 %v304, %v643
    %v645 = vadd.f32 %v641, %v644
    %s646 = sld [smem:[#allocation2 + $0x8f]]
    %v647 = vstv %s646
    %v648 = vmul.f32 %v339, %v647
    %v649 = vadd.f32 %v645, %v648
    %s650 = sld [smem:[#allocation2 + $0x97]]
    %v651 = vstv %s650
    %v652 = vmul.f32 %v374, %v651
    %v653 = vadd.f32 %v649, %v652
    %v654 = vtanh.pop %v653
    %s655 = sld [smem:[#allocation2 + $0xa0]]
    %v656 = vstv %s655
    %v657 = vmul.f32 %v409, %v656
    %s658 = sld [smem:[#allocation2 + $0xe0]]
    %v659 = vstv %s658
    %v660 = vadd.f32 %v657, %v659
    %s661 = sld [smem:[#allocation2 + $0xa8]]
    %v662 = vstv %s661
    %v663 = vmul.f32 %v444, %v662
    %v664 = vadd.f32 %v660, %v663
    %s665 = sld [smem:[#allocation2 + $0xb0]]
    %v666 = vstv %s665
    %v667 = vmul.f32 %v479, %v666
    %v668 = vadd.f32 %v664, %v667
    %s669 = sld [smem:[#allocation2 + $0xb8]]
    %v670 = vstv %s669
    %v671 = vmul.f32 %v514, %v670
    %v672 = vadd.f32 %v668, %v671
    %s673 = sld [smem:[#allocation2 + $0xc0]]
    %v674 = vstv %s673
    %v675 = vmul.f32 %v549, %v674
    %v676 = vadd.f32 %v672, %v675
    %s677 = sld [smem:[#allocation2 + $0xc8]]
    %v678 = vstv %s677
    %v679 = vmul.f32 %v584, %v678
    %v680 = vadd.f32 %v676, %v679
    %s681 = sld [smem:[#allocation2 + $0xd0]]
    %v682 = vstv %s681
    %v683 = vmul.f32 %v619, %v682
    %v684 = vadd.f32 %v680, %v683
    %s685 = sld [smem:[#allocation2 + $0xd8]]
    %v686 = vstv %s685
    %v687 = vmul.f32 %v654, %v686
    %v688 = vadd.f32 %v684, %v687
    %v689 = vtanh.pop %v688
    %s690 = sld [smem:[#allocation2 + $0xa1]]
    %v691 = vstv %s690
    %v692 = vmul.f32 %v409, %v691
    %s693 = sld [smem:[#allocation2 + $0xe1]]
    %v694 = vstv %s693
    %v695 = vadd.f32 %v692, %v694
    %s696 = sld [smem:[#allocation2 + $0xa9]]
    %v697 = vstv %s696
    %v698 = vmul.f32 %v444, %v697
    %v699 = vadd.f32 %v695, %v698
    %s700 = sld [smem:[#allocation2 + $0xb1]]
    %v701 = vstv %s700
    %v702 = vmul.f32 %v479, %v701
    %v703 = vadd.f32 %v699, %v702
    %s704 = sld [smem:[#allocation2 + $0xb9]]
    %v705 = vstv %s704
    %v706 = vmul.f32 %v514, %v705
    %v707 = vadd.f32 %v703, %v706
    %s708 = sld [smem:[#allocation2 + $0xc1]]
    %v709 = vstv %s708
    %v710 = vmul.f32 %v549, %v709
    %v711 = vadd.f32 %v707, %v710
    %s712 = sld [smem:[#allocation2 + $0xc9]]
    %v713 = vstv %s712
    %v714 = vmul.f32 %v584, %v713
    %v715 = vadd.f32 %v711, %v714
    %s716 = sld [smem:[#allocation2 + $0xd1]]
    %v717 = vstv %s716
    %v718 = vmul.f32 %v619, %v717
    %v719 = vadd.f32 %v715, %v718
    %s720 = sld [smem:[#allocation2 + $0xd9]]
    %v721 = vstv %s720
    %v722 = vmul.f32 %v654, %v721
    %v723 = vadd.f32 %v719, %v722
    %v724 = vtanh.pop %v723
    %s725 = sld [smem:[#allocation2 + $0xa2]]
    %v726 = vstv %s725
    %v727 = vmul.f32 %v409, %v726
    %s728 = sld [smem:[#allocation2 + $0xe2]]
    %v729 = vstv %s728
    %v730 = vadd.f32 %v727, %v729
    %s731 = sld [smem:[#allocation2 + $0xaa]]
    %v732 = vstv %s731
    %v733 = vmul.f32 %v444, %v732
    %v734 = vadd.f32 %v730, %v733
    %s735 = sld [smem:[#allocation2 + $0xb2]]
    %v736 = vstv %s735
    %v737 = vmul.f32 %v479, %v736
    %v738 = vadd.f32 %v734, %v737
    %s739 = sld [smem:[#allocation2 + $0xba]]
    %v740 = vstv %s739
    %v741 = vmul.f32 %v514, %v740
    %v742 = vadd.f32 %v738, %v741
    %s743 = sld [smem:[#allocation2 + $0xc2]]
    %v744 = vstv %s743
    %v745 = vmul.f32 %v549, %v744
    %v746 = vadd.f32 %v742, %v745
    %s747 = sld [smem:[#allocation2 + $0xca]]
    %v748 = vstv %s747
    %v749 = vmul.f32 %v584, %v748
    %v750 = vadd.f32 %v746, %v749
    %s751 = sld [smem:[#allocation2 + $0xd2]]
    %v752 = vstv %s751
    %v753 = vmul.f32 %v619, %v752
    %v754 = vadd.f32 %v750, %v753
    %s755 = sld [smem:[#allocation2 + $0xda]]
    %v756 = vstv %s755
    %v757 = vmul.f32 %v654, %v756
    %v758 = vadd.f32 %v754, %v757
    %v759 = vtanh.pop %v758
    %s760 = sld [smem:[#allocation2 + $0xa3]]
    %v761 = vstv %s760
    %v762 = vmul.f32 %v409, %v761
    %s763 = sld [smem:[#allocation2 + $0xe3]]
    %v764 = vstv %s763
    %v765 = vadd.f32 %v762, %v764
    %s766 = sld [smem:[#allocation2 + $0xab]]
    %v767 = vstv %s766
    %v768 = vmul.f32 %v444, %v767
    %v769 = vadd.f32 %v765, %v768
    %s770 = sld [smem:[#allocation2 + $0xb3]]
    %v771 = vstv %s770
    %v772 = vmul.f32 %v479, %v771
    %v773 = vadd.f32 %v769, %v772
    %s774 = sld [smem:[#allocation2 + $0xbb]]
    %v775 = vstv %s774
    %v776 = vmul.f32 %v514, %v775
    %v777 = vadd.f32 %v773, %v776
    %s778 = sld [smem:[#allocation2 + $0xc3]]
    %v779 = vstv %s778
    %v780 = vmul.f32 %v549, %v779
    %v781 = vadd.f32 %v777, %v780
    %s782 = sld [smem:[#allocation2 + $0xcb]]
    %v783 = vstv %s782
    %v784 = vmul.f32 %v584, %v783
    %v785 = vadd.f32 %v781, %v784
    %s786 = sld [smem:[#allocation2 + $0xd3]]
    %v787 = vstv %s786
    %v788 = vmul.f32 %v619, %v787
    %v789 = vadd.f32 %v785, %v788
    %s790 = sld [smem:[#allocation2 + $0xdb]]
    %v791 = vstv %s790
    %v792 = vmul.f32 %v654, %v791
    %v793 = vadd.f32 %v789, %v792
    %v794 = vtanh.pop %v793
    %s795 = sld [smem:[#allocation2 + $0xa4]]
    %v796 = vstv %s795
    %v797 = vmul.f32 %v409, %v796
    %s798 = sld [smem:[#allocation2 + $0xe4]]
    %v799 = vstv %s798
    %v800 = vadd.f32 %v797, %v799
    %s801 = sld [smem:[#allocation2 + $0xac]]
    %v802 = vstv %s801
    %v803 = vmul.f32 %v444, %v802
    %v804 = vadd.f32 %v800, %v803
    %s805 = sld [smem:[#allocation2 + $0xb4]]
    %v806 = vstv %s805
    %v807 = vmul.f32 %v479, %v806
    %v808 = vadd.f32 %v804, %v807
    %s809 = sld [smem:[#allocation2 + $0xbc]]
    %v810 = vstv %s809
    %v811 = vmul.f32 %v514, %v810
    %v812 = vadd.f32 %v808, %v811
    %s813 = sld [smem:[#allocation2 + $0xc4]]
    %v814 = vstv %s813
    %v815 = vmul.f32 %v549, %v814
    %v816 = vadd.f32 %v812, %v815
    %s817 = sld [smem:[#allocation2 + $0xcc]]
    %v818 = vstv %s817
    %v819 = vmul.f32 %v584, %v818
    %v820 = vadd.f32 %v816, %v819
    %s821 = sld [smem:[#allocation2 + $0xd4]]
    %v822 = vstv %s821
    %v823 = vmul.f32 %v619, %v822
    %v824 = vadd.f32 %v820, %v823
    %s825 = sld [smem:[#allocation2 + $0xdc]]
    %v826 = vstv %s825
    %v827 = vmul.f32 %v654, %v826
    %v828 = vadd.f32 %v824, %v827
    %v829 = vtanh.pop %v828
    %s830 = sld [smem:[#allocation2 + $0xa5]]
    %v831 = vstv %s830
    %v832 = vmul.f32 %v409, %v831
    %s833 = sld [smem:[#allocation2 + $0xe5]]
    %v834 = vstv %s833
    %v835 = vadd.f32 %v832, %v834
    %s836 = sld [smem:[#allocation2 + $0xad]]
    %v837 = vstv %s836
    %v838 = vmul.f32 %v444, %v837
    %v839 = vadd.f32 %v835, %v838
    %s840 = sld [smem:[#allocation2 + $0xb5]]
    %v841 = vstv %s840
    %v842 = vmul.f32 %v479, %v841
    %v843 = vadd.f32 %v839, %v842
    %s844 = sld [smem:[#allocation2 + $0xbd]]
    %v845 = vstv %s844
    %v846 = vmul.f32 %v514, %v845
    %v847 = vadd.f32 %v843, %v846
    %s848 = sld [smem:[#allocation2 + $0xc5]]
    %v849 = vstv %s848
    %v850 = vmul.f32 %v549, %v849
    %v851 = vadd.f32 %v847, %v850
    %s852 = sld [smem:[#allocation2 + $0xcd]]
    %v853 = vstv %s852
    %v854 = vmul.f32 %v584, %v853
    %v855 = vadd.f32 %v851, %v854
    %s856 = sld [smem:[#allocation2 + $0xd5]]
    %v857 = vstv %s856
    %v858 = vmul.f32 %v619, %v857
    %v859 = vadd.f32 %v855, %v858
    %s860 = sld [smem:[#allocation2 + $0xdd]]
    %v861 = vstv %s860
    %v862 = vmul.f32 %v654, %v861
    %v863 = vadd.f32 %v859, %v862
    %v864 = vtanh.pop %v863
    %s865 = sld [smem:[#allocation2 + $0xa6]]
    %v866 = vstv %s865
    %v867 = vmul.f32 %v409, %v866
    %s868 = sld [smem:[#allocation2 + $0xe6]]
    %v869 = vstv %s868
    %v870 = vadd.f32 %v867, %v869
    %s871 = sld [smem:[#allocation2 + $0xae]]
    %v872 = vstv %s871
    %v873 = vmul.f32 %v444, %v872
    %v874 = vadd.f32 %v870, %v873
    %s875 = sld [smem:[#allocation2 + $0xb6]]
    %v876 = vstv %s875
    %v877 = vmul.f32 %v479, %v876
    %v878 = vadd.f32 %v874, %v877
    %s879 = sld [smem:[#allocation2 + $0xbe]]
    %v880 = vstv %s879
    %v881 = vmul.f32 %v514, %v880
    %v882 = vadd.f32 %v878, %v881
    %s883 = sld [smem:[#allocation2 + $0xc6]]
    %v884 = vstv %s883
    %v885 = vmul.f32 %v549, %v884
    %v886 = vadd.f32 %v882, %v885
    %s887 = sld [smem:[#allocation2 + $0xce]]
    %v888 = vstv %s887
    %v889 = vmul.f32 %v584, %v888
    %v890 = vadd.f32 %v886, %v889
    %s891 = sld [smem:[#allocation2 + $0xd6]]
    %v892 = vstv %s891
    %v893 = vmul.f32 %v619, %v892
    %v894 = vadd.f32 %v890, %v893
    %s895 = sld [smem:[#allocation2 + $0xde]]
    %v896 = vstv %s895
    %v897 = vmul.f32 %v654, %v896
    %v898 = vadd.f32 %v894, %v897
    %v899 = vtanh.pop %v898
    %s900 = sld [smem:[#allocation2 + $0xa7]]
    %v901 = vstv %s900
    %v902 = vmul.f32 %v409, %v901
    %s903 = sld [smem:[#allocation2 + $0xe7]]
    %v904 = vstv %s903
    %v905 = vadd.f32 %v902, %v904
    %s906 = sld [smem:[#allocation2 + $0xaf]]
    %v907 = vstv %s906
    %v908 = vmul.f32 %v444, %v907
    %v909 = vadd.f32 %v905, %v908
    %s910 = sld [smem:[#allocation2 + $0xb7]]
    %v911 = vstv %s910
    %v912 = vmul.f32 %v479, %v911
    %v913 = vadd.f32 %v909, %v912
    %s914 = sld [smem:[#allocation2 + $0xbf]]
    %v915 = vstv %s914
    %v916 = vmul.f32 %v514, %v915
    %v917 = vadd.f32 %v913, %v916
    %s918 = sld [smem:[#allocation2 + $0xc7]]
    %v919 = vstv %s918
    %v920 = vmul.f32 %v549, %v919
    %v921 = vadd.f32 %v917, %v920
    %s922 = sld [smem:[#allocation2 + $0xcf]]
    %v923 = vstv %s922
    %v924 = vmul.f32 %v584, %v923
    %v925 = vadd.f32 %v921, %v924
    %s926 = sld [smem:[#allocation2 + $0xd7]]
    %v927 = vstv %s926
    %v928 = vmul.f32 %v619, %v927
    %v929 = vadd.f32 %v925, %v928
    %s930 = sld [smem:[#allocation2 + $0xdf]]
    %v931 = vstv %s930
    %v932 = vmul.f32 %v654, %v931
    %v933 = vadd.f32 %v929, %v932
    %v934 = vtanh.pop %v933
    %s935 = sld [smem:[#allocation2 + $0xe8]]
    %v936 = vstv %s935
    %v937 = vmul.f32 %v689, %v936
    %s938 = sld [smem:[#allocation2 + $0x128]]
    %v939 = vstv %s938
    %v940 = vadd.f32 %v937, %v939
    %s941 = sld [smem:[#allocation2 + $0xf0]]
    %v942 = vstv %s941
    %v943 = vmul.f32 %v724, %v942
    %v944 = vadd.f32 %v940, %v943
    %s945 = sld [smem:[#allocation2 + $0xf8]]
    %v946 = vstv %s945
    %v947 = vmul.f32 %v759, %v946
    %v948 = vadd.f32 %v944, %v947
    %s949 = sld [smem:[#allocation2 + $0x100]]
    %v950 = vstv %s949
    %v951 = vmul.f32 %v794, %v950
    %v952 = vadd.f32 %v948, %v951
    %s953 = sld [smem:[#allocation2 + $0x108]]
    %v954 = vstv %s953
    %v955 = vmul.f32 %v829, %v954
    %v956 = vadd.f32 %v952, %v955
    %s957 = sld [smem:[#allocation2 + $0x110]]
    %v958 = vstv %s957
    %v959 = vmul.f32 %v864, %v958
    %v960 = vadd.f32 %v956, %v959
    %s961 = sld [smem:[#allocation2 + $0x118]]
    %v962 = vstv %s961
    %v963 = vmul.f32 %v899, %v962
    %v964 = vadd.f32 %v960, %v963
    %s965 = sld [smem:[#allocation2 + $0x120]]
    %v966 = vstv %s965
    %v967 = vmul.f32 %v934, %v966
    %v968 = vadd.f32 %v964, %v967
    %v969 = vtanh.pop %v968
    %s970 = sld [smem:[#allocation2 + $0xe9]]
    %v971 = vstv %s970
    %v972 = vmul.f32 %v689, %v971
    %s973 = sld [smem:[#allocation2 + $0x129]]
    %v974 = vstv %s973
    %v975 = vadd.f32 %v972, %v974
    %s976 = sld [smem:[#allocation2 + $0xf1]]
    %v977 = vstv %s976
    %v978 = vmul.f32 %v724, %v977
    %v979 = vadd.f32 %v975, %v978
    %s980 = sld [smem:[#allocation2 + $0xf9]]
    %v981 = vstv %s980
    %v982 = vmul.f32 %v759, %v981
    %v983 = vadd.f32 %v979, %v982
    %s984 = sld [smem:[#allocation2 + $0x101]]
    %v985 = vstv %s984
    %v986 = vmul.f32 %v794, %v985
    %v987 = vadd.f32 %v983, %v986
    %s988 = sld [smem:[#allocation2 + $0x109]]
    %v989 = vstv %s988
    %v990 = vmul.f32 %v829, %v989
    %v991 = vadd.f32 %v987, %v990
    %s992 = sld [smem:[#allocation2 + $0x111]]
    %v993 = vstv %s992
    %v994 = vmul.f32 %v864, %v993
    %v995 = vadd.f32 %v991, %v994
    %s996 = sld [smem:[#allocation2 + $0x119]]
    %v997 = vstv %s996
    %v998 = vmul.f32 %v899, %v997
    %v999 = vadd.f32 %v995, %v998
    %s1000 = sld [smem:[#allocation2 + $0x121]]
    %v1001 = vstv %s1000
    %v1002 = vmul.f32 %v934, %v1001
    %v1003 = vadd.f32 %v999, %v1002
    %v1004 = vtanh.pop %v1003
    %s1005 = sld [smem:[#allocation2 + $0xea]]
    %v1006 = vstv %s1005
    %v1007 = vmul.f32 %v689, %v1006
    %s1008 = sld [smem:[#allocation2 + $0x12a]]
    %v1009 = vstv %s1008
    %v1010 = vadd.f32 %v1007, %v1009
    %s1011 = sld [smem:[#allocation2 + $0xf2]]
    %v1012 = vstv %s1011
    %v1013 = vmul.f32 %v724, %v1012
    %v1014 = vadd.f32 %v1010, %v1013
    %s1015 = sld [smem:[#allocation2 + $0xfa]]
    %v1016 = vstv %s1015
    %v1017 = vmul.f32 %v759, %v1016
    %v1018 = vadd.f32 %v1014, %v1017
    %s1019 = sld [smem:[#allocation2 + $0x102]]
    %v1020 = vstv %s1019
    %v1021 = vmul.f32 %v794, %v1020
    %v1022 = vadd.f32 %v1018, %v1021
    %s1023 = sld [smem:[#allocation2 + $0x10a]]
    %v1024 = vstv %s1023
    %v1025 = vmul.f32 %v829, %v1024
    %v1026 = vadd.f32 %v1022, %v1025
    %s1027 = sld [smem:[#allocation2 + $0x112]]
    %v1028 = vstv %s1027
    %v1029 = vmul.f32 %v864, %v1028
    %v1030 = vadd.f32 %v1026, %v1029
    %s1031 = sld [smem:[#allocation2 + $0x11a]]
    %v1032 = vstv %s1031
    %v1033 = vmul.f32 %v899, %v1032
    %v1034 = vadd.f32 %v1030, %v1033
    %s1035 = sld [smem:[#allocation2 + $0x122]]
    %v1036 = vstv %s1035
    %v1037 = vmul.f32 %v934, %v1036
    %v1038 = vadd.f32 %v1034, %v1037
    %v1039 = vtanh.pop %v1038
    %s1040 = sld [smem:[#allocation2 + $0xeb]]
    %v1041 = vstv %s1040
    %v1042 = vmul.f32 %v689, %v1041
    %s1043 = sld [smem:[#allocation2 + $0x12b]]
    %v1044 = vstv %s1043
    %v1045 = vadd.f32 %v1042, %v1044
    %s1046 = sld [smem:[#allocation2 + $0xf3]]
    %v1047 = vstv %s1046
    %v1048 = vmul.f32 %v724, %v1047
    %v1049 = vadd.f32 %v1045, %v1048
    %s1050 = sld [smem:[#allocation2 + $0xfb]]
    %v1051 = vstv %s1050
    %v1052 = vmul.f32 %v759, %v1051
    %v1053 = vadd.f32 %v1049, %v1052
    %s1054 = sld [smem:[#allocation2 + $0x103]]
    %v1055 = vstv %s1054
    %v1056 = vmul.f32 %v794, %v1055
    %v1057 = vadd.f32 %v1053, %v1056
    %s1058 = sld [smem:[#allocation2 + $0x10b]]
    %v1059 = vstv %s1058
    %v1060 = vmul.f32 %v829, %v1059
    %v1061 = vadd.f32 %v1057, %v1060
    %s1062 = sld [smem:[#allocation2 + $0x113]]
    %v1063 = vstv %s1062
    %v1064 = vmul.f32 %v864, %v1063
    %v1065 = vadd.f32 %v1061, %v1064
    %s1066 = sld [smem:[#allocation2 + $0x11b]]
    %v1067 = vstv %s1066
    %v1068 = vmul.f32 %v899, %v1067
    %v1069 = vadd.f32 %v1065, %v1068
    %s1070 = sld [smem:[#allocation2 + $0x123]]
    %v1071 = vstv %s1070
    %v1072 = vmul.f32 %v934, %v1071
    %v1073 = vadd.f32 %v1069, %v1072
    %v1074 = vtanh.pop %v1073
    %s1075 = sld [smem:[#allocation2 + $0xec]]
    %v1076 = vstv %s1075
    %v1077 = vmul.f32 %v689, %v1076
    %s1078 = sld [smem:[#allocation2 + $0x12c]]
    %v1079 = vstv %s1078
    %v1080 = vadd.f32 %v1077, %v1079
    %s1081 = sld [smem:[#allocation2 + $0xf4]]
    %v1082 = vstv %s1081
    %v1083 = vmul.f32 %v724, %v1082
    %v1084 = vadd.f32 %v1080, %v1083
    %s1085 = sld [smem:[#allocation2 + $0xfc]]
    %v1086 = vstv %s1085
    %v1087 = vmul.f32 %v759, %v1086
    %v1088 = vadd.f32 %v1084, %v1087
    %s1089 = sld [smem:[#allocation2 + $0x104]]
    %v1090 = vstv %s1089
    %v1091 = vmul.f32 %v794, %v1090
    %v1092 = vadd.f32 %v1088, %v1091
    %s1093 = sld [smem:[#allocation2 + $0x10c]]
    %v1094 = vstv %s1093
    %v1095 = vmul.f32 %v829, %v1094
    %v1096 = vadd.f32 %v1092, %v1095
    %s1097 = sld [smem:[#allocation2 + $0x114]]
    %v1098 = vstv %s1097
    %v1099 = vmul.f32 %v864, %v1098
    %v1100 = vadd.f32 %v1096, %v1099
    %s1101 = sld [smem:[#allocation2 + $0x11c]]
    %v1102 = vstv %s1101
    %v1103 = vmul.f32 %v899, %v1102
    %v1104 = vadd.f32 %v1100, %v1103
    %s1105 = sld [smem:[#allocation2 + $0x124]]
    %v1106 = vstv %s1105
    %v1107 = vmul.f32 %v934, %v1106
    %v1108 = vadd.f32 %v1104, %v1107
    %v1109 = vtanh.pop %v1108
    %s1110 = sld [smem:[#allocation2 + $0xed]]
    %v1111 = vstv %s1110
    %v1112 = vmul.f32 %v689, %v1111
    %s1113 = sld [smem:[#allocation2 + $0x12d]]
    %v1114 = vstv %s1113
    %v1115 = vadd.f32 %v1112, %v1114
    %s1116 = sld [smem:[#allocation2 + $0xf5]]
    %v1117 = vstv %s1116
    %v1118 = vmul.f32 %v724, %v1117
    %v1119 = vadd.f32 %v1115, %v1118
    %s1120 = sld [smem:[#allocation2 + $0xfd]]
    %v1121 = vstv %s1120
    %v1122 = vmul.f32 %v759, %v1121
    %v1123 = vadd.f32 %v1119, %v1122
    %s1124 = sld [smem:[#allocation2 + $0x105]]
    %v1125 = vstv %s1124
    %v1126 = vmul.f32 %v794, %v1125
    %v1127 = vadd.f32 %v1123, %v1126
    %s1128 = sld [smem:[#allocation2 + $0x10d]]
    %v1129 = vstv %s1128
    %v1130 = vmul.f32 %v829, %v1129
    %v1131 = vadd.f32 %v1127, %v1130
    %s1132 = sld [smem:[#allocation2 + $0x115]]
    %v1133 = vstv %s1132
    %v1134 = vmul.f32 %v864, %v1133
    %v1135 = vadd.f32 %v1131, %v1134
    %s1136 = sld [smem:[#allocation2 + $0x11d]]
    %v1137 = vstv %s1136
    %v1138 = vmul.f32 %v899, %v1137
    %v1139 = vadd.f32 %v1135, %v1138
    %s1140 = sld [smem:[#allocation2 + $0x125]]
    %v1141 = vstv %s1140
    %v1142 = vmul.f32 %v934, %v1141
    %v1143 = vadd.f32 %v1139, %v1142
    %v1144 = vtanh.pop %v1143
    %s1145 = sld [smem:[#allocation2 + $0xee]]
    %v1146 = vstv %s1145
    %v1147 = vmul.f32 %v689, %v1146
    %s1148 = sld [smem:[#allocation2 + $0x12e]]
    %v1149 = vstv %s1148
    %v1150 = vadd.f32 %v1147, %v1149
    %s1151 = sld [smem:[#allocation2 + $0xf6]]
    %v1152 = vstv %s1151
    %v1153 = vmul.f32 %v724, %v1152
    %v1154 = vadd.f32 %v1150, %v1153
    %s1155 = sld [smem:[#allocation2 + $0xfe]]
    %v1156 = vstv %s1155
    %v1157 = vmul.f32 %v759, %v1156
    %v1158 = vadd.f32 %v1154, %v1157
    %s1159 = sld [smem:[#allocation2 + $0x106]]
    %v1160 = vstv %s1159
    %v1161 = vmul.f32 %v794, %v1160
    %v1162 = vadd.f32 %v1158, %v1161
    %s1163 = sld [smem:[#allocation2 + $0x10e]]
    %v1164 = vstv %s1163
    %v1165 = vmul.f32 %v829, %v1164
    %v1166 = vadd.f32 %v1162, %v1165
    %s1167 = sld [smem:[#allocation2 + $0x116]]
    %v1168 = vstv %s1167
    %v1169 = vmul.f32 %v864, %v1168
    %v1170 = vadd.f32 %v1166, %v1169
    %s1171 = sld [smem:[#allocation2 + $0x11e]]
    %v1172 = vstv %s1171
    %v1173 = vmul.f32 %v899, %v1172
    %v1174 = vadd.f32 %v1170, %v1173
    %s1175 = sld [smem:[#allocation2 + $0x126]]
    %v1176 = vstv %s1175
    %v1177 = vmul.f32 %v934, %v1176
    %v1178 = vadd.f32 %v1174, %v1177
    %v1179 = vtanh.pop %v1178
    %s1180 = sld [smem:[#allocation2 + $0xef]]
    %v1181 = vstv %s1180
    %v1182 = vmul.f32 %v689, %v1181
    %s1183 = sld [smem:[#allocation2 + $0x12f]]
    %v1184 = vstv %s1183
    %v1185 = vadd.f32 %v1182, %v1184
    %s1186 = sld [smem:[#allocation2 + $0xf7]]
    %v1187 = vstv %s1186
    %v1188 = vmul.f32 %v724, %v1187
    %v1189 = vadd.f32 %v1185, %v1188
    %s1190 = sld [smem:[#allocation2 + $0xff]]
    %v1191 = vstv %s1190
    %v1192 = vmul.f32 %v759, %v1191
    %v1193 = vadd.f32 %v1189, %v1192
    %s1194 = sld [smem:[#allocation2 + $0x107]]
    %v1195 = vstv %s1194
    %v1196 = vmul.f32 %v794, %v1195
    %v1197 = vadd.f32 %v1193, %v1196
    %s1198 = sld [smem:[#allocation2 + $0x10f]]
    %v1199 = vstv %s1198
    %v1200 = vmul.f32 %v829, %v1199
    %v1201 = vadd.f32 %v1197, %v1200
    %s1202 = sld [smem:[#allocation2 + $0x117]]
    %v1203 = vstv %s1202
    %v1204 = vmul.f32 %v864, %v1203
    %v1205 = vadd.f32 %v1201, %v1204
    %s1206 = sld [smem:[#allocation2 + $0x11f]]
    %v1207 = vstv %s1206
    %v1208 = vmul.f32 %v899, %v1207
    %v1209 = vadd.f32 %v1205, %v1208
    %s1210 = sld [smem:[#allocation2 + $0x127]]
    %v1211 = vstv %s1210
    %v1212 = vmul.f32 %v934, %v1211
    %v1213 = vadd.f32 %v1209, %v1212
    %v1214 = vtanh.pop %v1213
    %s1215 = sld [smem:[#allocation2 + $0x130]]
    %v1216 = vstv %s1215
    %v1217 = vmul.f32 %v969, %v1216
    %s1218 = sld [smem:[#allocation2 + $0x170]]
    %v1219 = vstv %s1218
    %v1220 = vadd.f32 %v1217, %v1219
    %s1221 = sld [smem:[#allocation2 + $0x138]]
    %v1222 = vstv %s1221
    %v1223 = vmul.f32 %v1004, %v1222
    %v1224 = vadd.f32 %v1220, %v1223
    %s1225 = sld [smem:[#allocation2 + $0x140]]
    %v1226 = vstv %s1225
    %v1227 = vmul.f32 %v1039, %v1226
    %v1228 = vadd.f32 %v1224, %v1227
    %s1229 = sld [smem:[#allocation2 + $0x148]]
    %v1230 = vstv %s1229
    %v1231 = vmul.f32 %v1074, %v1230
    %v1232 = vadd.f32 %v1228, %v1231
    %s1233 = sld [smem:[#allocation2 + $0x150]]
    %v1234 = vstv %s1233
    %v1235 = vmul.f32 %v1109, %v1234
    %v1236 = vadd.f32 %v1232, %v1235
    %s1237 = sld [smem:[#allocation2 + $0x158]]
    %v1238 = vstv %s1237
    %v1239 = vmul.f32 %v1144, %v1238
    %v1240 = vadd.f32 %v1236, %v1239
    %s1241 = sld [smem:[#allocation2 + $0x160]]
    %v1242 = vstv %s1241
    %v1243 = vmul.f32 %v1179, %v1242
    %v1244 = vadd.f32 %v1240, %v1243
    %s1245 = sld [smem:[#allocation2 + $0x168]]
    %v1246 = vstv %s1245
    %v1247 = vmul.f32 %v1214, %v1246
    %v1248 = vadd.f32 %v1244, %v1247
    %v1249 = vtanh.pop %v1248
    %s1250 = sld [smem:[#allocation2 + $0x131]]
    %v1251 = vstv %s1250
    %v1252 = vmul.f32 %v969, %v1251
    %s1253 = sld [smem:[#allocation2 + $0x171]]
    %v1254 = vstv %s1253
    %v1255 = vadd.f32 %v1252, %v1254
    %s1256 = sld [smem:[#allocation2 + $0x139]]
    %v1257 = vstv %s1256
    %v1258 = vmul.f32 %v1004, %v1257
    %v1259 = vadd.f32 %v1255, %v1258
    %s1260 = sld [smem:[#allocation2 + $0x141]]
    %v1261 = vstv %s1260
    %v1262 = vmul.f32 %v1039, %v1261
    %v1263 = vadd.f32 %v1259, %v1262
    %s1264 = sld [smem:[#allocation2 + $0x149]]
    %v1265 = vstv %s1264
    %v1266 = vmul.f32 %v1074, %v1265
    %v1267 = vadd.f32 %v1263, %v1266
    %s1268 = sld [smem:[#allocation2 + $0x151]]
    %v1269 = vstv %s1268
    %v1270 = vmul.f32 %v1109, %v1269
    %v1271 = vadd.f32 %v1267, %v1270
    %s1272 = sld [smem:[#allocation2 + $0x159]]
    %v1273 = vstv %s1272
    %v1274 = vmul.f32 %v1144, %v1273
    %v1275 = vadd.f32 %v1271, %v1274
    %s1276 = sld [smem:[#allocation2 + $0x161]]
    %v1277 = vstv %s1276
    %v1278 = vmul.f32 %v1179, %v1277
    %v1279 = vadd.f32 %v1275, %v1278
    %s1280 = sld [smem:[#allocation2 + $0x169]]
    %v1281 = vstv %s1280
    %v1282 = vmul.f32 %v1214, %v1281
    %v1283 = vadd.f32 %v1279, %v1282
    %v1284 = vtanh.pop %v1283
    %s1285 = sld [smem:[#allocation2 + $0x132]]
    %v1286 = vstv %s1285
    %v1287 = vmul.f32 %v969, %v1286
    %s1288 = sld [smem:[#allocation2 + $0x172]]
    %v1289 = vstv %s1288
    %v1290 = vadd.f32 %v1287, %v1289
    %s1291 = sld [smem:[#allocation2 + $0x13a]]
    %v1292 = vstv %s1291
    %v1293 = vmul.f32 %v1004, %v1292
    %v1294 = vadd.f32 %v1290, %v1293
    %s1295 = sld [smem:[#allocation2 + $0x142]]
    %v1296 = vstv %s1295
    %v1297 = vmul.f32 %v1039, %v1296
    %v1298 = vadd.f32 %v1294, %v1297
    %s1299 = sld [smem:[#allocation2 + $0x14a]]
    %v1300 = vstv %s1299
    %v1301 = vmul.f32 %v1074, %v1300
    %v1302 = vadd.f32 %v1298, %v1301
    %s1303 = sld [smem:[#allocation2 + $0x152]]
    %v1304 = vstv %s1303
    %v1305 = vmul.f32 %v1109, %v1304
    %v1306 = vadd.f32 %v1302, %v1305
    %s1307 = sld [smem:[#allocation2 + $0x15a]]
    %v1308 = vstv %s1307
    %v1309 = vmul.f32 %v1144, %v1308
    %v1310 = vadd.f32 %v1306, %v1309
    %s1311 = sld [smem:[#allocation2 + $0x162]]
    %v1312 = vstv %s1311
    %v1313 = vmul.f32 %v1179, %v1312
    %v1314 = vadd.f32 %v1310, %v1313
    %s1315 = sld [smem:[#allocation2 + $0x16a]]
    %v1316 = vstv %s1315
    %v1317 = vmul.f32 %v1214, %v1316
    %v1318 = vadd.f32 %v1314, %v1317
    %v1319 = vtanh.pop %v1318
    %s1320 = sld [smem:[#allocation2 + $0x133]]
    %v1321 = vstv %s1320
    %v1322 = vmul.f32 %v969, %v1321
    %s1323 = sld [smem:[#allocation2 + $0x173]]
    %v1324 = vstv %s1323
    %v1325 = vadd.f32 %v1322, %v1324
    %s1326 = sld [smem:[#allocation2 + $0x13b]]
    %v1327 = vstv %s1326
    %v1328 = vmul.f32 %v1004, %v1327
    %v1329 = vadd.f32 %v1325, %v1328
    %s1330 = sld [smem:[#allocation2 + $0x143]]
    %v1331 = vstv %s1330
    %v1332 = vmul.f32 %v1039, %v1331
    %v1333 = vadd.f32 %v1329, %v1332
    %s1334 = sld [smem:[#allocation2 + $0x14b]]
    %v1335 = vstv %s1334
    %v1336 = vmul.f32 %v1074, %v1335
    %v1337 = vadd.f32 %v1333, %v1336
    %s1338 = sld [smem:[#allocation2 + $0x153]]
    %v1339 = vstv %s1338
    %v1340 = vmul.f32 %v1109, %v1339
    %v1341 = vadd.f32 %v1337, %v1340
    %s1342 = sld [smem:[#allocation2 + $0x15b]]
    %v1343 = vstv %s1342
    %v1344 = vmul.f32 %v1144, %v1343
    %v1345 = vadd.f32 %v1341, %v1344
    %s1346 = sld [smem:[#allocation2 + $0x163]]
    %v1347 = vstv %s1346
    %v1348 = vmul.f32 %v1179, %v1347
    %v1349 = vadd.f32 %v1345, %v1348
    %s1350 = sld [smem:[#allocation2 + $0x16b]]
    %v1351 = vstv %s1350
    %v1352 = vmul.f32 %v1214, %v1351
    %v1353 = vadd.f32 %v1349, %v1352
    %v1354 = vtanh.pop %v1353
    %s1355 = sld [smem:[#allocation2 + $0x134]]
    %v1356 = vstv %s1355
    %v1357 = vmul.f32 %v969, %v1356
    %s1358 = sld [smem:[#allocation2 + $0x174]]
    %v1359 = vstv %s1358
    %v1360 = vadd.f32 %v1357, %v1359
    %s1361 = sld [smem:[#allocation2 + $0x13c]]
    %v1362 = vstv %s1361
    %v1363 = vmul.f32 %v1004, %v1362
    %v1364 = vadd.f32 %v1360, %v1363
    %s1365 = sld [smem:[#allocation2 + $0x144]]
    %v1366 = vstv %s1365
    %v1367 = vmul.f32 %v1039, %v1366
    %v1368 = vadd.f32 %v1364, %v1367
    %s1369 = sld [smem:[#allocation2 + $0x14c]]
    %v1370 = vstv %s1369
    %v1371 = vmul.f32 %v1074, %v1370
    %v1372 = vadd.f32 %v1368, %v1371
    %s1373 = sld [smem:[#allocation2 + $0x154]]
    %v1374 = vstv %s1373
    %v1375 = vmul.f32 %v1109, %v1374
    %v1376 = vadd.f32 %v1372, %v1375
    %s1377 = sld [smem:[#allocation2 + $0x15c]]
    %v1378 = vstv %s1377
    %v1379 = vmul.f32 %v1144, %v1378
    %v1380 = vadd.f32 %v1376, %v1379
    %s1381 = sld [smem:[#allocation2 + $0x164]]
    %v1382 = vstv %s1381
    %v1383 = vmul.f32 %v1179, %v1382
    %v1384 = vadd.f32 %v1380, %v1383
    %s1385 = sld [smem:[#allocation2 + $0x16c]]
    %v1386 = vstv %s1385
    %v1387 = vmul.f32 %v1214, %v1386
    %v1388 = vadd.f32 %v1384, %v1387
    %v1389 = vtanh.pop %v1388
    %s1390 = sld [smem:[#allocation2 + $0x135]]
    %v1391 = vstv %s1390
    %v1392 = vmul.f32 %v969, %v1391
    %s1393 = sld [smem:[#allocation2 + $0x175]]
    %v1394 = vstv %s1393
    %v1395 = vadd.f32 %v1392, %v1394
    %s1396 = sld [smem:[#allocation2 + $0x13d]]
    %v1397 = vstv %s1396
    %v1398 = vmul.f32 %v1004, %v1397
    %v1399 = vadd.f32 %v1395, %v1398
    %s1400 = sld [smem:[#allocation2 + $0x145]]
    %v1401 = vstv %s1400
    %v1402 = vmul.f32 %v1039, %v1401
    %v1403 = vadd.f32 %v1399, %v1402
    %s1404 = sld [smem:[#allocation2 + $0x14d]]
    %v1405 = vstv %s1404
    %v1406 = vmul.f32 %v1074, %v1405
    %v1407 = vadd.f32 %v1403, %v1406
    %s1408 = sld [smem:[#allocation2 + $0x155]]
    %v1409 = vstv %s1408
    %v1410 = vmul.f32 %v1109, %v1409
    %v1411 = vadd.f32 %v1407, %v1410
    %s1412 = sld [smem:[#allocation2 + $0x15d]]
    %v1413 = vstv %s1412
    %v1414 = vmul.f32 %v1144, %v1413
    %v1415 = vadd.f32 %v1411, %v1414
    %s1416 = sld [smem:[#allocation2 + $0x165]]
    %v1417 = vstv %s1416
    %v1418 = vmul.f32 %v1179, %v1417
    %v1419 = vadd.f32 %v1415, %v1418
    %s1420 = sld [smem:[#allocation2 + $0x16d]]
    %v1421 = vstv %s1420
    %v1422 = vmul.f32 %v1214, %v1421
    %v1423 = vadd.f32 %v1419, %v1422
    %v1424 = vtanh.pop %v1423
    %s1425 = sld [smem:[#allocation2 + $0x136]]
    %v1426 = vstv %s1425
    %v1427 = vmul.f32 %v969, %v1426
    %s1428 = sld [smem:[#allocation2 + $0x176]]
    %v1429 = vstv %s1428
    %v1430 = vadd.f32 %v1427, %v1429
    %s1431 = sld [smem:[#allocation2 + $0x13e]]
    %v1432 = vstv %s1431
    %v1433 = vmul.f32 %v1004, %v1432
    %v1434 = vadd.f32 %v1430, %v1433
    %s1435 = sld [smem:[#allocation2 + $0x146]]
    %v1436 = vstv %s1435
    %v1437 = vmul.f32 %v1039, %v1436
    %v1438 = vadd.f32 %v1434, %v1437
    %s1439 = sld [smem:[#allocation2 + $0x14e]]
    %v1440 = vstv %s1439
    %v1441 = vmul.f32 %v1074, %v1440
    %v1442 = vadd.f32 %v1438, %v1441
    %s1443 = sld [smem:[#allocation2 + $0x156]]
    %v1444 = vstv %s1443
    %v1445 = vmul.f32 %v1109, %v1444
    %v1446 = vadd.f32 %v1442, %v1445
    %s1447 = sld [smem:[#allocation2 + $0x15e]]
    %v1448 = vstv %s1447
    %v1449 = vmul.f32 %v1144, %v1448
    %v1450 = vadd.f32 %v1446, %v1449
    %s1451 = sld [smem:[#allocation2 + $0x166]]
    %v1452 = vstv %s1451
    %v1453 = vmul.f32 %v1179, %v1452
    %v1454 = vadd.f32 %v1450, %v1453
    %s1455 = sld [smem:[#allocation2 + $0x16e]]
    %v1456 = vstv %s1455
    %v1457 = vmul.f32 %v1214, %v1456
    %v1458 = vadd.f32 %v1454, %v1457
    %v1459 = vtanh.pop %v1458
    %s1460 = sld [smem:[#allocation2 + $0x137]]
    %v1461 = vstv %s1460
    %v1462 = vmul.f32 %v969, %v1461
    %s1463 = sld [smem:[#allocation2 + $0x177]]
    %v1464 = vstv %s1463
    %v1465 = vadd.f32 %v1462, %v1464
    %s1466 = sld [smem:[#allocation2 + $0x13f]]
    %v1467 = vstv %s1466
    %v1468 = vmul.f32 %v1004, %v1467
    %v1469 = vadd.f32 %v1465, %v1468
    %s1470 = sld [smem:[#allocation2 + $0x147]]
    %v1471 = vstv %s1470
    %v1472 = vmul.f32 %v1039, %v1471
    %v1473 = vadd.f32 %v1469, %v1472
    %s1474 = sld [smem:[#allocation2 + $0x14f]]
    %v1475 = vstv %s1474
    %v1476 = vmul.f32 %v1074, %v1475
    %v1477 = vadd.f32 %v1473, %v1476
    %s1478 = sld [smem:[#allocation2 + $0x157]]
    %v1479 = vstv %s1478
    %v1480 = vmul.f32 %v1109, %v1479
    %v1481 = vadd.f32 %v1477, %v1480
    %s1482 = sld [smem:[#allocation2 + $0x15f]]
    %v1483 = vstv %s1482
    %v1484 = vmul.f32 %v1144, %v1483
    %v1485 = vadd.f32 %v1481, %v1484
    %s1486 = sld [smem:[#allocation2 + $0x167]]
    %v1487 = vstv %s1486
    %v1488 = vmul.f32 %v1179, %v1487
    %v1489 = vadd.f32 %v1485, %v1488
    %s1490 = sld [smem:[#allocation2 + $0x16f]]
    %v1491 = vstv %s1490
    %v1492 = vmul.f32 %v1214, %v1491
    %v1493 = vadd.f32 %v1489, %v1492
    %v1494 = vtanh.pop %v1493
    %v1495 = vrcp.pop %v38
    %v1496 = vmul.f32 1.0, %v1495
    %s1497 = sld [smem:[#allocation2 + $0x178]]
    %v1498 = vstv %s1497
    %v1499 = vmul.f32 %v1249, %v1498
    %s1500 = sld [smem:[#allocation2 + $0x17b]]
    %v1501 = vstv %s1500
    %v1502 = vmul.f32 %v1284, %v1501
    %v1503 = vadd.f32 %v1499, %v1502
    %s1504 = sld [smem:[#allocation2 + $0x17e]]
    %v1505 = vstv %s1504
    %v1506 = vmul.f32 %v1319, %v1505
    %v1507 = vadd.f32 %v1503, %v1506
    %s1508 = sld [smem:[#allocation2 + $0x181]]
    %v1509 = vstv %s1508
    %v1510 = vmul.f32 %v1354, %v1509
    %v1511 = vadd.f32 %v1507, %v1510
    %s1512 = sld [smem:[#allocation2 + $0x184]]
    %v1513 = vstv %s1512
    %v1514 = vmul.f32 %v1389, %v1513
    %v1515 = vadd.f32 %v1511, %v1514
    %s1516 = sld [smem:[#allocation2 + $0x187]]
    %v1517 = vstv %s1516
    %v1518 = vmul.f32 %v1424, %v1517
    %v1519 = vadd.f32 %v1515, %v1518
    %s1520 = sld [smem:[#allocation2 + $0x18a]]
    %v1521 = vstv %s1520
    %v1522 = vmul.f32 %v1459, %v1521
    %v1523 = vadd.f32 %v1519, %v1522
    %s1524 = sld [smem:[#allocation2 + $0x18d]]
    %v1525 = vstv %s1524
    %v1526 = vmul.f32 %v1494, %v1525
    %v1527 = vadd.f32 %v1523, %v1526
    %v1528 = vmul.f32 %v1527, %v1496
    %s1529 = sld [smem:[#allocation2 + $0x179]]
    %v1530 = vstv %s1529
    %v1531 = vmul.f32 %v1249, %v1530
    %s1532 = sld [smem:[#allocation2 + $0x17c]]
    %v1533 = vstv %s1532
    %v1534 = vmul.f32 %v1284, %v1533
    %v1535 = vadd.f32 %v1531, %v1534
    %s1536 = sld [smem:[#allocation2 + $0x17f]]
    %v1537 = vstv %s1536
    %v1538 = vmul.f32 %v1319, %v1537
    %v1539 = vadd.f32 %v1535, %v1538
    %s1540 = sld [smem:[#allocation2 + $0x182]]
    %v1541 = vstv %s1540
    %v1542 = vmul.f32 %v1354, %v1541
    %v1543 = vadd.f32 %v1539, %v1542
    %s1544 = sld [smem:[#allocation2 + $0x185]]
    %v1545 = vstv %s1544
    %v1546 = vmul.f32 %v1389, %v1545
    %v1547 = vadd.f32 %v1543, %v1546
    %s1548 = sld [smem:[#allocation2 + $0x188]]
    %v1549 = vstv %s1548
    %v1550 = vmul.f32 %v1424, %v1549
    %v1551 = vadd.f32 %v1547, %v1550
    %s1552 = sld [smem:[#allocation2 + $0x18b]]
    %v1553 = vstv %s1552
    %v1554 = vmul.f32 %v1459, %v1553
    %v1555 = vadd.f32 %v1551, %v1554
    %s1556 = sld [smem:[#allocation2 + $0x18e]]
    %v1557 = vstv %s1556
    %v1558 = vmul.f32 %v1494, %v1557
    %v1559 = vadd.f32 %v1555, %v1558
    %v1560 = vmul.f32 %v1559, %v1496
    %s1561 = sld [smem:[#allocation2 + $0x17a]]
    %v1562 = vstv %s1561
    %v1563 = vmul.f32 %v1249, %v1562
    %s1564 = sld [smem:[#allocation2 + $0x17d]]
    %v1565 = vstv %s1564
    %v1566 = vmul.f32 %v1284, %v1565
    %v1567 = vadd.f32 %v1563, %v1566
    %s1568 = sld [smem:[#allocation2 + $0x180]]
    %v1569 = vstv %s1568
    %v1570 = vmul.f32 %v1319, %v1569
    %v1571 = vadd.f32 %v1567, %v1570
    %s1572 = sld [smem:[#allocation2 + $0x183]]
    %v1573 = vstv %s1572
    %v1574 = vmul.f32 %v1354, %v1573
    %v1575 = vadd.f32 %v1571, %v1574
    %s1576 = sld [smem:[#allocation2 + $0x186]]
    %v1577 = vstv %s1576
    %v1578 = vmul.f32 %v1389, %v1577
    %v1579 = vadd.f32 %v1575, %v1578
    %s1580 = sld [smem:[#allocation2 + $0x189]]
    %v1581 = vstv %s1580
    %v1582 = vmul.f32 %v1424, %v1581
    %v1583 = vadd.f32 %v1579, %v1582
    %s1584 = sld [smem:[#allocation2 + $0x18c]]
    %v1585 = vstv %s1584
    %v1586 = vmul.f32 %v1459, %v1585
    %v1587 = vadd.f32 %v1583, %v1586
    %s1588 = sld [smem:[#allocation2 + $0x18f]]
    %v1589 = vstv %s1588
    %v1590 = vmul.f32 %v1494, %v1589
    %v1591 = vadd.f32 %v1587, %v1590
    %v1592 = vmul.f32 %v1591, %v1496
    %v1593 = vmax.f32 %v1528, %v1560
    %v1594 = vmax.f32 %v1593, %v1592
    %v1595 = vsub.f32 %v1528, %v1594
    %v1596 = vmul.f32 %v1595, 1.442695
    %v1597 = vpow.pop %v1596
    %v1598 = vsub.f32 %v1560, %v1594
    %v1599 = vmul.f32 %v1598, 1.442695
    %v1600 = vpow.pop %v1599
    %v1601 = vsub.f32 %v1592, %v1594
    %v1602 = vmul.f32 %v1601, 1.442695
    %v1603 = vpow.pop %v1602
    %v1604 = vadd.f32 %v1597, %v1600
    %v1605 = vadd.f32 %v1604, %v1603
    %v1606 = vrcp.pop %v1605
    %v1607 = vmul.f32 1.0, %v1606
    %1608 = vst [vmem:[#allocation8] sm:$0xff] %v1528
    %v1609 = vmul.f32 %v1597, %v1607
    %1610 = vst [vmem:[#allocation7] sm:$0xff] %v1609
    %s1611 = scalar_lea.vmem [#allocation8], 8
    %1612 = vst [vmem:[%s1611] sm:$0xff] %v1560
    %v1613 = vmul.f32 %v1600, %v1607
    %s1614 = scalar_lea.vmem [#allocation7], 8
    %1615 = vst [vmem:[%s1614] sm:$0xff] %v1613
    %s1616 = scalar_lea.vmem [#allocation8], 16
    %1617 = vst [vmem:[%s1616] sm:$0xff] %v1592
    %v1618 = vmul.f32 %v1603, %v1607
    %s1619 = scalar_lea.vmem [#allocation7], 16
    %1620 = vst [vmem:[%s1619] sm:$0xff] %v1618
    // Predicated region
    $region18: #{tpu_custom_call.1} parent=1 // pred_check
      _
    $region19: #{tpu_custom_call.1} parent=1 // pred_check_branch
      %1622 = sbr.rel (0) target = $region21
    $region20: #{tpu_custom_call.1} parent=1 // pred_region
      %s1624 = ssub.s32 384, 384
      %1625 = vsyncadd [#allocation4], %s1624
      %s1626 = sshll.u32 [#allocation7], 4
      %s1627 = int_to_ptr.vmem [resolvable:$true] %s1626
      %1632 = dma.vmem_to_hbm [thread:$0]  %s1627, 384, %s2, [#allocation4], 128, 128, 8
    $region21: #{tpu_custom_call.1} parent=1 // pred_fallthru
      _
    // Predicated region
    $region22: #{tpu_custom_call.1} parent=1 // pred_check
      _
    $region23: #{tpu_custom_call.1} parent=1 // pred_check_branch
      %1634 = sbr.rel (0) target = $region25
    $region24: #{tpu_custom_call.1} parent=1 // pred_region
      %s1636 = ssub.s32 384, 384
      %1637 = vsyncadd [#allocation9], %s1636
      %s1638 = sshll.u32 [#allocation8], 4
      %s1639 = int_to_ptr.vmem [resolvable:$true] %s1638
      %1644 = dma.vmem_to_hbm [thread:$0]  %s1639, 384, %s3, [#allocation9], 128, 128, 8
    $region25: #{tpu_custom_call.1} parent=1 // pred_fallthru
      _
    // Predicated region
    $region26: #{tpu_custom_call.1} parent=1 // pred_check
      _
    $region27: #{tpu_custom_call.1} parent=1 // pred_check_branch
      %1646 = sbr.rel (0) target = $region29
    $region28: #{tpu_custom_call.1} parent=1 // pred_region
      %1647 = dma.done [#allocation4], 384
    $region29: #{tpu_custom_call.1} parent=1 // pred_fallthru
      _
    // Predicated region
    $region30: #{tpu_custom_call.1} parent=1 // pred_check
      _
    $region31: #{tpu_custom_call.1} parent=1 // pred_check_branch
      %1649 = sbr.rel (0) target = $region33
    $region32: #{tpu_custom_call.1} parent=1 // pred_region
      %1650 = dma.done [#allocation9], 384
    $region33: #{tpu_custom_call.1} parent=1 // pred_fallthru
      _
    %1651 = vsyncpa [#allocation3], 1
    %1652 = vsyncpa [#allocation4], 1
    %1653 = vsyncpa [#allocation9], 1
    %1654 = vsyncpa [#allocation5], 1

</llo_original>
